<compile_context>
chip_gen: v5e
topology: v5e:2x2
jax: 0.10.0
libtpu: 0.0.40
codegen_flags: <defaults>
</compile_context>

<pallas_src>
import functools

import numpy as np

import jax
import jax.numpy as jnp
from jax import lax
from jax.experimental import pallas as pl
from jax.experimental.pallas import tpu as pltpu


# ---------------------------------------------------------------------------
# Pallas kernel: whole network for one batch tile (TB on the lane axis).
# ---------------------------------------------------------------------------
def fused_forward_kernel(x_ref, th_ref,
                         w1_ref, b1_ref, w2_ref, b2_ref,
                         wf1_ref, wth_ref, bf1_ref, s1_ref, t1_ref,
                         wf2_ref, bf2_ref, s2_ref, t2_ref,
                         wo_ref, bo_ref, out_ref):
    # Contract the last dim of both operands (A @ B^T): lets the MXU consume
    # the untransposed (TB, 128) x block directly.
    dn_rhs_t = (((1,), (1,)), ((), ()))

    # conv1 (+ 2x2/stride-2 max pool folded as 4 stacked quadrant blocks) ----
    # w1 rows: d*400 + c*25 + ph*5 + pw, d = pool-window quadrant.
    y1 = lax.dot_general(w1_ref[...], x_ref[...], dn_rhs_t,
                         preferred_element_type=jnp.float32)            # (1600, TB)
    p1 = jnp.maximum(jnp.maximum(y1[0:400], y1[400:800]),
                     jnp.maximum(y1[800:1200], y1[1200:1600]))           # (400, TB)
    p1 = jnp.maximum(p1 + b1_ref[...], 0.0)          # bias once after pool, then ReLU

    # conv2 (+ pool), dense K=400 ------------------------------------------
    # w2 rows: d*128 + c2*4 + qh*2 + qw  (inner order == torch flatten order).
    y2 = jnp.dot(w2_ref[...], p1.astype(jnp.bfloat16),
                 preferred_element_type=jnp.float32)                     # (512, TB)
    p2 = jnp.maximum(jnp.maximum(y2[0:128], y2[128:256]),
                     jnp.maximum(y2[256:384], y2[384:512]))              # (128, TB)
    p2 = jnp.maximum(p2 + b2_ref[...], 0.0)

    # fc1 (+ theta) -> ReLU -> BatchNorm1d(64) (eval, folded) ---------------
    h1 = jnp.dot(wf1_ref[...], p2.astype(jnp.bfloat16),
                 preferred_element_type=jnp.float32)                     # (64, TB)
    h1 = h1 + jnp.dot(wth_ref[...], th_ref[...],
                      preferred_element_type=jnp.float32)                # theta (f32, K=8)
    h1 = jnp.maximum(h1 + bf1_ref[...], 0.0)
    h1 = h1 * s1_ref[...] + t1_ref[...]
    # Dropout(p=0.2) is the identity in eval mode.

    # fc2 -> ReLU -> BatchNorm1d(32) (eval, folded) --------------------------
    h2 = jnp.dot(wf2_ref[...], h1.astype(jnp.bfloat16),
                 preferred_element_type=jnp.float32) + bf2_ref[...]      # (32, TB)
    h2 = jnp.maximum(h2, 0.0)
    h2 = h2 * s2_ref[...] + t2_ref[...]

    # output layer as a VPU multiply + sublane reduction (avoids M=1 matmul)
    r = jnp.sum(wo_ref[...] * h2, axis=0, keepdims=True) + bo_ref[...]   # (1, TB)
    logit = 1.0 / (1.0 + jnp.exp(-r))   # safe in f32: exp overflow -> inf -> 0
    out_ref[...] = jnp.concatenate([r, logit], axis=0)                   # (2, TB)


# ---------------------------------------------------------------------------
# Parameter folding (done once in the wrapper; jnp ops so it traces under jit).
# ---------------------------------------------------------------------------
def _conv1_pool_matrix(w, b):
    """Conv2d(1,16,3,padding=1) on 10x10, evaluated only at the four positions
    of each 2x2/stride-2 pool window, stacked as 4 quadrant blocks.
    Shape (1600, 128); row = d*400 + c*25 + ph*5 + pw (d = dh*2+dw);
    col = ih*10 + iw (input padded 100 -> 128 zero lanes)."""
    d, c, ph, pw, kh, kw = np.meshgrid(np.arange(4), np.arange(16), np.arange(5),
                                       np.arange(5), np.arange(3), np.arange(3),
                                       indexing="ij")
    dh, dw = d // 2, d % 2
    ih = 2 * ph + dh + kh - 1
    iw = 2 * pw + dw + kw - 1
    valid = (ih >= 0) & (ih < 10) & (iw >= 0) & (iw < 10)
    rows = (d * 400 + c * 25 + ph * 5 + pw)[valid]
    cols = (ih * 10 + iw)[valid]
    widx = (c * 9 + kh * 3 + kw)[valid]
    mat = jnp.zeros((1600, 128), jnp.float32).at[rows, cols].set(
        w.astype(jnp.float32).reshape(-1)[widx])
    bias = jnp.repeat(b.astype(jnp.float32), 25).reshape(400, 1)
    return mat.astype(jnp.bfloat16), bias


def _conv2_pool_matrix(w, b):
    """Conv2d(16,32,3,padding=1) on the dense pooled (16,5,5) map, evaluated
    only at the 4x4 positions feeding the second pool, stacked as 4 quadrant
    blocks.  Shape (512, 400); row = d*128 + c2*4 + qh*2 + qw (inner order is
    exactly the torch NCHW flatten order); col = ci*25 + ih*5 + iw."""
    d, c2, qh, qw, ci, kh, kw = np.meshgrid(np.arange(4), np.arange(32), np.arange(2),
                                            np.arange(2), np.arange(16), np.arange(3),
                                            np.arange(3), indexing="ij")
    dh, dw = d // 2, d % 2
    ih = 2 * qh + dh + kh - 1
    iw = 2 * qw + dw + kw - 1
    valid = (ih >= 0) & (ih < 5) & (iw >= 0) & (iw < 5)
    rows = (d * 128 + c2 * 4 + qh * 2 + qw)[valid]
    cols = (ci * 25 + ih * 5 + iw)[valid]
    widx = (((c2 * 16 + ci) * 3 + kh) * 3 + kw)[valid]
    mat = jnp.zeros((512, 400), jnp.float32).at[rows, cols].set(
        w.astype(jnp.float32).reshape(-1)[widx])
    bias = jnp.repeat(b.astype(jnp.float32), 4).reshape(128, 1)
    return mat.astype(jnp.bfloat16), bias


def _fold_params(p):
    eps = 1e-5
    w1, b1 = _conv1_pool_matrix(p['conv1_w'], p['conv1_b'])
    w2, b2 = _conv2_pool_matrix(p['conv2_w'], p['conv2_b'])

    fw1 = p['fc1_w'].astype(jnp.float32)                 # (64, 131)
    wf1 = fw1[:, :128].astype(jnp.bfloat16)              # image part (flatten order)
    wth = jnp.pad(fw1[:, 128:131], ((0, 0), (0, 5)))     # (64, 8) f32, theta part
    bf1 = p['fc1_b'].reshape(64, 1).astype(jnp.float32)

    inv1 = 1.0 / jnp.sqrt(p['bn1_rv'].astype(jnp.float32) + eps)
    s1 = (p['bn1_g'] * inv1).reshape(64, 1).astype(jnp.float32)
    t1 = (p['bn1_b'] - p['bn1_rm'] * p['bn1_g'] * inv1).reshape(64, 1).astype(jnp.float32)

    wf2 = p['fc2_w'].astype(jnp.bfloat16)                # (32, 64)
    bf2 = p['fc2_b'].reshape(32, 1).astype(jnp.float32)
    inv2 = 1.0 / jnp.sqrt(p['bn2_rv'].astype(jnp.float32) + eps)
    s2 = (p['bn2_g'] * inv2).reshape(32, 1).astype(jnp.float32)
    t2 = (p['bn2_b'] - p['bn2_rm'] * p['bn2_g'] * inv2).reshape(32, 1).astype(jnp.float32)

    wo = p['out_w'].reshape(32, 1).astype(jnp.float32)
    bo = p['out_b'].reshape(1, 1).astype(jnp.float32)
    return (w1, b1, w2, b2, wf1, wth, bf1, s1, t1, wf2, bf2, s2, t2, wo, bo)


# ---------------------------------------------------------------------------
# Wrapper
# ---------------------------------------------------------------------------
def ratio_10x10_forward(params, x_nchw, theta, *, tile_b=None):
    """x_nchw: (B, 1, 10, 10) f32, theta: (B, 3) f32 -> (ratio, logit), each (B, 1)."""
    B = x_nchw.shape[0]
    if tile_b is None:
        # Small B: 128-wide tiles reach >=2 tiles sooner (v7x dual-TC sharding
        # via the "parallel" grid axis).  Large B: 512 amortizes per-grid-step
        # overhead on v5e/v6e; still well inside every generation's VMEM.
        tile_b = 128 if B <= 256 else 512
    n_tiles = (B + tile_b - 1) // tile_b
    b_pad = n_tiles * tile_b

    # x: (B,100) -> pad features to 128 lanes and batch to a tile multiple,
    # cast to bf16 for the MXU.  No HBM transpose (kernel contracts last dims).
    xf = x_nchw.reshape(B, 100).astype(jnp.float32)
    xf = jnp.pad(xf, ((0, b_pad - B), (0, 28))).astype(jnp.bfloat16)     # (b_pad, 128)
    # theta: tiny -> pad 3->8 features, transpose so batch sits on lanes.
    th = jnp.pad(theta.astype(jnp.float32), ((0, b_pad - B), (0, 5))).T  # (8, b_pad)

    folded = _fold_params(params)
    resident = pl.BlockSpec(memory_space=pltpu.MemorySpace.VMEM)  # weights resident in VMEM

    out = pl.pallas_call(
        fused_forward_kernel,
        out_shape=jax.ShapeDtypeStruct((2, b_pad), jnp.float32),
        grid=(n_tiles,),
        in_specs=[pl.BlockSpec((tile_b, 128), lambda i: (i, 0)),
                  pl.BlockSpec((8, tile_b), lambda i: (0, i))]
                 + [resident] * len(folded),
        out_specs=pl.BlockSpec((2, tile_b), lambda i: (0, i)),
        compiler_params=pltpu.CompilerParams(
            dimension_semantics=("parallel",),          # shard batch tiles across TCs
            vmem_limit_bytes=24 * 1024 * 1024),
    )(xf, th, *folded)

    ratio = out[0, :B].reshape(B, 1)
    logit = out[1, :B].reshape(B, 1)
    return ratio, logit


# ---------------------------------------------------------------------------
# Plain-JAX reference (for a loose self-check) and synthetic parameters
# ---------------------------------------------------------------------------
def _reference_forward(params, x, theta):
    B = x.shape[0]
    dn = ('NCHW', 'OIHW', 'NCHW')
    h = lax.conv_general_dilated(x.astype(jnp.float32), params['conv1_w'],
                                 (1, 1), ((1, 1), (1, 1)), dimension_numbers=dn)
    h = h + params['conv1_b'].reshape(1, -1, 1, 1)
    h = h.reshape(B, 16, 5, 2, 5, 2).max(axis=(3, 5))
    h = jnp.maximum(h, 0.0)
    h = lax.conv_general_dilated(h, params['conv2_w'],
                                 (1, 1), ((1, 1), (1, 1)), dimension_numbers=dn)
    h = h + params['conv2_b'].reshape(1, -1, 1, 1)
    h = h[:, :, :4, :4].reshape(B, 32, 2, 2, 2, 2).max(axis=(3, 5))
    h = jnp.maximum(h, 0.0)
    feat = jnp.concatenate([h.reshape(B, -1), theta.astype(jnp.float32)], axis=1)
    eps = 1e-5
    h1 = jnp.maximum(feat @ params['fc1_w'].T + params['fc1_b'], 0.0)
    h1 = (h1 - params['bn1_rm']) / jnp.sqrt(params['bn1_rv'] + eps) * params['bn1_g'] + params['bn1_b']
    h2 = jnp.maximum(h1 @ params['fc2_w'].T + params['fc2_b'], 0.0)
    h2 = (h2 - params['bn2_rm']) / jnp.sqrt(params['bn2_rv'] + eps) * params['bn2_g'] + params['bn2_b']
    r = h2 @ params['out_w'].T + params['out_b']
    return r, 1.0 / (1.0 + jnp.exp(-r))


def init_params(key):
    ks = jax.random.split(key, 10)

    def u(k, shape, fan_in):
        bound = 1.0 / jnp.sqrt(float(fan_in))
        return jax.random.uniform(k, shape, jnp.float32, -bound, bound)

    return {
        'conv1_w': u(ks[0], (16, 1, 3, 3), 1 * 9),
        'conv1_b': u(ks[1], (16,), 1 * 9),
        'conv2_w': u(ks[2], (32, 16, 3, 3), 16 * 9),
        'conv2_b': u(ks[3], (32,), 16 * 9),
        'fc1_w': u(ks[4], (64, 131), 131),
        'fc1_b': u(ks[5], (64,), 131),
        'bn1_g': jnp.ones((64,), jnp.float32),
        'bn1_b': jnp.zeros((64,), jnp.float32),
        'bn1_rm': jnp.zeros((64,), jnp.float32),
        'bn1_rv': jnp.ones((64,), jnp.float32),
        'fc2_w': u(ks[6], (32, 64), 64),
        'fc2_b': u(ks[7], (32,), 64),
        'bn2_g': jnp.ones((32,), jnp.float32),
        'bn2_b': jnp.zeros((32,), jnp.float32),
        'bn2_rm': jnp.zeros((32,), jnp.float32),
        'bn2_rv': jnp.ones((32,), jnp.float32),
        'out_w': u(ks[8], (1, 32), 32),
        'out_b': u(ks[9], (1,), 32),
    }


if __name__ == "__main__":
    key = jax.random.PRNGKey(0)
    kx, kt, kp = jax.random.split(key, 3)
    B = 2
    x = jax.random.normal(kx, (B, 1, 10, 10), jnp.float32)
    theta = jax.random.normal(kt, (B, 3), jnp.float32)
    params = init_params(kp)

    fwd = jax.jit(functools.partial(ratio_10x10_forward, params))
    ratio, logit = fwd(x, theta)
    jax.block_until_ready((ratio, logit))
    assert ratio.shape == (B, 1) and logit.shape == (B, 1)

    ratio_ref, logit_ref = _reference_forward(params, x, theta)
    assert float(jnp.max(jnp.abs(ratio - ratio_ref))) < 2e-2, "ratio mismatch vs reference"
    assert float(jnp.max(jnp.abs(logit - logit_ref))) < 2e-2, "logit mismatch vs reference"
    print("KERNEL_OK")
</pallas_src>

<mosaic_0001>
module attributes {stable_mosaic.version = 11 : i64} {
  func.func @fused_forward_kernel(%arg0: i32, %arg1: memref<128x128xbf16, #tpu.memory_space<vmem>>, %arg2: memref<8x128xf32, #tpu.memory_space<vmem>>, %arg3: memref<1600x128xbf16, #tpu.memory_space<vmem>>, %arg4: memref<400x1xf32, #tpu.memory_space<vmem>>, %arg5: memref<512x400xbf16, #tpu.memory_space<vmem>>, %arg6: memref<128x1xf32, #tpu.memory_space<vmem>>, %arg7: memref<64x128xbf16, #tpu.memory_space<vmem>>, %arg8: memref<64x8xf32, #tpu.memory_space<vmem>>, %arg9: memref<64x1xf32, #tpu.memory_space<vmem>>, %arg10: memref<64x1xf32, #tpu.memory_space<vmem>>, %arg11: memref<64x1xf32, #tpu.memory_space<vmem>>, %arg12: memref<32x64xbf16, #tpu.memory_space<vmem>>, %arg13: memref<32x1xf32, #tpu.memory_space<vmem>>, %arg14: memref<32x1xf32, #tpu.memory_space<vmem>>, %arg15: memref<32x1xf32, #tpu.memory_space<vmem>>, %arg16: memref<32x1xf32, #tpu.memory_space<vmem>>, %arg17: memref<1x1xf32, #tpu.memory_space<vmem>>, %arg18: memref<2x128xf32, #tpu.memory_space<vmem>>) attributes {dimension_semantics = [#tpu.dimension_semantics<parallel>], iteration_bounds = array<i64: 1>, scalar_prefetch = 0 : i64, scratch_operands = 0 : i64, tpu.core_type = #tpu.core_type<tc>, window_params = [{transform_indices = @transform_0, window_bounds = array<i64: 128, 128>}, {transform_indices = @transform_1, window_bounds = array<i64: 8, 128>}, {pipeline_mode = #tpu.pipeline_mode<synchronous>, transform_indices = @transform_2, window_bounds = array<i64: 1600, 128>}, {pipeline_mode = #tpu.pipeline_mode<synchronous>, transform_indices = @transform_3, window_bounds = array<i64: 400, 1>}, {pipeline_mode = #tpu.pipeline_mode<synchronous>, transform_indices = @transform_4, window_bounds = array<i64: 512, 400>}, {pipeline_mode = #tpu.pipeline_mode<synchronous>, transform_indices = @transform_5, window_bounds = array<i64: 128, 1>}, {pipeline_mode = #tpu.pipeline_mode<synchronous>, transform_indices = @transform_6, window_bounds = array<i64: 64, 128>}, {pipeline_mode = #tpu.pipeline_mode<synchronous>, transform_indices = @transform_7, window_bounds = array<i64: 64, 8>}, {pipeline_mode = #tpu.pipeline_mode<synchronous>, transform_indices = @transform_8, window_bounds = array<i64: 64, 1>}, {pipeline_mode = #tpu.pipeline_mode<synchronous>, transform_indices = @transform_9, window_bounds = array<i64: 64, 1>}, {pipeline_mode = #tpu.pipeline_mode<synchronous>, transform_indices = @transform_10, window_bounds = array<i64: 64, 1>}, {pipeline_mode = #tpu.pipeline_mode<synchronous>, transform_indices = @transform_11, window_bounds = array<i64: 32, 64>}, {pipeline_mode = #tpu.pipeline_mode<synchronous>, transform_indices = @transform_12, window_bounds = array<i64: 32, 1>}, {pipeline_mode = #tpu.pipeline_mode<synchronous>, transform_indices = @transform_13, window_bounds = array<i64: 32, 1>}, {pipeline_mode = #tpu.pipeline_mode<synchronous>, transform_indices = @transform_14, window_bounds = array<i64: 32, 1>}, {pipeline_mode = #tpu.pipeline_mode<synchronous>, transform_indices = @transform_15, window_bounds = array<i64: 32, 1>}, {pipeline_mode = #tpu.pipeline_mode<synchronous>, transform_indices = @transform_16, window_bounds = array<i64: 1, 1>}, {transform_indices = @transform_17, window_bounds = array<i64: 2, 128>}]} {
    %c0 = arith.constant 0 : index
    %c0_0 = arith.constant 0 : index
    %0 = vector.load %arg3[%c0, %c0_0] : memref<1600x128xbf16, #tpu.memory_space<vmem>>, vector<1600x128xbf16>
    %c0_1 = arith.constant 0 : index
    %c0_2 = arith.constant 0 : index
    %1 = vector.load %arg1[%c0_1, %c0_2] : memref<128x128xbf16, #tpu.memory_space<vmem>>, vector<128x128xbf16>
    %cst = arith.constant dense<0.000000e+00> : vector<1600x128xf32>
    %2 = tpu.matmul %0, %1, %cst {dimension_numbers = #tpu.dot_dimension_numbers<[1], [1], [0], [0], [0, 0, 1, 0], [], []>} : vector<1600x128xbf16>, vector<128x128xbf16>, vector<1600x128xf32> -> vector<1600x128xf32>
    %3 = vector.extract_strided_slice %2 {offsets = [0, 0], sizes = [400, 128], strides = [1, 1]} : vector<1600x128xf32> to vector<400x128xf32>
    %4 = vector.extract_strided_slice %2 {offsets = [400, 0], sizes = [400, 128], strides = [1, 1]} : vector<1600x128xf32> to vector<400x128xf32>
    %5 = arith.maximumf %3, %4 : vector<400x128xf32>
    %6 = vector.extract_strided_slice %2 {offsets = [800, 0], sizes = [400, 128], strides = [1, 1]} : vector<1600x128xf32> to vector<400x128xf32>
    %7 = vector.extract_strided_slice %2 {offsets = [1200, 0], sizes = [400, 128], strides = [1, 1]} : vector<1600x128xf32> to vector<400x128xf32>
    %8 = arith.maximumf %6, %7 : vector<400x128xf32>
    %9 = arith.maximumf %5, %8 : vector<400x128xf32>
    %c0_3 = arith.constant 0 : index
    %c0_4 = arith.constant 0 : index
    %10 = vector.load %arg4[%c0_3, %c0_4] : memref<400x1xf32, #tpu.memory_space<vmem>>, vector<400x1xf32>
    %11 = vector.broadcast %10 : vector<400x1xf32> to vector<400x128xf32>
    %12 = arith.addf %9, %11 : vector<400x128xf32>
    %cst_5 = arith.constant 0.000000e+00 : f32
    %13 = vector.broadcast %cst_5 : f32 to vector<400x128xf32>
    %14 = arith.maximumf %12, %13 : vector<400x128xf32>
    %c0_6 = arith.constant 0 : index
    %c0_7 = arith.constant 0 : index
    %15 = vector.load %arg5[%c0_6, %c0_7] : memref<512x400xbf16, #tpu.memory_space<vmem>>, vector<512x400xbf16>
    %16 = arith.truncf %14 : vector<400x128xf32> to vector<400x128xbf16>
    %cst_8 = arith.constant dense<0.000000e+00> : vector<512x128xf32>
    %17 = tpu.matmul %15, %16, %cst_8 {dimension_numbers = #tpu.dot_dimension_numbers<[1], [0], [0], [1], [0, 0, 1, 1], [], []>} : vector<512x400xbf16>, vector<400x128xbf16>, vector<512x128xf32> -> vector<512x128xf32>
    %18 = vector.extract_strided_slice %17 {offsets = [0, 0], sizes = [128, 128], strides = [1, 1]} : vector<512x128xf32> to vector<128x128xf32>
    %19 = vector.extract_strided_slice %17 {offsets = [128, 0], sizes = [128, 128], strides = [1, 1]} : vector<512x128xf32> to vector<128x128xf32>
    %20 = arith.maximumf %18, %19 : vector<128x128xf32>
    %21 = vector.extract_strided_slice %17 {offsets = [256, 0], sizes = [128, 128], strides = [1, 1]} : vector<512x128xf32> to vector<128x128xf32>
    %22 = vector.extract_strided_slice %17 {offsets = [384, 0], sizes = [128, 128], strides = [1, 1]} : vector<512x128xf32> to vector<128x128xf32>
    %23 = arith.maximumf %21, %22 : vector<128x128xf32>
    %24 = arith.maximumf %20, %23 : vector<128x128xf32>
    %c0_9 = arith.constant 0 : index
    %c0_10 = arith.constant 0 : index
    %25 = vector.load %arg6[%c0_9, %c0_10] : memref<128x1xf32, #tpu.memory_space<vmem>>, vector<128x1xf32>
    %26 = vector.broadcast %25 : vector<128x1xf32> to vector<128x128xf32>
    %27 = arith.addf %24, %26 : vector<128x128xf32>
    %cst_11 = arith.constant 0.000000e+00 : f32
    %28 = vector.broadcast %cst_11 : f32 to vector<128x128xf32>
    %29 = arith.maximumf %27, %28 : vector<128x128xf32>
    %c0_12 = arith.constant 0 : index
    %c0_13 = arith.constant 0 : index
    %30 = vector.load %arg7[%c0_12, %c0_13] : memref<64x128xbf16, #tpu.memory_space<vmem>>, vector<64x128xbf16>
    %31 = arith.truncf %29 : vector<128x128xf32> to vector<128x128xbf16>
    %cst_14 = arith.constant dense<0.000000e+00> : vector<64x128xf32>
    %32 = tpu.matmul %30, %31, %cst_14 {dimension_numbers = #tpu.dot_dimension_numbers<[1], [0], [0], [1], [0, 0, 1, 1], [], []>} : vector<64x128xbf16>, vector<128x128xbf16>, vector<64x128xf32> -> vector<64x128xf32>
    %c0_15 = arith.constant 0 : index
    %c0_16 = arith.constant 0 : index
    %33 = vector.load %arg8[%c0_15, %c0_16] : memref<64x8xf32, #tpu.memory_space<vmem>>, vector<64x8xf32>
    %c0_17 = arith.constant 0 : index
    %c0_18 = arith.constant 0 : index
    %34 = vector.load %arg2[%c0_17, %c0_18] : memref<8x128xf32, #tpu.memory_space<vmem>>, vector<8x128xf32>
    %cst_19 = arith.constant dense<0.000000e+00> : vector<64x128xf32>
    %35 = tpu.matmul %33, %34, %cst_19 {dimension_numbers = #tpu.dot_dimension_numbers<[1], [0], [0], [1], [0, 0, 1, 1], [], []>} : vector<64x8xf32>, vector<8x128xf32>, vector<64x128xf32> -> vector<64x128xf32>
    %36 = arith.addf %32, %35 : vector<64x128xf32>
    %c0_20 = arith.constant 0 : index
    %c0_21 = arith.constant 0 : index
    %37 = vector.load %arg9[%c0_20, %c0_21] : memref<64x1xf32, #tpu.memory_space<vmem>>, vector<64x1xf32>
    %38 = vector.broadcast %37 : vector<64x1xf32> to vector<64x128xf32>
    %39 = arith.addf %36, %38 : vector<64x128xf32>
    %cst_22 = arith.constant 0.000000e+00 : f32
    %40 = vector.broadcast %cst_22 : f32 to vector<64x128xf32>
    %41 = arith.maximumf %39, %40 : vector<64x128xf32>
    %c0_23 = arith.constant 0 : index
    %c0_24 = arith.constant 0 : index
    %42 = vector.load %arg10[%c0_23, %c0_24] : memref<64x1xf32, #tpu.memory_space<vmem>>, vector<64x1xf32>
    %43 = vector.broadcast %42 : vector<64x1xf32> to vector<64x128xf32>
    %44 = arith.mulf %41, %43 : vector<64x128xf32>
    %c0_25 = arith.constant 0 : index
    %c0_26 = arith.constant 0 : index
    %45 = vector.load %arg11[%c0_25, %c0_26] : memref<64x1xf32, #tpu.memory_space<vmem>>, vector<64x1xf32>
    %46 = vector.broadcast %45 : vector<64x1xf32> to vector<64x128xf32>
    %47 = arith.addf %44, %46 : vector<64x128xf32>
    %c0_27 = arith.constant 0 : index
    %c0_28 = arith.constant 0 : index
    %48 = vector.load %arg12[%c0_27, %c0_28] : memref<32x64xbf16, #tpu.memory_space<vmem>>, vector<32x64xbf16>
    %49 = arith.truncf %47 : vector<64x128xf32> to vector<64x128xbf16>
    %cst_29 = arith.constant dense<0.000000e+00> : vector<32x128xf32>
    %50 = tpu.matmul %48, %49, %cst_29 {dimension_numbers = #tpu.dot_dimension_numbers<[1], [0], [0], [1], [0, 0, 1, 1], [], []>} : vector<32x64xbf16>, vector<64x128xbf16>, vector<32x128xf32> -> vector<32x128xf32>
    %c0_30 = arith.constant 0 : index
    %c0_31 = arith.constant 0 : index
    %51 = vector.load %arg13[%c0_30, %c0_31] : memref<32x1xf32, #tpu.memory_space<vmem>>, vector<32x1xf32>
    %52 = vector.broadcast %51 : vector<32x1xf32> to vector<32x128xf32>
    %53 = arith.addf %50, %52 : vector<32x128xf32>
    %cst_32 = arith.constant 0.000000e+00 : f32
    %54 = vector.broadcast %cst_32 : f32 to vector<32x128xf32>
    %55 = arith.maximumf %53, %54 : vector<32x128xf32>
    %c0_33 = arith.constant 0 : index
    %c0_34 = arith.constant 0 : index
    %56 = vector.load %arg14[%c0_33, %c0_34] : memref<32x1xf32, #tpu.memory_space<vmem>>, vector<32x1xf32>
    %57 = vector.broadcast %56 : vector<32x1xf32> to vector<32x128xf32>
    %58 = arith.mulf %55, %57 : vector<32x128xf32>
    %c0_35 = arith.constant 0 : index
    %c0_36 = arith.constant 0 : index
    %59 = vector.load %arg15[%c0_35, %c0_36] : memref<32x1xf32, #tpu.memory_space<vmem>>, vector<32x1xf32>
    %60 = vector.broadcast %59 : vector<32x1xf32> to vector<32x128xf32>
    %61 = arith.addf %58, %60 : vector<32x128xf32>
    %c0_37 = arith.constant 0 : index
    %c0_38 = arith.constant 0 : index
    %62 = vector.load %arg16[%c0_37, %c0_38] : memref<32x1xf32, #tpu.memory_space<vmem>>, vector<32x1xf32>
    %63 = vector.broadcast %62 : vector<32x1xf32> to vector<32x128xf32>
    %64 = arith.mulf %63, %61 : vector<32x128xf32>
    %cst_39 = arith.constant dense<0.000000e+00> : vector<128xf32>
    %65 = vector.multi_reduction <add>, %64, %cst_39 [0] : vector<32x128xf32> to vector<128xf32>
    %66 = vector.shape_cast %65 : vector<128xf32> to vector<1x128xf32>
    %c0_40 = arith.constant 0 : index
    %c0_41 = arith.constant 0 : index
    %67 = vector.load %arg17[%c0_40, %c0_41] : memref<1x1xf32, #tpu.memory_space<vmem>>, vector<1x1xf32>
    %68 = vector.broadcast %67 : vector<1x1xf32> to vector<1x128xf32>
    %69 = arith.addf %66, %68 : vector<1x128xf32>
    %cst_42 = arith.constant 0.000000e+00 : f32
    %70 = vector.broadcast %cst_42 : f32 to vector<1x128xf32>
    %71 = arith.subf %70, %69 : vector<1x128xf32>
    %72 = math.exp %71 : vector<1x128xf32>
    %cst_43 = arith.constant 1.000000e+00 : f32
    %73 = vector.broadcast %cst_43 : f32 to vector<1x128xf32>
    %74 = arith.addf %73, %72 : vector<1x128xf32>
    %cst_44 = arith.constant 1.000000e+00 : f32
    %75 = vector.broadcast %cst_44 : f32 to vector<1x128xf32>
    %76 = arith.divf %75, %74 : vector<1x128xf32>
    %77 = tpu.concatenate %69, %76 in 0 : vector<1x128xf32>, vector<1x128xf32> -> vector<2x128xf32>
    %c0_45 = arith.constant 0 : index
    %c0_46 = arith.constant 0 : index
    %78 = vector.load %arg18[%c0_45, %c0_46] : memref<2x128xf32, #tpu.memory_space<vmem>>, vector<2x128xf32>
    tpu.vector_store %arg18[%c0_45, %c0_46], %77 {strides = array<i32>} : memref<2x128xf32, #tpu.memory_space<vmem>>, vector<2x128xf32>,
    return
  }
  func.func @transform_0(%arg0: i32) -> (i32, i32) {
    %c0_i32 = arith.constant 0 : i32
    %c0_i32_0 = arith.constant 0 : i32
    return %arg0, %c0_i32 : i32, i32
  }
  func.func @transform_1(%arg0: i32) -> (i32, i32) {
    %c0_i32 = arith.constant 0 : i32
    %c0_i32_0 = arith.constant 0 : i32
    return %c0_i32, %arg0 : i32, i32
  }
  func.func @transform_2(%arg0: i32) -> (i32, i32) {
    %c0_i32 = arith.constant 0 : i32
    %c0_i32_0 = arith.constant 0 : i32
    %c0_i32_1 = arith.constant 0 : i32
    return %c0_i32, %c0_i32_0 : i32, i32
  }
  func.func @transform_3(%arg0: i32) -> (i32, i32) {
    %c0_i32 = arith.constant 0 : i32
    %c0_i32_0 = arith.constant 0 : i32
    %c0_i32_1 = arith.constant 0 : i32
    return %c0_i32, %c0_i32_0 : i32, i32
  }
  func.func @transform_4(%arg0: i32) -> (i32, i32) {
    %c0_i32 = arith.constant 0 : i32
    %c0_i32_0 = arith.constant 0 : i32
    %c0_i32_1 = arith.constant 0 : i32
    return %c0_i32, %c0_i32_0 : i32, i32
  }
  func.func @transform_5(%arg0: i32) -> (i32, i32) {
    %c0_i32 = arith.constant 0 : i32
    %c0_i32_0 = arith.constant 0 : i32
    %c0_i32_1 = arith.constant 0 : i32
    return %c0_i32, %c0_i32_0 : i32, i32
  }
  func.func @transform_6(%arg0: i32) -> (i32, i32) {
    %c0_i32 = arith.constant 0 : i32
    %c0_i32_0 = arith.constant 0 : i32
    %c0_i32_1 = arith.constant 0 : i32
    return %c0_i32, %c0_i32_0 : i32, i32
  }
  func.func @transform_7(%arg0: i32) -> (i32, i32) {
    %c0_i32 = arith.constant 0 : i32
    %c0_i32_0 = arith.constant 0 : i32
    %c0_i32_1 = arith.constant 0 : i32
    return %c0_i32, %c0_i32_0 : i32, i32
  }
  func.func @transform_8(%arg0: i32) -> (i32, i32) {
    %c0_i32 = arith.constant 0 : i32
    %c0_i32_0 = arith.constant 0 : i32
    %c0_i32_1 = arith.constant 0 : i32
    return %c0_i32, %c0_i32_0 : i32, i32
  }
  func.func @transform_9(%arg0: i32) -> (i32, i32) {
    %c0_i32 = arith.constant 0 : i32
    %c0_i32_0 = arith.constant 0 : i32
    %c0_i32_1 = arith.constant 0 : i32
    return %c0_i32, %c0_i32_0 : i32, i32
  }
  func.func @transform_10(%arg0: i32) -> (i32, i32) {
    %c0_i32 = arith.constant 0 : i32
    %c0_i32_0 = arith.constant 0 : i32
    %c0_i32_1 = arith.constant 0 : i32
    return %c0_i32, %c0_i32_0 : i32, i32
  }
  func.func @transform_11(%arg0: i32) -> (i32, i32) {
    %c0_i32 = arith.constant 0 : i32
    %c0_i32_0 = arith.constant 0 : i32
    %c0_i32_1 = arith.constant 0 : i32
    return %c0_i32, %c0_i32_0 : i32, i32
  }
  func.func @transform_12(%arg0: i32) -> (i32, i32) {
    %c0_i32 = arith.constant 0 : i32
    %c0_i32_0 = arith.constant 0 : i32
    %c0_i32_1 = arith.constant 0 : i32
    return %c0_i32, %c0_i32_0 : i32, i32
  }
  func.func @transform_13(%arg0: i32) -> (i32, i32) {
    %c0_i32 = arith.constant 0 : i32
    %c0_i32_0 = arith.constant 0 : i32
    %c0_i32_1 = arith.constant 0 : i32
    return %c0_i32, %c0_i32_0 : i32, i32
  }
  func.func @transform_14(%arg0: i32) -> (i32, i32) {
    %c0_i32 = arith.constant 0 : i32
    %c0_i32_0 = arith.constant 0 : i32
    %c0_i32_1 = arith.constant 0 : i32
    return %c0_i32, %c0_i32_0 : i32, i32
  }
  func.func @transform_15(%arg0: i32) -> (i32, i32) {
    %c0_i32 = arith.constant 0 : i32
    %c0_i32_0 = arith.constant 0 : i32
    %c0_i32_1 = arith.constant 0 : i32
    return %c0_i32, %c0_i32_0 : i32, i32
  }
  func.func @transform_16(%arg0: i32) -> (i32, i32) {
    %c0_i32 = arith.constant 0 : i32
    %c0_i32_0 = arith.constant 0 : i32
    %c0_i32_1 = arith.constant 0 : i32
    return %c0_i32, %c0_i32_0 : i32, i32
  }
  func.func @transform_17(%arg0: i32) -> (i32, i32) {
    %c0_i32 = arith.constant 0 : i32
    %c0_i32_0 = arith.constant 0 : i32
    return %c0_i32, %arg0 : i32, i32
  }
}

</mosaic_0001>

<llo_original>
// kernel: ratio_10x10_forward.1
$region0: #{ratio_10x10_forward.1}
  #allocation0 [shape = 'u32[]', space=smem, size = 0x4, offset = 0x4, fixed_abs, tag = 'smem constant byte address 0x4 - core index']
  #allocation1 [shape = 'u32[72,128]{1,0:T(1,128)}', space=vmem, size = 0x9000, scoped, tag = 'internal scratch']
  #allocation2 [shape = 'f32[1,1]{1,0:T(1,128)S(1)}', space=vmem, size = 0x200, scoped, tag = 'scoped memory for ratio_10x10_forward.1']
  %s0 = inlined_call_operand.vmem [shape: bf16[128,128], index: 0, kind: input, shape index: {}]
  %s1 = inlined_call_operand.vmem [shape: f32[8,128], index: 1, kind: input, shape index: {}]
  %s2 = inlined_call_operand.vmem [shape: bf16[1600,128], index: 2, kind: input, shape index: {}]
  %s3 = inlined_call_operand.vmem [shape: f32[400,1], index: 3, kind: input, shape index: {}]
  %s4 = inlined_call_operand.hbm [shape: bf16[512,400], index: 4, kind: input, shape index: {}]
  %s5 = inlined_call_operand.vmem [shape: f32[128,1], index: 5, kind: input, shape index: {}]
  %s6 = inlined_call_operand.hbm [shape: bf16[64,128], index: 6, kind: input, shape index: {}]
  %s7 = inlined_call_operand.vmem [shape: f32[64,8], index: 7, kind: input, shape index: {}]
  %s8 = inlined_call_operand.vmem [shape: f32[64,1], index: 8, kind: input, shape index: {}]
  %s9 = inlined_call_operand.vmem [shape: f32[64,1], index: 9, kind: input, shape index: {}]
  %s10 = inlined_call_operand.vmem [shape: f32[64,1], index: 10, kind: input, shape index: {}]
  %s11 = inlined_call_operand.vmem [shape: bf16[32,64], index: 11, kind: input, shape index: {}]
  %s12 = inlined_call_operand.hbm [shape: f32[32,1], index: 12, kind: input, shape index: {}]
  %s13 = inlined_call_operand.vmem [shape: f32[32,1], index: 13, kind: input, shape index: {}]
  %s14 = inlined_call_operand.vmem [shape: f32[32,1], index: 14, kind: input, shape index: {}]
  %s15 = inlined_call_operand.hbm [shape: f32[32,1], index: 15, kind: input, shape index: {}]
  %s16 = inlined_call_operand.<no memory space> [shape: f32[1,1], index: 16, kind: input, shape index: {}]
  %s17 = inlined_call_operand.vmem [shape: f32[2,128], index: 17, kind: output, shape index: {}]
  %s18 = sld [smem:[#allocation0]]
  $region94: #{ratio_10x10_forward.1} parent=0
    _
  %s20 = ssub.s32 1, %s18
  %s21 = scalar_select 0, %s20, %s18
  %v22 = vstv %s16
  %23 = vst [vmem:[#allocation2] sm:$0x1] %v22
  $region1: #{ratio_10x10_forward.1} parent=0
    #allocation3 [shape = 'u8[524288]{0}', space=vmem, size = 0x80000, scoped, tag = 'input window, operand 4, single buffered']
    #allocation4 [shape = 's32[1]{0}', space=sflag, size = 0x4, scoped, tag = 'scoped memory for ratio_10x10_forward.1']
    #allocation5 [shape = 'u8[16384]{0}', space=vmem, size = 0x4000, scoped, tag = 'input window, operand 6, single buffered']
    #allocation6 [shape = 's32[1]{0}', space=sflag, size = 0x4, scoped, tag = 'scoped memory for ratio_10x10_forward.1']
    #allocation7 [shape = 'u8[16384]{0}', space=vmem, size = 0x4000, scoped, tag = 'input window, operand 12, single buffered']
    #allocation8 [shape = 'u8[16384]{0}', space=vmem, size = 0x4000, scoped, tag = 'input window, operand 15, single buffered']
    #allocation9 [shape = 's32[1]{0}', space=sflag, size = 0x4, scoped, tag = 'scoped memory for ratio_10x10_forward.1']
    %24 = vsyncpa [#allocation4], 0
    %25 = vsyncpa [#allocation6], 0
    %26 = vsyncpa [#allocation9], 0
    // Predicated region
    $region2: #{ratio_10x10_forward.1} parent=1 // pred_check
      _
    $region3: #{ratio_10x10_forward.1} parent=1 // pred_check_branch
      %28 = sbr.rel (0) target = $region5
    $region4: #{ratio_10x10_forward.1} parent=1 // pred_region
      _
    $region5: #{ratio_10x10_forward.1} parent=1 // pred_fallthru
      _
    // Predicated region
    $region6: #{ratio_10x10_forward.1} parent=1 // pred_check
      _
    $region7: #{ratio_10x10_forward.1} parent=1 // pred_check_branch
      %30 = sbr.rel (0) target = $region9
    $region8: #{ratio_10x10_forward.1} parent=1 // pred_region
      _
    $region9: #{ratio_10x10_forward.1} parent=1 // pred_fallthru
      _
    // Predicated region
    $region10: #{ratio_10x10_forward.1} parent=1 // pred_check
      _
    $region11: #{ratio_10x10_forward.1} parent=1 // pred_check_branch
      %32 = sbr.rel (0) target = $region13
    $region12: #{ratio_10x10_forward.1} parent=1 // pred_region
      _
    $region13: #{ratio_10x10_forward.1} parent=1 // pred_fallthru
      _
    // Predicated region
    $region14: #{ratio_10x10_forward.1} parent=1 // pred_check
      _
    $region15: #{ratio_10x10_forward.1} parent=1 // pred_check_branch
      %34 = sbr.rel (0) target = $region17
    $region16: #{ratio_10x10_forward.1} parent=1 // pred_region
      _
    $region17: #{ratio_10x10_forward.1} parent=1 // pred_fallthru
      _
    // Predicated region
    $region18: #{ratio_10x10_forward.1} parent=1 // pred_check
      _
    $region19: #{ratio_10x10_forward.1} parent=1 // pred_check_branch
      %36 = sbr.rel (0) target = $region21
    $region20: #{ratio_10x10_forward.1} parent=1 // pred_region
      %38 = vsyncadd [#allocation4], 0
      %s39 = sshll.u32 %s4, 4
      %s40 = int_to_ptr.hbm [resolvable:$true] %s39
      %s41 = sshll.u32 [#allocation3], 4
      %s42 = int_to_ptr.vmem [resolvable:$true] %s41
      %47 = dma.hbm_to_vmem [thread:$0]  %s40, 16384, %s42, [#allocation4], 256, 256, 16
    $region21: #{ratio_10x10_forward.1} parent=1 // pred_fallthru
      _
    // Predicated region
    $region22: #{ratio_10x10_forward.1} parent=1 // pred_check
      _
    $region23: #{ratio_10x10_forward.1} parent=1 // pred_check_branch
      %49 = sbr.rel (0) target = $region25
    $region24: #{ratio_10x10_forward.1} parent=1 // pred_region
      _
    $region25: #{ratio_10x10_forward.1} parent=1 // pred_fallthru
      _
    // Predicated region
    $region26: #{ratio_10x10_forward.1} parent=1 // pred_check
      _
    $region27: #{ratio_10x10_forward.1} parent=1 // pred_check_branch
      %51 = sbr.rel (0) target = $region29
    $region28: #{ratio_10x10_forward.1} parent=1 // pred_region
      %53 = vsyncadd [#allocation6], 0
      %s54 = sshll.u32 %s6, 4
      %s55 = int_to_ptr.hbm [resolvable:$true] %s54
      %s56 = sshll.u32 [#allocation5], 4
      %s57 = int_to_ptr.vmem [resolvable:$true] %s56
      %62 = dma.hbm_to_vmem [thread:$0]  %s55, 512, %s57, [#allocation6], 64, 64, 4
    $region29: #{ratio_10x10_forward.1} parent=1 // pred_fallthru
      _
    // Predicated region
    $region30: #{ratio_10x10_forward.1} parent=1 // pred_check
      _
    $region31: #{ratio_10x10_forward.1} parent=1 // pred_check_branch
      %64 = sbr.rel (0) target = $region33
    $region32: #{ratio_10x10_forward.1} parent=1 // pred_region
      _
    $region33: #{ratio_10x10_forward.1} parent=1 // pred_fallthru
      _
    // Predicated region
    $region34: #{ratio_10x10_forward.1} parent=1 // pred_check
      _
    $region35: #{ratio_10x10_forward.1} parent=1 // pred_check_branch
      %66 = sbr.rel (0) target = $region37
    $region36: #{ratio_10x10_forward.1} parent=1 // pred_region
      _
    $region37: #{ratio_10x10_forward.1} parent=1 // pred_fallthru
      _
    // Predicated region
    $region38: #{ratio_10x10_forward.1} parent=1 // pred_check
      _
    $region39: #{ratio_10x10_forward.1} parent=1 // pred_check_branch
      %68 = sbr.rel (0) target = $region41
    $region40: #{ratio_10x10_forward.1} parent=1 // pred_region
      _
    $region41: #{ratio_10x10_forward.1} parent=1 // pred_fallthru
      _
    // Predicated region
    $region42: #{ratio_10x10_forward.1} parent=1 // pred_check
      _
    $region43: #{ratio_10x10_forward.1} parent=1 // pred_check_branch
      %70 = sbr.rel (0) target = $region45
    $region44: #{ratio_10x10_forward.1} parent=1 // pred_region
      _
    $region45: #{ratio_10x10_forward.1} parent=1 // pred_fallthru
      _
    // Predicated region
    $region46: #{ratio_10x10_forward.1} parent=1 // pred_check
      _
    $region47: #{ratio_10x10_forward.1} parent=1 // pred_check_branch
      %72 = sbr.rel (0) target = $region49
    $region48: #{ratio_10x10_forward.1} parent=1 // pred_region
      _
    $region49: #{ratio_10x10_forward.1} parent=1 // pred_fallthru
      _
    // Predicated region
    $region50: #{ratio_10x10_forward.1} parent=1 // pred_check
      _
    $region51: #{ratio_10x10_forward.1} parent=1 // pred_check_branch
      %74 = sbr.rel (0) target = $region53
    $region52: #{ratio_10x10_forward.1} parent=1 // pred_region
      %76 = vsyncadd [#allocation6], 0
      %s77 = sshll.u32 %s12, 4
      %s78 = int_to_ptr.hbm [resolvable:$true] %s77
      %s79 = sshll.u32 [#allocation7], 4
      %s80 = int_to_ptr.vmem [resolvable:$true] %s79
      %85 = dma.hbm_to_vmem [thread:$0]  %s78, 512, %s80, [#allocation6], 128, 128, 8
    $region53: #{ratio_10x10_forward.1} parent=1 // pred_fallthru
      _
    // Predicated region
    $region54: #{ratio_10x10_forward.1} parent=1 // pred_check
      _
    $region55: #{ratio_10x10_forward.1} parent=1 // pred_check_branch
      %87 = sbr.rel (0) target = $region57
    $region56: #{ratio_10x10_forward.1} parent=1 // pred_region
      _
    $region57: #{ratio_10x10_forward.1} parent=1 // pred_fallthru
      _
    // Predicated region
    $region58: #{ratio_10x10_forward.1} parent=1 // pred_check
      _
    $region59: #{ratio_10x10_forward.1} parent=1 // pred_check_branch
      %89 = sbr.rel (0) target = $region61
    $region60: #{ratio_10x10_forward.1} parent=1 // pred_region
      _
    $region61: #{ratio_10x10_forward.1} parent=1 // pred_fallthru
      _
    // Predicated region
    $region62: #{ratio_10x10_forward.1} parent=1 // pred_check
      _
    $region63: #{ratio_10x10_forward.1} parent=1 // pred_check_branch
      %91 = sbr.rel (0) target = $region65
    $region64: #{ratio_10x10_forward.1} parent=1 // pred_region
      %93 = vsyncadd [#allocation9], 0
      %s94 = sshll.u32 %s15, 4
      %s95 = int_to_ptr.hbm [resolvable:$true] %s94
      %s96 = sshll.u32 [#allocation8], 4
      %s97 = int_to_ptr.vmem [resolvable:$true] %s96
      %102 = dma.hbm_to_vmem [thread:$0]  %s95, 512, %s97, [#allocation9], 128, 128, 8
    $region65: #{ratio_10x10_forward.1} parent=1 // pred_fallthru
      _
    // Predicated region
    $region66: #{ratio_10x10_forward.1} parent=1 // pred_check
      _
    $region67: #{ratio_10x10_forward.1} parent=1 // pred_check_branch
      %104 = sbr.rel (0) target = $region69
    $region68: #{ratio_10x10_forward.1} parent=1 // pred_region
      _
    $region69: #{ratio_10x10_forward.1} parent=1 // pred_fallthru
      _
    // Predicated region
    $region70: #{ratio_10x10_forward.1} parent=1 // pred_check
      _
    $region71: #{ratio_10x10_forward.1} parent=1 // pred_check_branch
      %106 = sbr.rel (0) target = $region73
    $region72: #{ratio_10x10_forward.1} parent=1 // pred_region
      %108 = dma.done [#allocation4], 16384
    $region73: #{ratio_10x10_forward.1} parent=1 // pred_fallthru
      _
    // Predicated region
    $region74: #{ratio_10x10_forward.1} parent=1 // pred_check
      _
    $region75: #{ratio_10x10_forward.1} parent=1 // pred_check_branch
      %110 = sbr.rel (0) target = $region77
    $region76: #{ratio_10x10_forward.1} parent=1 // pred_region
      %112 = dma.done [#allocation6], 512
    $region77: #{ratio_10x10_forward.1} parent=1 // pred_fallthru
      _
    // Predicated region
    $region78: #{ratio_10x10_forward.1} parent=1 // pred_check
      _
    $region79: #{ratio_10x10_forward.1} parent=1 // pred_check_branch
      %114 = sbr.rel (0) target = $region81
    $region80: #{ratio_10x10_forward.1} parent=1 // pred_region
      %116 = dma.done [#allocation6], 512
    $region81: #{ratio_10x10_forward.1} parent=1 // pred_fallthru
      _
    // Predicated region
    $region82: #{ratio_10x10_forward.1} parent=1 // pred_check
      _
    $region83: #{ratio_10x10_forward.1} parent=1 // pred_check_branch
      %118 = sbr.rel (0) target = $region85
    $region84: #{ratio_10x10_forward.1} parent=1 // pred_region
      %120 = dma.done [#allocation9], 512
    $region85: #{ratio_10x10_forward.1} parent=1 // pred_fallthru
      _
    %v122 = vld [vmem:[%s2] sm:$0xf]
    %v123 = vld [vmem:[%s2 + $0x4] sm:$0xf]
    %v124 = vld [vmem:[%s2 + $0x8] sm:$0xf]
    %v125 = vld [vmem:[%s2 + $0xc] sm:$0xf]
    %v126 = vld [vmem:[%s2 + $0x10] sm:$0xf]
    %v127 = vld [vmem:[%s2 + $0x14] sm:$0xf]
    %v128 = vld [vmem:[%s2 + $0x18] sm:$0xf]
    %v129 = vld [vmem:[%s2 + $0x1c] sm:$0xf]
    %v130 = vld [vmem:[%s2 + $0x20] sm:$0xf]
    %v131 = vld [vmem:[%s2 + $0x24] sm:$0xf]
    %v132 = vld [vmem:[%s2 + $0x28] sm:$0xf]
    %v133 = vld [vmem:[%s2 + $0x2c] sm:$0xf]
    %v134 = vld [vmem:[%s2 + $0x30] sm:$0xf]
    %v135 = vld [vmem:[%s2 + $0x34] sm:$0xf]
    %v136 = vld [vmem:[%s2 + $0x38] sm:$0xf]
    %v137 = vld [vmem:[%s2 + $0x3c] sm:$0xf]
    %v138 = vld [vmem:[%s2 + $0x40] sm:$0xf]
    %v139 = vld [vmem:[%s2 + $0x44] sm:$0xf]
    %v140 = vld [vmem:[%s2 + $0x48] sm:$0xf]
    %v141 = vld [vmem:[%s2 + $0x4c] sm:$0xf]
    %v142 = vld [vmem:[%s2 + $0x50] sm:$0xf]
    %v143 = vld [vmem:[%s2 + $0x54] sm:$0xf]
    %v144 = vld [vmem:[%s2 + $0x58] sm:$0xf]
    %v145 = vld [vmem:[%s2 + $0x5c] sm:$0xf]
    %v146 = vld [vmem:[%s2 + $0x60] sm:$0xf]
    %v147 = vld [vmem:[%s2 + $0x64] sm:$0xf]
    %v148 = vld [vmem:[%s2 + $0x68] sm:$0xf]
    %v149 = vld [vmem:[%s2 + $0x6c] sm:$0xf]
    %v150 = vld [vmem:[%s2 + $0x70] sm:$0xf]
    %v151 = vld [vmem:[%s2 + $0x74] sm:$0xf]
    %v152 = vld [vmem:[%s2 + $0x78] sm:$0xf]
    %v153 = vld [vmem:[%s2 + $0x7c] sm:$0xf]
    %v154 = vld [vmem:[%s2 + $0x80] sm:$0xf]
    %v155 = vld [vmem:[%s2 + $0x84] sm:$0xf]
    %v156 = vld [vmem:[%s2 + $0x88] sm:$0xf]
    %v157 = vld [vmem:[%s2 + $0x8c] sm:$0xf]
    %v158 = vld [vmem:[%s2 + $0x90] sm:$0xf]
    %v159 = vld [vmem:[%s2 + $0x94] sm:$0xf]
    %v160 = vld [vmem:[%s2 + $0x98] sm:$0xf]
    %v161 = vld [vmem:[%s2 + $0x9c] sm:$0xf]
    %v162 = vld [vmem:[%s2 + $0xa0] sm:$0xf]
    %v163 = vld [vmem:[%s2 + $0xa4] sm:$0xf]
    %v164 = vld [vmem:[%s2 + $0xa8] sm:$0xf]
    %v165 = vld [vmem:[%s2 + $0xac] sm:$0xf]
    %v166 = vld [vmem:[%s2 + $0xb0] sm:$0xf]
    %v167 = vld [vmem:[%s2 + $0xb4] sm:$0xf]
    %v168 = vld [vmem:[%s2 + $0xb8] sm:$0xf]
    %v169 = vld [vmem:[%s2 + $0xbc] sm:$0xf]
    %v170 = vld [vmem:[%s2 + $0xc0] sm:$0xf]
    %v171 = vld [vmem:[%s2 + $0xc4] sm:$0xf]
    %v172 = vld [vmem:[%s2 + $0xc8] sm:$0xf]
    %v173 = vld [vmem:[%s2 + $0xcc] sm:$0xf]
    %v174 = vld [vmem:[%s2 + $0xd0] sm:$0xf]
    %v175 = vld [vmem:[%s2 + $0xd4] sm:$0xf]
    %v176 = vld [vmem:[%s2 + $0xd8] sm:$0xf]
    %v177 = vld [vmem:[%s2 + $0xdc] sm:$0xf]
    %v178 = vld [vmem:[%s2 + $0xe0] sm:$0xf]
    %v179 = vld [vmem:[%s2 + $0xe4] sm:$0xf]
    %v180 = vld [vmem:[%s2 + $0xe8] sm:$0xf]
    %v181 = vld [vmem:[%s2 + $0xec] sm:$0xf]
    %v182 = vld [vmem:[%s2 + $0xf0] sm:$0xf]
    %v183 = vld [vmem:[%s2 + $0xf4] sm:$0xf]
    %v184 = vld [vmem:[%s2 + $0xf8] sm:$0xf]
    %v185 = vld [vmem:[%s2 + $0xfc] sm:$0xf]
    %v186 = vld [vmem:[%s2 + $0x100] sm:$0xf]
    %v187 = vld [vmem:[%s2 + $0x104] sm:$0xf]
    %v188 = vld [vmem:[%s2 + $0x108] sm:$0xf]
    %v189 = vld [vmem:[%s2 + $0x10c] sm:$0xf]
    %v190 = vld [vmem:[%s2 + $0x110] sm:$0xf]
    %v191 = vld [vmem:[%s2 + $0x114] sm:$0xf]
    %v192 = vld [vmem:[%s2 + $0x118] sm:$0xf]
    %v193 = vld [vmem:[%s2 + $0x11c] sm:$0xf]
    %v194 = vld [vmem:[%s2 + $0x120] sm:$0xf]
    %v195 = vld [vmem:[%s2 + $0x124] sm:$0xf]
    %v196 = vld [vmem:[%s2 + $0x128] sm:$0xf]
    %v197 = vld [vmem:[%s2 + $0x12c] sm:$0xf]
    %v198 = vld [vmem:[%s2 + $0x130] sm:$0xf]
    %v199 = vld [vmem:[%s2 + $0x134] sm:$0xf]
    %v200 = vld [vmem:[%s2 + $0x138] sm:$0xf]
    %v201 = vld [vmem:[%s2 + $0x13c] sm:$0xf]
    %v202 = vld [vmem:[%s2 + $0x140] sm:$0xf]
    %v203 = vld [vmem:[%s2 + $0x144] sm:$0xf]
    %v204 = vld [vmem:[%s2 + $0x148] sm:$0xf]
    %v205 = vld [vmem:[%s2 + $0x14c] sm:$0xf]
    %v206 = vld [vmem:[%s2 + $0x150] sm:$0xf]
    %v207 = vld [vmem:[%s2 + $0x154] sm:$0xf]
    %v208 = vld [vmem:[%s2 + $0x158] sm:$0xf]
    %v209 = vld [vmem:[%s2 + $0x15c] sm:$0xf]
    %v210 = vld [vmem:[%s2 + $0x160] sm:$0xf]
    %v211 = vld [vmem:[%s2 + $0x164] sm:$0xf]
    %v212 = vld [vmem:[%s2 + $0x168] sm:$0xf]
    %v213 = vld [vmem:[%s2 + $0x16c] sm:$0xf]
    %v214 = vld [vmem:[%s2 + $0x170] sm:$0xf]
    %v215 = vld [vmem:[%s2 + $0x174] sm:$0xf]
    %v216 = vld [vmem:[%s2 + $0x178] sm:$0xf]
    %v217 = vld [vmem:[%s2 + $0x17c] sm:$0xf]
    %v218 = vld [vmem:[%s2 + $0x180] sm:$0xf]
    %v219 = vld [vmem:[%s2 + $0x184] sm:$0xf]
    %v220 = vld [vmem:[%s2 + $0x188] sm:$0xf]
    %v221 = vld [vmem:[%s2 + $0x18c] sm:$0xf]
    %v222 = vld [vmem:[%s2 + $0x190] sm:$0xf]
    %v223 = vld [vmem:[%s2 + $0x194] sm:$0xf]
    %v224 = vld [vmem:[%s2 + $0x198] sm:$0xf]
    %v225 = vld [vmem:[%s2 + $0x19c] sm:$0xf]
    %v226 = vld [vmem:[%s2 + $0x1a0] sm:$0xf]
    %v227 = vld [vmem:[%s2 + $0x1a4] sm:$0xf]
    %v228 = vld [vmem:[%s2 + $0x1a8] sm:$0xf]
    %v229 = vld [vmem:[%s2 + $0x1ac] sm:$0xf]
    %v230 = vld [vmem:[%s2 + $0x1b0] sm:$0xf]
    %v231 = vld [vmem:[%s2 + $0x1b4] sm:$0xf]
    %v232 = vld [vmem:[%s2 + $0x1b8] sm:$0xf]
    %v233 = vld [vmem:[%s2 + $0x1bc] sm:$0xf]
    %v234 = vld [vmem:[%s2 + $0x1c0] sm:$0xf]
    %v235 = vld [vmem:[%s2 + $0x1c4] sm:$0xf]
    %v236 = vld [vmem:[%s2 + $0x1c8] sm:$0xf]
    %v237 = vld [vmem:[%s2 + $0x1cc] sm:$0xf]
    %v238 = vld [vmem:[%s2 + $0x1d0] sm:$0xf]
    %v239 = vld [vmem:[%s2 + $0x1d4] sm:$0xf]
    %v240 = vld [vmem:[%s2 + $0x1d8] sm:$0xf]
    %v241 = vld [vmem:[%s2 + $0x1dc] sm:$0xf]
    %v242 = vld [vmem:[%s2 + $0x1e0] sm:$0xf]
    %v243 = vld [vmem:[%s2 + $0x1e4] sm:$0xf]
    %v244 = vld [vmem:[%s2 + $0x1e8] sm:$0xf]
    %v245 = vld [vmem:[%s2 + $0x1ec] sm:$0xf]
    %v246 = vld [vmem:[%s2 + $0x1f0] sm:$0xf]
    %v247 = vld [vmem:[%s2 + $0x1f4] sm:$0xf]
    %v248 = vld [vmem:[%s2 + $0x1f8] sm:$0xf]
    %v249 = vld [vmem:[%s2 + $0x1fc] sm:$0xf]
    %v250 = vld [vmem:[%s2 + $0x200] sm:$0xf]
    %v251 = vld [vmem:[%s2 + $0x204] sm:$0xf]
    %v252 = vld [vmem:[%s2 + $0x208] sm:$0xf]
    %v253 = vld [vmem:[%s2 + $0x20c] sm:$0xf]
    %v254 = vld [vmem:[%s2 + $0x210] sm:$0xf]
    %v255 = vld [vmem:[%s2 + $0x214] sm:$0xf]
    %v256 = vld [vmem:[%s2 + $0x218] sm:$0xf]
    %v257 = vld [vmem:[%s2 + $0x21c] sm:$0xf]
    %v258 = vld [vmem:[%s2 + $0x220] sm:$0xf]
    %v259 = vld [vmem:[%s2 + $0x224] sm:$0xf]
    %v260 = vld [vmem:[%s2 + $0x228] sm:$0xf]
    %v261 = vld [vmem:[%s2 + $0x22c] sm:$0xf]
    %v262 = vld [vmem:[%s2 + $0x230] sm:$0xf]
    %v263 = vld [vmem:[%s2 + $0x234] sm:$0xf]
    %v264 = vld [vmem:[%s2 + $0x238] sm:$0xf]
    %v265 = vld [vmem:[%s2 + $0x23c] sm:$0xf]
    %v266 = vld [vmem:[%s2 + $0x240] sm:$0xf]
    %v267 = vld [vmem:[%s2 + $0x244] sm:$0xf]
    %v268 = vld [vmem:[%s2 + $0x248] sm:$0xf]
    %v269 = vld [vmem:[%s2 + $0x24c] sm:$0xf]
    %v270 = vld [vmem:[%s2 + $0x250] sm:$0xf]
    %v271 = vld [vmem:[%s2 + $0x254] sm:$0xf]
    %v272 = vld [vmem:[%s2 + $0x258] sm:$0xf]
    %v273 = vld [vmem:[%s2 + $0x25c] sm:$0xf]
    %v274 = vld [vmem:[%s2 + $0x260] sm:$0xf]
    %v275 = vld [vmem:[%s2 + $0x264] sm:$0xf]
    %v276 = vld [vmem:[%s2 + $0x268] sm:$0xf]
    %v277 = vld [vmem:[%s2 + $0x26c] sm:$0xf]
    %v278 = vld [vmem:[%s2 + $0x270] sm:$0xf]
    %v279 = vld [vmem:[%s2 + $0x274] sm:$0xf]
    %v280 = vld [vmem:[%s2 + $0x278] sm:$0xf]
    %v281 = vld [vmem:[%s2 + $0x27c] sm:$0xf]
    %v282 = vld [vmem:[%s2 + $0x280] sm:$0xf]
    %v283 = vld [vmem:[%s2 + $0x284] sm:$0xf]
    %v284 = vld [vmem:[%s2 + $0x288] sm:$0xf]
    %v285 = vld [vmem:[%s2 + $0x28c] sm:$0xf]
    %v286 = vld [vmem:[%s2 + $0x290] sm:$0xf]
    %v287 = vld [vmem:[%s2 + $0x294] sm:$0xf]
    %v288 = vld [vmem:[%s2 + $0x298] sm:$0xf]
    %v289 = vld [vmem:[%s2 + $0x29c] sm:$0xf]
    %v290 = vld [vmem:[%s2 + $0x2a0] sm:$0xf]
    %v291 = vld [vmem:[%s2 + $0x2a4] sm:$0xf]
    %v292 = vld [vmem:[%s2 + $0x2a8] sm:$0xf]
    %v293 = vld [vmem:[%s2 + $0x2ac] sm:$0xf]
    %v294 = vld [vmem:[%s2 + $0x2b0] sm:$0xf]
    %v295 = vld [vmem:[%s2 + $0x2b4] sm:$0xf]
    %v296 = vld [vmem:[%s2 + $0x2b8] sm:$0xf]
    %v297 = vld [vmem:[%s2 + $0x2bc] sm:$0xf]
    %v298 = vld [vmem:[%s2 + $0x2c0] sm:$0xf]
    %v299 = vld [vmem:[%s2 + $0x2c4] sm:$0xf]
    %v300 = vld [vmem:[%s2 + $0x2c8] sm:$0xf]
    %v301 = vld [vmem:[%s2 + $0x2cc] sm:$0xf]
    %v302 = vld [vmem:[%s2 + $0x2d0] sm:$0xf]
    %v303 = vld [vmem:[%s2 + $0x2d4] sm:$0xf]
    %v304 = vld [vmem:[%s2 + $0x2d8] sm:$0xf]
    %v305 = vld [vmem:[%s2 + $0x2dc] sm:$0xf]
    %v306 = vld [vmem:[%s2 + $0x2e0] sm:$0xf]
    %v307 = vld [vmem:[%s2 + $0x2e4] sm:$0xf]
    %v308 = vld [vmem:[%s2 + $0x2e8] sm:$0xf]
    %v309 = vld [vmem:[%s2 + $0x2ec] sm:$0xf]
    %v310 = vld [vmem:[%s2 + $0x2f0] sm:$0xf]
    %v311 = vld [vmem:[%s2 + $0x2f4] sm:$0xf]
    %v312 = vld [vmem:[%s2 + $0x2f8] sm:$0xf]
    %v313 = vld [vmem:[%s2 + $0x2fc] sm:$0xf]
    %v314 = vld [vmem:[%s2 + $0x300] sm:$0xf]
    %v315 = vld [vmem:[%s2 + $0x304] sm:$0xf]
    %v316 = vld [vmem:[%s2 + $0x308] sm:$0xf]
    %v317 = vld [vmem:[%s2 + $0x30c] sm:$0xf]
    %v318 = vld [vmem:[%s2 + $0x310] sm:$0xf]
    %v319 = vld [vmem:[%s2 + $0x314] sm:$0xf]
    %v320 = vld [vmem:[%s2 + $0x318] sm:$0xf]
    %v321 = vld [vmem:[%s2 + $0x31c] sm:$0xf]
    %v322 = vld [vmem:[%s0] sm:$0xf]
    %v323 = vld [vmem:[%s0 + $0x4] sm:$0xf]
    %v324 = vld [vmem:[%s0 + $0x8] sm:$0xf]
    %v325 = vld [vmem:[%s0 + $0xc] sm:$0xf]
    %v326 = vld [vmem:[%s0 + $0x10] sm:$0xf]
    %v327 = vld [vmem:[%s0 + $0x14] sm:$0xf]
    %v328 = vld [vmem:[%s0 + $0x18] sm:$0xf]
    %v329 = vld [vmem:[%s0 + $0x1c] sm:$0xf]
    %v330 = vld [vmem:[%s0 + $0x20] sm:$0xf]
    %v331 = vld [vmem:[%s0 + $0x24] sm:$0xf]
    %v332 = vld [vmem:[%s0 + $0x28] sm:$0xf]
    %v333 = vld [vmem:[%s0 + $0x2c] sm:$0xf]
    %v334 = vld [vmem:[%s0 + $0x30] sm:$0xf]
    %v335 = vld [vmem:[%s0 + $0x34] sm:$0xf]
    %v336 = vld [vmem:[%s0 + $0x38] sm:$0xf]
    %v337 = vld [vmem:[%s0 + $0x3c] sm:$0xf]
    %v538 = vunpack.c.l.b16 %v122
    %v539 = vunpack.c.l.b16 %v123
    %v540 = vunpack.c.l.b16 %v124
    %v541 = vunpack.c.l.b16 %v125
    %v542 = vunpack.c.l.b16 %v126
    %v543 = vunpack.c.l.b16 %v127
    %v544 = vunpack.c.l.b16 %v128
    %v545 = vunpack.c.l.b16 %v129
    %v546 = vunpack.c.l.b16 %v130
    %v547 = vunpack.c.l.b16 %v131
    %v548 = vunpack.c.l.b16 %v132
    %v549 = vunpack.c.l.b16 %v133
    %v550 = vunpack.c.l.b16 %v134
    %v551 = vunpack.c.l.b16 %v135
    %v552 = vunpack.c.l.b16 %v136
    %v553 = vunpack.c.l.b16 %v137
    %v554 = vunpack.c.l.b16 %v138
    %v555 = vunpack.c.l.b16 %v139
    %v556 = vunpack.c.l.b16 %v140
    %v557 = vunpack.c.l.b16 %v141
    %v558 = vunpack.c.l.b16 %v142
    %v559 = vunpack.c.l.b16 %v143
    %v560 = vunpack.c.l.b16 %v144
    %v561 = vunpack.c.l.b16 %v145
    %v562 = vunpack.c.l.b16 %v146
    %v563 = vunpack.c.l.b16 %v147
    %v564 = vunpack.c.l.b16 %v148
    %v565 = vunpack.c.l.b16 %v149
    %v566 = vunpack.c.l.b16 %v150
    %v567 = vunpack.c.l.b16 %v151
    %v568 = vunpack.c.l.b16 %v152
    %v569 = vunpack.c.l.b16 %v153
    %v570 = vunpack.c.l.b16 %v154
    %v571 = vunpack.c.l.b16 %v155
    %v572 = vunpack.c.l.b16 %v156
    %v573 = vunpack.c.l.b16 %v157
    %v574 = vunpack.c.l.b16 %v158
    %v575 = vunpack.c.l.b16 %v159
    %v576 = vunpack.c.l.b16 %v160
    %v577 = vunpack.c.l.b16 %v161
    %v578 = vunpack.c.l.b16 %v162
    %v579 = vunpack.c.l.b16 %v163
    %v580 = vunpack.c.l.b16 %v164
    %v581 = vunpack.c.l.b16 %v165
    %v582 = vunpack.c.l.b16 %v166
    %v583 = vunpack.c.l.b16 %v167
    %v584 = vunpack.c.l.b16 %v168
    %v585 = vunpack.c.l.b16 %v169
    %v586 = vunpack.c.l.b16 %v170
    %v587 = vunpack.c.l.b16 %v171
    %v588 = vunpack.c.l.b16 %v172
    %v589 = vunpack.c.l.b16 %v173
    %v590 = vunpack.c.l.b16 %v174
    %v591 = vunpack.c.l.b16 %v175
    %v592 = vunpack.c.l.b16 %v176
    %v593 = vunpack.c.l.b16 %v177
    %v594 = vunpack.c.l.b16 %v178
    %v595 = vunpack.c.l.b16 %v179
    %v596 = vunpack.c.l.b16 %v180
    %v597 = vunpack.c.l.b16 %v181
    %v598 = vunpack.c.l.b16 %v182
    %v599 = vunpack.c.l.b16 %v183
    %v600 = vunpack.c.l.b16 %v184
    %v601 = vunpack.c.l.b16 %v185
    %v602 = vunpack.c.l.b16 %v186
    %v603 = vunpack.c.l.b16 %v187
    %v604 = vunpack.c.l.b16 %v188
    %v605 = vunpack.c.l.b16 %v189
    %v606 = vunpack.c.l.b16 %v190
    %v607 = vunpack.c.l.b16 %v191
    %v608 = vunpack.c.l.b16 %v192
    %v609 = vunpack.c.l.b16 %v193
    %v610 = vunpack.c.l.b16 %v194
    %v611 = vunpack.c.l.b16 %v195
    %v612 = vunpack.c.l.b16 %v196
    %v613 = vunpack.c.l.b16 %v197
    %v614 = vunpack.c.l.b16 %v198
    %v615 = vunpack.c.l.b16 %v199
    %v616 = vunpack.c.l.b16 %v200
    %v617 = vunpack.c.l.b16 %v201
    %v618 = vunpack.c.l.b16 %v202
    %v619 = vunpack.c.l.b16 %v203
    %v620 = vunpack.c.l.b16 %v204
    %v621 = vunpack.c.l.b16 %v205
    %v622 = vunpack.c.l.b16 %v206
    %v623 = vunpack.c.l.b16 %v207
    %v624 = vunpack.c.l.b16 %v208
    %v625 = vunpack.c.l.b16 %v209
    %v626 = vunpack.c.l.b16 %v210
    %v627 = vunpack.c.l.b16 %v211
    %v628 = vunpack.c.l.b16 %v212
    %v629 = vunpack.c.l.b16 %v213
    %v630 = vunpack.c.l.b16 %v214
    %v631 = vunpack.c.l.b16 %v215
    %v632 = vunpack.c.l.b16 %v216
    %v633 = vunpack.c.l.b16 %v217
    %v634 = vunpack.c.l.b16 %v218
    %v635 = vunpack.c.l.b16 %v219
    %v636 = vunpack.c.l.b16 %v220
    %v637 = vunpack.c.l.b16 %v221
    %v638 = vunpack.c.l.b16 %v222
    %v639 = vunpack.c.l.b16 %v223
    %v640 = vunpack.c.l.b16 %v224
    %v641 = vunpack.c.l.b16 %v225
    %v642 = vunpack.c.l.b16 %v226
    %v643 = vunpack.c.l.b16 %v227
    %v644 = vunpack.c.l.b16 %v228
    %v645 = vunpack.c.l.b16 %v229
    %v646 = vunpack.c.l.b16 %v230
    %v647 = vunpack.c.l.b16 %v231
    %v648 = vunpack.c.l.b16 %v232
    %v649 = vunpack.c.l.b16 %v233
    %v650 = vunpack.c.l.b16 %v234
    %v651 = vunpack.c.l.b16 %v235
    %v652 = vunpack.c.l.b16 %v236
    %v653 = vunpack.c.l.b16 %v237
    %v654 = vunpack.c.l.b16 %v238
    %v655 = vunpack.c.l.b16 %v239
    %v656 = vunpack.c.l.b16 %v240
    %v657 = vunpack.c.l.b16 %v241
    %v658 = vunpack.c.l.b16 %v242
    %v659 = vunpack.c.l.b16 %v243
    %v660 = vunpack.c.l.b16 %v244
    %v661 = vunpack.c.l.b16 %v245
    %v662 = vunpack.c.l.b16 %v246
    %v663 = vunpack.c.l.b16 %v247
    %v664 = vunpack.c.l.b16 %v248
    %v665 = vunpack.c.l.b16 %v249
    %v666 = vunpack.c.l.b16 %v250
    %v667 = vunpack.c.l.b16 %v251
    %v668 = vunpack.c.l.b16 %v252
    %v669 = vunpack.c.l.b16 %v253
    %v670 = vunpack.c.l.b16 %v254
    %v671 = vunpack.c.l.b16 %v255
    %v672 = vunpack.c.l.b16 %v256
    %v673 = vunpack.c.l.b16 %v257
    %v674 = vunpack.c.l.b16 %v258
    %v675 = vunpack.c.l.b16 %v259
    %v676 = vunpack.c.l.b16 %v260
    %v677 = vunpack.c.l.b16 %v261
    %v678 = vunpack.c.l.b16 %v262
    %v679 = vunpack.c.l.b16 %v263
    %v680 = vunpack.c.l.b16 %v264
    %v681 = vunpack.c.l.b16 %v265
    %v682 = vunpack.c.l.b16 %v266
    %v683 = vunpack.c.l.b16 %v267
    %v684 = vunpack.c.l.b16 %v268
    %v685 = vunpack.c.l.b16 %v269
    %v686 = vunpack.c.l.b16 %v270
    %v687 = vunpack.c.l.b16 %v271
    %v688 = vunpack.c.l.b16 %v272
    %v689 = vunpack.c.l.b16 %v273
    %v690 = vunpack.c.l.b16 %v274
    %v691 = vunpack.c.l.b16 %v275
    %v692 = vunpack.c.l.b16 %v276
    %v693 = vunpack.c.l.b16 %v277
    %v694 = vunpack.c.l.b16 %v278
    %v695 = vunpack.c.l.b16 %v279
    %v696 = vunpack.c.l.b16 %v280
    %v697 = vunpack.c.l.b16 %v281
    %v698 = vunpack.c.l.b16 %v282
    %v699 = vunpack.c.l.b16 %v283
    %v700 = vunpack.c.l.b16 %v284
    %v701 = vunpack.c.l.b16 %v285
    %v702 = vunpack.c.l.b16 %v286
    %v703 = vunpack.c.l.b16 %v287
    %v704 = vunpack.c.l.b16 %v288
    %v705 = vunpack.c.l.b16 %v289
    %v706 = vunpack.c.l.b16 %v290
    %v707 = vunpack.c.l.b16 %v291
    %v708 = vunpack.c.l.b16 %v292
    %v709 = vunpack.c.l.b16 %v293
    %v710 = vunpack.c.l.b16 %v294
    %v711 = vunpack.c.l.b16 %v295
    %v712 = vunpack.c.l.b16 %v296
    %v713 = vunpack.c.l.b16 %v297
    %v714 = vunpack.c.l.b16 %v298
    %v715 = vunpack.c.l.b16 %v299
    %v716 = vunpack.c.l.b16 %v300
    %v717 = vunpack.c.l.b16 %v301
    %v718 = vunpack.c.l.b16 %v302
    %v719 = vunpack.c.l.b16 %v303
    %v720 = vunpack.c.l.b16 %v304
    %v721 = vunpack.c.l.b16 %v305
    %v722 = vunpack.c.l.b16 %v306
    %v723 = vunpack.c.l.b16 %v307
    %v724 = vunpack.c.l.b16 %v308
    %v725 = vunpack.c.l.b16 %v309
    %v726 = vunpack.c.l.b16 %v310
    %v727 = vunpack.c.l.b16 %v311
    %v728 = vunpack.c.l.b16 %v312
    %v729 = vunpack.c.l.b16 %v313
    %v730 = vunpack.c.l.b16 %v314
    %v731 = vunpack.c.l.b16 %v315
    %v732 = vunpack.c.l.b16 %v316
    %v733 = vunpack.c.l.b16 %v317
    %v734 = vunpack.c.l.b16 %v318
    %v735 = vunpack.c.l.b16 %v319
    %v736 = vunpack.c.l.b16 %v320
    %v737 = vunpack.c.l.b16 %v321
    %v738 = vpack.c.b16 %v539, %v538
    %v739 = vpack.c.b16 %v541, %v540
    %v740 = vpack.c.b16 %v543, %v542
    %v741 = vpack.c.b16 %v545, %v544
    %v742 = vpack.c.b16 %v547, %v546
    %v743 = vpack.c.b16 %v549, %v548
    %v744 = vpack.c.b16 %v551, %v550
    %v745 = vpack.c.b16 %v553, %v552
    %v746 = vpack.c.b16 %v555, %v554
    %v747 = vpack.c.b16 %v557, %v556
    %v748 = vpack.c.b16 %v559, %v558
    %v749 = vpack.c.b16 %v561, %v560
    %v750 = vpack.c.b16 %v563, %v562
    %v751 = vpack.c.b16 %v565, %v564
    %v752 = vpack.c.b16 %v567, %v566
    %v753 = vpack.c.b16 %v569, %v568
    %v754 = vpack.c.b16 %v571, %v570
    %v755 = vpack.c.b16 %v573, %v572
    %v756 = vpack.c.b16 %v575, %v574
    %v757 = vpack.c.b16 %v577, %v576
    %v758 = vpack.c.b16 %v579, %v578
    %v759 = vpack.c.b16 %v581, %v580
    %v760 = vpack.c.b16 %v583, %v582
    %v761 = vpack.c.b16 %v585, %v584
    %v762 = vpack.c.b16 %v587, %v586
    %v763 = vpack.c.b16 %v589, %v588
    %v764 = vpack.c.b16 %v591, %v590
    %v765 = vpack.c.b16 %v593, %v592
    %v766 = vpack.c.b16 %v595, %v594
    %v767 = vpack.c.b16 %v597, %v596
    %v768 = vpack.c.b16 %v599, %v598
    %v769 = vpack.c.b16 %v601, %v600
    %v770 = vpack.c.b16 %v603, %v602
    %v771 = vpack.c.b16 %v605, %v604
    %v772 = vpack.c.b16 %v607, %v606
    %v773 = vpack.c.b16 %v609, %v608
    %v774 = vpack.c.b16 %v611, %v610
    %v775 = vpack.c.b16 %v613, %v612
    %v776 = vpack.c.b16 %v615, %v614
    %v777 = vpack.c.b16 %v617, %v616
    %v778 = vpack.c.b16 %v619, %v618
    %v779 = vpack.c.b16 %v621, %v620
    %v780 = vpack.c.b16 %v623, %v622
    %v781 = vpack.c.b16 %v625, %v624
    %v782 = vpack.c.b16 %v627, %v626
    %v783 = vpack.c.b16 %v629, %v628
    %v784 = vpack.c.b16 %v631, %v630
    %v785 = vpack.c.b16 %v633, %v632
    %v786 = vpack.c.b16 %v635, %v634
    %v787 = vpack.c.b16 %v637, %v636
    %v788 = vpack.c.b16 %v639, %v638
    %v789 = vpack.c.b16 %v641, %v640
    %v790 = vpack.c.b16 %v643, %v642
    %v791 = vpack.c.b16 %v645, %v644
    %v792 = vpack.c.b16 %v647, %v646
    %v793 = vpack.c.b16 %v649, %v648
    %v794 = vpack.c.b16 %v651, %v650
    %v795 = vpack.c.b16 %v653, %v652
    %v796 = vpack.c.b16 %v655, %v654
    %v797 = vpack.c.b16 %v657, %v656
    %v798 = vpack.c.b16 %v659, %v658
    %v799 = vpack.c.b16 %v661, %v660
    %v800 = vpack.c.b16 %v663, %v662
    %v801 = vpack.c.b16 %v665, %v664
    %v802 = vpack.c.b16 %v667, %v666
    %v803 = vpack.c.b16 %v669, %v668
    %v804 = vpack.c.b16 %v671, %v670
    %v805 = vpack.c.b16 %v673, %v672
    %v806 = vpack.c.b16 %v675, %v674
    %v807 = vpack.c.b16 %v677, %v676
    %v808 = vpack.c.b16 %v679, %v678
    %v809 = vpack.c.b16 %v681, %v680
    %v810 = vpack.c.b16 %v683, %v682
    %v811 = vpack.c.b16 %v685, %v684
    %v812 = vpack.c.b16 %v687, %v686
    %v813 = vpack.c.b16 %v689, %v688
    %v814 = vpack.c.b16 %v691, %v690
    %v815 = vpack.c.b16 %v693, %v692
    %v816 = vpack.c.b16 %v695, %v694
    %v817 = vpack.c.b16 %v697, %v696
    %v818 = vpack.c.b16 %v699, %v698
    %v819 = vpack.c.b16 %v701, %v700
    %v820 = vpack.c.b16 %v703, %v702
    %v821 = vpack.c.b16 %v705, %v704
    %v822 = vpack.c.b16 %v707, %v706
    %v823 = vpack.c.b16 %v709, %v708
    %v824 = vpack.c.b16 %v711, %v710
    %v825 = vpack.c.b16 %v713, %v712
    %v826 = vpack.c.b16 %v715, %v714
    %v827 = vpack.c.b16 %v717, %v716
    %v828 = vpack.c.b16 %v719, %v718
    %v829 = vpack.c.b16 %v721, %v720
    %v830 = vpack.c.b16 %v723, %v722
    %v831 = vpack.c.b16 %v725, %v724
    %v832 = vpack.c.b16 %v727, %v726
    %v833 = vpack.c.b16 %v729, %v728
    %v834 = vpack.c.b16 %v731, %v730
    %v835 = vpack.c.b16 %v733, %v732
    %v836 = vpack.c.b16 %v735, %v734
    %v837 = vpack.c.b16 %v737, %v736
    %v954 = vunpack.c.l.b16 %v322
    %v955 = vunpack.c.l.b16 %v323
    %v956 = vunpack.c.l.b16 %v324
    %v957 = vunpack.c.l.b16 %v325
    %v958 = vunpack.c.l.b16 %v326
    %v959 = vunpack.c.l.b16 %v327
    %v960 = vunpack.c.l.b16 %v328
    %v961 = vunpack.c.l.b16 %v329
    %v962 = vunpack.c.l.b16 %v330
    %v963 = vunpack.c.l.b16 %v331
    %v964 = vunpack.c.l.b16 %v332
    %v965 = vunpack.c.l.b16 %v333
    %v966 = vunpack.c.l.b16 %v334
    %v967 = vunpack.c.l.b16 %v335
    %v968 = vunpack.c.l.b16 %v336
    %v969 = vunpack.c.l.b16 %v337
    %v970 = vpack.c.b16 %v955, %v954
    %v971 = vpack.c.b16 %v957, %v956
    %v972 = vpack.c.b16 %v959, %v958
    %v973 = vpack.c.b16 %v961, %v960
    %v974 = vpack.c.b16 %v963, %v962
    %v975 = vpack.c.b16 %v965, %v964
    %v976 = vpack.c.b16 %v967, %v966
    %v977 = vpack.c.b16 %v969, %v968
    %986 = vmatpush.bf16.xpose.msra.mxu0 %v977
    %987 = vmatpush.bf16.xpose.msra.mxu0 %v976
    %988 = vmatpush.bf16.xpose.msra.mxu0 %v975
    %989 = vmatpush.bf16.xpose.msra.mxu0 %v974
    %990 = vmatpush.bf16.xpose.msra.mxu0 %v973
    %991 = vmatpush.bf16.xpose.msra.mxu0 %v972
    %992 = vmatpush.bf16.xpose.msra.mxu0 %v971
    %993 = vmatpush.bf16.xpose.msra.mxu0 %v970
    %994 = vmatmul.bf16.gmra.mxu0 %v738
    %v995 = vpop.f32.mrf.mxu0
    %v996 = vadd.f32 0.0, %v995
    %v997 = vpop.f32.mrf.mxu0
    %v998 = vadd.f32 0.0, %v997
    %999 = vmatmul.bf16.gmra.mxu0 %v739
    %v1000 = vpop.f32.mrf.mxu0
    %v1001 = vadd.f32 0.0, %v1000
    %v1002 = vpop.f32.mrf.mxu0
    %v1003 = vadd.f32 0.0, %v1002
    %1004 = vmatmul.bf16.gmra.mxu0 %v740
    %v1005 = vpop.f32.mrf.mxu0
    %v1006 = vadd.f32 0.0, %v1005
    %v1007 = vpop.f32.mrf.mxu0
    %v1008 = vadd.f32 0.0, %v1007
    %1009 = vmatmul.bf16.gmra.mxu0 %v741
    %v1010 = vpop.f32.mrf.mxu0
    %v1011 = vadd.f32 0.0, %v1010
    %v1012 = vpop.f32.mrf.mxu0
    %v1013 = vadd.f32 0.0, %v1012
    %1014 = vmatmul.bf16.gmra.mxu0 %v742
    %v1015 = vpop.f32.mrf.mxu0
    %v1016 = vadd.f32 0.0, %v1015
    %v1017 = vpop.f32.mrf.mxu0
    %v1018 = vadd.f32 0.0, %v1017
    %1019 = vmatmul.bf16.gmra.mxu0 %v743
    %v1020 = vpop.f32.mrf.mxu0
    %v1021 = vadd.f32 0.0, %v1020
    %v1022 = vpop.f32.mrf.mxu0
    %v1023 = vadd.f32 0.0, %v1022
    %1024 = vmatmul.bf16.gmra.mxu0 %v744
    %v1025 = vpop.f32.mrf.mxu0
    %v1026 = vadd.f32 0.0, %v1025
    %v1027 = vpop.f32.mrf.mxu0
    %v1028 = vadd.f32 0.0, %v1027
    %1029 = vmatmul.bf16.gmra.mxu0 %v745
    %v1030 = vpop.f32.mrf.mxu0
    %v1031 = vadd.f32 0.0, %v1030
    %v1032 = vpop.f32.mrf.mxu0
    %v1033 = vadd.f32 0.0, %v1032
    %1034 = vmatmul.bf16.gmra.mxu0 %v746
    %v1035 = vpop.f32.mrf.mxu0
    %v1036 = vadd.f32 0.0, %v1035
    %v1037 = vpop.f32.mrf.mxu0
    %v1038 = vadd.f32 0.0, %v1037
    %1039 = vmatmul.bf16.gmra.mxu0 %v747
    %v1040 = vpop.f32.mrf.mxu0
    %v1041 = vadd.f32 0.0, %v1040
    %v1042 = vpop.f32.mrf.mxu0
    %v1043 = vadd.f32 0.0, %v1042
    %1044 = vmatmul.bf16.gmra.mxu0 %v748
    %v1045 = vpop.f32.mrf.mxu0
    %v1046 = vadd.f32 0.0, %v1045
    %v1047 = vpop.f32.mrf.mxu0
    %v1048 = vadd.f32 0.0, %v1047
    %1049 = vmatmul.bf16.gmra.mxu0 %v749
    %v1050 = vpop.f32.mrf.mxu0
    %v1051 = vadd.f32 0.0, %v1050
    %v1052 = vpop.f32.mrf.mxu0
    %v1053 = vadd.f32 0.0, %v1052
    %1054 = vmatmul.bf16.gmra.mxu0 %v750
    %v1055 = vpop.f32.mrf.mxu0
    %v1056 = vadd.f32 0.0, %v1055
    %v1057 = vpop.f32.mrf.mxu0
    %v1058 = vadd.f32 0.0, %v1057
    %1059 = vmatmul.bf16.gmra.mxu0 %v751
    %v1060 = vpop.f32.mrf.mxu0
    %v1061 = vadd.f32 0.0, %v1060
    %v1062 = vpop.f32.mrf.mxu0
    %v1063 = vadd.f32 0.0, %v1062
    %1064 = vmatmul.bf16.gmra.mxu0 %v752
    %v1065 = vpop.f32.mrf.mxu0
    %v1066 = vadd.f32 0.0, %v1065
    %v1067 = vpop.f32.mrf.mxu0
    %v1068 = vadd.f32 0.0, %v1067
    %1069 = vmatmul.bf16.gmra.mxu0 %v753
    %v1070 = vpop.f32.mrf.mxu0
    %v1071 = vadd.f32 0.0, %v1070
    %v1072 = vpop.f32.mrf.mxu0
    %v1073 = vadd.f32 0.0, %v1072
    %1074 = vmatmul.bf16.gmra.mxu0 %v754
    %v1075 = vpop.f32.mrf.mxu0
    %v1076 = vadd.f32 0.0, %v1075
    %v1077 = vpop.f32.mrf.mxu0
    %v1078 = vadd.f32 0.0, %v1077
    %1079 = vmatmul.bf16.gmra.mxu0 %v755
    %v1080 = vpop.f32.mrf.mxu0
    %v1081 = vadd.f32 0.0, %v1080
    %v1082 = vpop.f32.mrf.mxu0
    %v1083 = vadd.f32 0.0, %v1082
    %1084 = vmatmul.bf16.gmra.mxu0 %v756
    %v1085 = vpop.f32.mrf.mxu0
    %v1086 = vadd.f32 0.0, %v1085
    %v1087 = vpop.f32.mrf.mxu0
    %v1088 = vadd.f32 0.0, %v1087
    %1089 = vmatmul.bf16.gmra.mxu0 %v757
    %v1090 = vpop.f32.mrf.mxu0
    %v1091 = vadd.f32 0.0, %v1090
    %v1092 = vpop.f32.mrf.mxu0
    %v1093 = vadd.f32 0.0, %v1092
    %1094 = vmatmul.bf16.gmra.mxu0 %v758
    %v1095 = vpop.f32.mrf.mxu0
    %v1096 = vadd.f32 0.0, %v1095
    %v1097 = vpop.f32.mrf.mxu0
    %v1098 = vadd.f32 0.0, %v1097
    %1099 = vmatmul.bf16.gmra.mxu0 %v759
    %v1100 = vpop.f32.mrf.mxu0
    %v1101 = vadd.f32 0.0, %v1100
    %v1102 = vpop.f32.mrf.mxu0
    %v1103 = vadd.f32 0.0, %v1102
    %1104 = vmatmul.bf16.gmra.mxu0 %v760
    %v1105 = vpop.f32.mrf.mxu0
    %v1106 = vadd.f32 0.0, %v1105
    %v1107 = vpop.f32.mrf.mxu0
    %v1108 = vadd.f32 0.0, %v1107
    %1109 = vmatmul.bf16.gmra.mxu0 %v761
    %v1110 = vpop.f32.mrf.mxu0
    %v1111 = vadd.f32 0.0, %v1110
    %v1112 = vpop.f32.mrf.mxu0
    %v1113 = vadd.f32 0.0, %v1112
    %1114 = vmatmul.bf16.gmra.mxu0 %v762
    %v1115 = vpop.f32.mrf.mxu0
    %v1116 = vadd.f32 0.0, %v1115
    %v1117 = vpop.f32.mrf.mxu0
    %v1118 = vadd.f32 0.0, %v1117
    %1119 = vmatmul.bf16.gmra.mxu0 %v763
    %v1120 = vpop.f32.mrf.mxu0
    %v1121 = vadd.f32 0.0, %v1120
    %v1122 = vpop.f32.mrf.mxu0
    %v1123 = vadd.f32 0.0, %v1122
    %1124 = vmatmul.bf16.gmra.mxu0 %v764
    %v1125 = vpop.f32.mrf.mxu0
    %v1126 = vadd.f32 0.0, %v1125
    %v1127 = vpop.f32.mrf.mxu0
    %v1128 = vadd.f32 0.0, %v1127
    %1129 = vmatmul.bf16.gmra.mxu0 %v765
    %v1130 = vpop.f32.mrf.mxu0
    %v1131 = vadd.f32 0.0, %v1130
    %v1132 = vpop.f32.mrf.mxu0
    %v1133 = vadd.f32 0.0, %v1132
    %1134 = vmatmul.bf16.gmra.mxu0 %v766
    %v1135 = vpop.f32.mrf.mxu0
    %v1136 = vadd.f32 0.0, %v1135
    %v1137 = vpop.f32.mrf.mxu0
    %v1138 = vadd.f32 0.0, %v1137
    %1139 = vmatmul.bf16.gmra.mxu0 %v767
    %v1140 = vpop.f32.mrf.mxu0
    %v1141 = vadd.f32 0.0, %v1140
    %v1142 = vpop.f32.mrf.mxu0
    %v1143 = vadd.f32 0.0, %v1142
    %1144 = vmatmul.bf16.gmra.mxu0 %v768
    %v1145 = vpop.f32.mrf.mxu0
    %v1146 = vadd.f32 0.0, %v1145
    %v1147 = vpop.f32.mrf.mxu0
    %v1148 = vadd.f32 0.0, %v1147
    %1149 = vmatmul.bf16.gmra.mxu0 %v769
    %v1150 = vpop.f32.mrf.mxu0
    %v1151 = vadd.f32 0.0, %v1150
    %v1152 = vpop.f32.mrf.mxu0
    %v1153 = vadd.f32 0.0, %v1152
    %1154 = vmatmul.bf16.gmra.mxu0 %v770
    %v1155 = vpop.f32.mrf.mxu0
    %v1156 = vadd.f32 0.0, %v1155
    %v1157 = vpop.f32.mrf.mxu0
    %v1158 = vadd.f32 0.0, %v1157
    %1159 = vmatmul.bf16.gmra.mxu0 %v771
    %v1160 = vpop.f32.mrf.mxu0
    %v1161 = vadd.f32 0.0, %v1160
    %v1162 = vpop.f32.mrf.mxu0
    %v1163 = vadd.f32 0.0, %v1162
    %1164 = vmatmul.bf16.gmra.mxu0 %v772
    %v1165 = vpop.f32.mrf.mxu0
    %v1166 = vadd.f32 0.0, %v1165
    %v1167 = vpop.f32.mrf.mxu0
    %v1168 = vadd.f32 0.0, %v1167
    %1169 = vmatmul.bf16.gmra.mxu0 %v773
    %v1170 = vpop.f32.mrf.mxu0
    %v1171 = vadd.f32 0.0, %v1170
    %v1172 = vpop.f32.mrf.mxu0
    %v1173 = vadd.f32 0.0, %v1172
    %1174 = vmatmul.bf16.gmra.mxu0 %v774
    %v1175 = vpop.f32.mrf.mxu0
    %v1176 = vadd.f32 0.0, %v1175
    %v1177 = vpop.f32.mrf.mxu0
    %v1178 = vadd.f32 0.0, %v1177
    %1179 = vmatmul.bf16.gmra.mxu0 %v775
    %v1180 = vpop.f32.mrf.mxu0
    %v1181 = vadd.f32 0.0, %v1180
    %v1182 = vpop.f32.mrf.mxu0
    %v1183 = vadd.f32 0.0, %v1182
    %1184 = vmatmul.bf16.gmra.mxu0 %v776
    %v1185 = vpop.f32.mrf.mxu0
    %v1186 = vadd.f32 0.0, %v1185
    %v1187 = vpop.f32.mrf.mxu0
    %v1188 = vadd.f32 0.0, %v1187
    %1189 = vmatmul.bf16.gmra.mxu0 %v777
    %v1190 = vpop.f32.mrf.mxu0
    %v1191 = vadd.f32 0.0, %v1190
    %v1192 = vpop.f32.mrf.mxu0
    %v1193 = vadd.f32 0.0, %v1192
    %1194 = vmatmul.bf16.gmra.mxu0 %v778
    %v1195 = vpop.f32.mrf.mxu0
    %v1196 = vadd.f32 0.0, %v1195
    %v1197 = vpop.f32.mrf.mxu0
    %v1198 = vadd.f32 0.0, %v1197
    %1199 = vmatmul.bf16.gmra.mxu0 %v779
    %v1200 = vpop.f32.mrf.mxu0
    %v1201 = vadd.f32 0.0, %v1200
    %v1202 = vpop.f32.mrf.mxu0
    %v1203 = vadd.f32 0.0, %v1202
    %1204 = vmatmul.bf16.gmra.mxu0 %v780
    %v1205 = vpop.f32.mrf.mxu0
    %v1206 = vadd.f32 0.0, %v1205
    %v1207 = vpop.f32.mrf.mxu0
    %v1208 = vadd.f32 0.0, %v1207
    %1209 = vmatmul.bf16.gmra.mxu0 %v781
    %v1210 = vpop.f32.mrf.mxu0
    %v1211 = vadd.f32 0.0, %v1210
    %v1212 = vpop.f32.mrf.mxu0
    %v1213 = vadd.f32 0.0, %v1212
    %1214 = vmatmul.bf16.gmra.mxu0 %v782
    %v1215 = vpop.f32.mrf.mxu0
    %v1216 = vadd.f32 0.0, %v1215
    %v1217 = vpop.f32.mrf.mxu0
    %v1218 = vadd.f32 0.0, %v1217
    %1219 = vmatmul.bf16.gmra.mxu0 %v783
    %v1220 = vpop.f32.mrf.mxu0
    %v1221 = vadd.f32 0.0, %v1220
    %v1222 = vpop.f32.mrf.mxu0
    %v1223 = vadd.f32 0.0, %v1222
    %1224 = vmatmul.bf16.gmra.mxu0 %v784
    %v1225 = vpop.f32.mrf.mxu0
    %v1226 = vadd.f32 0.0, %v1225
    %v1227 = vpop.f32.mrf.mxu0
    %v1228 = vadd.f32 0.0, %v1227
    %1229 = vmatmul.bf16.gmra.mxu0 %v785
    %v1230 = vpop.f32.mrf.mxu0
    %v1231 = vadd.f32 0.0, %v1230
    %v1232 = vpop.f32.mrf.mxu0
    %v1233 = vadd.f32 0.0, %v1232
    %1234 = vmatmul.bf16.gmra.mxu0 %v786
    %v1235 = vpop.f32.mrf.mxu0
    %v1236 = vadd.f32 0.0, %v1235
    %v1237 = vpop.f32.mrf.mxu0
    %v1238 = vadd.f32 0.0, %v1237
    %1239 = vmatmul.bf16.gmra.mxu0 %v787
    %v1240 = vpop.f32.mrf.mxu0
    %v1241 = vadd.f32 0.0, %v1240
    %v1242 = vpop.f32.mrf.mxu0
    %v1243 = vadd.f32 0.0, %v1242
    %1244 = vmatmul.bf16.gmra.mxu0 %v788
    %v1245 = vpop.f32.mrf.mxu0
    %v1246 = vadd.f32 0.0, %v1245
    %v1247 = vpop.f32.mrf.mxu0
    %v1248 = vadd.f32 0.0, %v1247
    %1249 = vmatmul.bf16.gmra.mxu0 %v789
    %v1250 = vpop.f32.mrf.mxu0
    %v1251 = vadd.f32 0.0, %v1250
    %v1252 = vpop.f32.mrf.mxu0
    %v1253 = vadd.f32 0.0, %v1252
    %1254 = vmatmul.bf16.gmra.mxu0 %v790
    %v1255 = vpop.f32.mrf.mxu0
    %v1256 = vadd.f32 0.0, %v1255
    %v1257 = vpop.f32.mrf.mxu0
    %v1258 = vadd.f32 0.0, %v1257
    %1259 = vmatmul.bf16.gmra.mxu0 %v791
    %v1260 = vpop.f32.mrf.mxu0
    %v1261 = vadd.f32 0.0, %v1260
    %v1262 = vpop.f32.mrf.mxu0
    %v1263 = vadd.f32 0.0, %v1262
    %1264 = vmatmul.bf16.gmra.mxu0 %v792
    %v1265 = vpop.f32.mrf.mxu0
    %v1266 = vadd.f32 0.0, %v1265
    %v1267 = vpop.f32.mrf.mxu0
    %v1268 = vadd.f32 0.0, %v1267
    %1269 = vmatmul.bf16.gmra.mxu0 %v793
    %v1270 = vpop.f32.mrf.mxu0
    %v1271 = vadd.f32 0.0, %v1270
    %v1272 = vpop.f32.mrf.mxu0
    %v1273 = vadd.f32 0.0, %v1272
    %1274 = vmatmul.bf16.gmra.mxu0 %v794
    %v1275 = vpop.f32.mrf.mxu0
    %v1276 = vadd.f32 0.0, %v1275
    %v1277 = vpop.f32.mrf.mxu0
    %v1278 = vadd.f32 0.0, %v1277
    %1279 = vmatmul.bf16.gmra.mxu0 %v795
    %v1280 = vpop.f32.mrf.mxu0
    %v1281 = vadd.f32 0.0, %v1280
    %v1282 = vpop.f32.mrf.mxu0
    %v1283 = vadd.f32 0.0, %v1282
    %1284 = vmatmul.bf16.gmra.mxu0 %v796
    %v1285 = vpop.f32.mrf.mxu0
    %v1286 = vadd.f32 0.0, %v1285
    %v1287 = vpop.f32.mrf.mxu0
    %v1288 = vadd.f32 0.0, %v1287
    %1289 = vmatmul.bf16.gmra.mxu0 %v797
    %v1290 = vpop.f32.mrf.mxu0
    %v1291 = vadd.f32 0.0, %v1290
    %v1292 = vpop.f32.mrf.mxu0
    %v1293 = vadd.f32 0.0, %v1292
    %1294 = vmatmul.bf16.gmra.mxu0 %v798
    %v1295 = vpop.f32.mrf.mxu0
    %v1296 = vadd.f32 0.0, %v1295
    %v1297 = vpop.f32.mrf.mxu0
    %v1298 = vadd.f32 0.0, %v1297
    %1299 = vmatmul.bf16.gmra.mxu0 %v799
    %v1300 = vpop.f32.mrf.mxu0
    %v1301 = vadd.f32 0.0, %v1300
    %v1302 = vpop.f32.mrf.mxu0
    %v1303 = vadd.f32 0.0, %v1302
    %1304 = vmatmul.bf16.gmra.mxu0 %v800
    %v1305 = vpop.f32.mrf.mxu0
    %v1306 = vadd.f32 0.0, %v1305
    %v1307 = vpop.f32.mrf.mxu0
    %v1308 = vadd.f32 0.0, %v1307
    %1309 = vmatmul.bf16.gmra.mxu0 %v801
    %v1310 = vpop.f32.mrf.mxu0
    %v1311 = vadd.f32 0.0, %v1310
    %v1312 = vpop.f32.mrf.mxu0
    %v1313 = vadd.f32 0.0, %v1312
    %1314 = vmatmul.bf16.gmra.mxu0 %v802
    %v1315 = vpop.f32.mrf.mxu0
    %v1316 = vadd.f32 0.0, %v1315
    %v1317 = vpop.f32.mrf.mxu0
    %v1318 = vadd.f32 0.0, %v1317
    %1319 = vmatmul.bf16.gmra.mxu0 %v803
    %v1320 = vpop.f32.mrf.mxu0
    %v1321 = vadd.f32 0.0, %v1320
    %v1322 = vpop.f32.mrf.mxu0
    %v1323 = vadd.f32 0.0, %v1322
    %1324 = vmatmul.bf16.gmra.mxu0 %v804
    %v1325 = vpop.f32.mrf.mxu0
    %v1326 = vadd.f32 0.0, %v1325
    %v1327 = vpop.f32.mrf.mxu0
    %v1328 = vadd.f32 0.0, %v1327
    %1329 = vmatmul.bf16.gmra.mxu0 %v805
    %v1330 = vpop.f32.mrf.mxu0
    %v1331 = vadd.f32 0.0, %v1330
    %v1332 = vpop.f32.mrf.mxu0
    %v1333 = vadd.f32 0.0, %v1332
    %1334 = vmatmul.bf16.gmra.mxu0 %v806
    %v1335 = vpop.f32.mrf.mxu0
    %v1336 = vadd.f32 0.0, %v1335
    %v1337 = vpop.f32.mrf.mxu0
    %v1338 = vadd.f32 0.0, %v1337
    %1339 = vmatmul.bf16.gmra.mxu0 %v807
    %v1340 = vpop.f32.mrf.mxu0
    %v1341 = vadd.f32 0.0, %v1340
    %v1342 = vpop.f32.mrf.mxu0
    %v1343 = vadd.f32 0.0, %v1342
    %1344 = vmatmul.bf16.gmra.mxu0 %v808
    %v1345 = vpop.f32.mrf.mxu0
    %v1346 = vadd.f32 0.0, %v1345
    %v1347 = vpop.f32.mrf.mxu0
    %v1348 = vadd.f32 0.0, %v1347
    %1349 = vmatmul.bf16.gmra.mxu0 %v809
    %v1350 = vpop.f32.mrf.mxu0
    %v1351 = vadd.f32 0.0, %v1350
    %v1352 = vpop.f32.mrf.mxu0
    %v1353 = vadd.f32 0.0, %v1352
    %1354 = vmatmul.bf16.gmra.mxu0 %v810
    %v1355 = vpop.f32.mrf.mxu0
    %v1356 = vadd.f32 0.0, %v1355
    %v1357 = vpop.f32.mrf.mxu0
    %v1358 = vadd.f32 0.0, %v1357
    %1359 = vmatmul.bf16.gmra.mxu0 %v811
    %v1360 = vpop.f32.mrf.mxu0
    %v1361 = vadd.f32 0.0, %v1360
    %v1362 = vpop.f32.mrf.mxu0
    %v1363 = vadd.f32 0.0, %v1362
    %1364 = vmatmul.bf16.gmra.mxu0 %v812
    %v1365 = vpop.f32.mrf.mxu0
    %v1366 = vadd.f32 0.0, %v1365
    %v1367 = vpop.f32.mrf.mxu0
    %v1368 = vadd.f32 0.0, %v1367
    %1369 = vmatmul.bf16.gmra.mxu0 %v813
    %v1370 = vpop.f32.mrf.mxu0
    %v1371 = vadd.f32 0.0, %v1370
    %v1372 = vpop.f32.mrf.mxu0
    %v1373 = vadd.f32 0.0, %v1372
    %1374 = vmatmul.bf16.gmra.mxu0 %v814
    %v1375 = vpop.f32.mrf.mxu0
    %v1376 = vadd.f32 0.0, %v1375
    %v1377 = vpop.f32.mrf.mxu0
    %v1378 = vadd.f32 0.0, %v1377
    %1379 = vmatmul.bf16.gmra.mxu0 %v815
    %v1380 = vpop.f32.mrf.mxu0
    %v1381 = vadd.f32 0.0, %v1380
    %v1382 = vpop.f32.mrf.mxu0
    %v1383 = vadd.f32 0.0, %v1382
    %1384 = vmatmul.bf16.gmra.mxu0 %v816
    %v1385 = vpop.f32.mrf.mxu0
    %v1386 = vadd.f32 0.0, %v1385
    %v1387 = vpop.f32.mrf.mxu0
    %v1388 = vadd.f32 0.0, %v1387
    %1389 = vmatmul.bf16.gmra.mxu0 %v817
    %v1390 = vpop.f32.mrf.mxu0
    %v1391 = vadd.f32 0.0, %v1390
    %v1392 = vpop.f32.mrf.mxu0
    %v1393 = vadd.f32 0.0, %v1392
    %1394 = vmatmul.bf16.gmra.mxu0 %v818
    %v1395 = vpop.f32.mrf.mxu0
    %v1396 = vadd.f32 0.0, %v1395
    %v1397 = vpop.f32.mrf.mxu0
    %v1398 = vadd.f32 0.0, %v1397
    %1399 = vmatmul.bf16.gmra.mxu0 %v819
    %v1400 = vpop.f32.mrf.mxu0
    %v1401 = vadd.f32 0.0, %v1400
    %v1402 = vpop.f32.mrf.mxu0
    %v1403 = vadd.f32 0.0, %v1402
    %1404 = vmatmul.bf16.gmra.mxu0 %v820
    %v1405 = vpop.f32.mrf.mxu0
    %v1406 = vadd.f32 0.0, %v1405
    %v1407 = vpop.f32.mrf.mxu0
    %v1408 = vadd.f32 0.0, %v1407
    %1409 = vmatmul.bf16.gmra.mxu0 %v821
    %v1410 = vpop.f32.mrf.mxu0
    %v1411 = vadd.f32 0.0, %v1410
    %v1412 = vpop.f32.mrf.mxu0
    %v1413 = vadd.f32 0.0, %v1412
    %1414 = vmatmul.bf16.gmra.mxu0 %v822
    %v1415 = vpop.f32.mrf.mxu0
    %v1416 = vadd.f32 0.0, %v1415
    %v1417 = vpop.f32.mrf.mxu0
    %v1418 = vadd.f32 0.0, %v1417
    %1419 = vmatmul.bf16.gmra.mxu0 %v823
    %v1420 = vpop.f32.mrf.mxu0
    %v1421 = vadd.f32 0.0, %v1420
    %v1422 = vpop.f32.mrf.mxu0
    %v1423 = vadd.f32 0.0, %v1422
    %1424 = vmatmul.bf16.gmra.mxu0 %v824
    %v1425 = vpop.f32.mrf.mxu0
    %v1426 = vadd.f32 0.0, %v1425
    %v1427 = vpop.f32.mrf.mxu0
    %v1428 = vadd.f32 0.0, %v1427
    %1429 = vmatmul.bf16.gmra.mxu0 %v825
    %v1430 = vpop.f32.mrf.mxu0
    %v1431 = vadd.f32 0.0, %v1430
    %v1432 = vpop.f32.mrf.mxu0
    %v1433 = vadd.f32 0.0, %v1432
    %1434 = vmatmul.bf16.gmra.mxu0 %v826
    %v1435 = vpop.f32.mrf.mxu0
    %v1436 = vadd.f32 0.0, %v1435
    %v1437 = vpop.f32.mrf.mxu0
    %v1438 = vadd.f32 0.0, %v1437
    %1439 = vmatmul.bf16.gmra.mxu0 %v827
    %v1440 = vpop.f32.mrf.mxu0
    %v1441 = vadd.f32 0.0, %v1440
    %v1442 = vpop.f32.mrf.mxu0
    %v1443 = vadd.f32 0.0, %v1442
    %1444 = vmatmul.bf16.gmra.mxu0 %v828
    %v1445 = vpop.f32.mrf.mxu0
    %v1446 = vadd.f32 0.0, %v1445
    %v1447 = vpop.f32.mrf.mxu0
    %v1448 = vadd.f32 0.0, %v1447
    %1449 = vmatmul.bf16.gmra.mxu0 %v829
    %v1450 = vpop.f32.mrf.mxu0
    %v1451 = vadd.f32 0.0, %v1450
    %v1452 = vpop.f32.mrf.mxu0
    %v1453 = vadd.f32 0.0, %v1452
    %1454 = vmatmul.bf16.gmra.mxu0 %v830
    %v1455 = vpop.f32.mrf.mxu0
    %v1456 = vadd.f32 0.0, %v1455
    %v1457 = vpop.f32.mrf.mxu0
    %v1458 = vadd.f32 0.0, %v1457
    %1459 = vmatmul.bf16.gmra.mxu0 %v831
    %v1460 = vpop.f32.mrf.mxu0
    %v1461 = vadd.f32 0.0, %v1460
    %v1462 = vpop.f32.mrf.mxu0
    %v1463 = vadd.f32 0.0, %v1462
    %1464 = vmatmul.bf16.gmra.mxu0 %v832
    %v1465 = vpop.f32.mrf.mxu0
    %v1466 = vadd.f32 0.0, %v1465
    %v1467 = vpop.f32.mrf.mxu0
    %v1468 = vadd.f32 0.0, %v1467
    %1469 = vmatmul.bf16.gmra.mxu0 %v833
    %v1470 = vpop.f32.mrf.mxu0
    %v1471 = vadd.f32 0.0, %v1470
    %v1472 = vpop.f32.mrf.mxu0
    %v1473 = vadd.f32 0.0, %v1472
    %1474 = vmatmul.bf16.gmra.mxu0 %v834
    %v1475 = vpop.f32.mrf.mxu0
    %v1476 = vadd.f32 0.0, %v1475
    %v1477 = vpop.f32.mrf.mxu0
    %v1478 = vadd.f32 0.0, %v1477
    %1479 = vmatmul.bf16.gmra.mxu0 %v835
    %v1480 = vpop.f32.mrf.mxu0
    %v1481 = vadd.f32 0.0, %v1480
    %v1482 = vpop.f32.mrf.mxu0
    %v1483 = vadd.f32 0.0, %v1482
    %1484 = vmatmul.bf16.gmra.mxu0 %v836
    %v1485 = vpop.f32.mrf.mxu0
    %v1486 = vadd.f32 0.0, %v1485
    %v1487 = vpop.f32.mrf.mxu0
    %v1488 = vadd.f32 0.0, %v1487
    %1489 = vmatmul.bf16.gmra.mxu0 %v837
    %v1490 = vpop.f32.mrf.mxu0
    %v1491 = vadd.f32 0.0, %v1490
    %v1492 = vpop.f32.mrf.mxu0
    %v1493 = vadd.f32 0.0, %v1492
    %1494 = vdwg.mxu0
    %v1495 = vmax.f32 %v996, %v1121
    %v1496 = vmax.f32 %v998, %v1123
    %v1497 = vmax.f32 %v1001, %v1126
    %v1498 = vmax.f32 %v1003, %v1128
    %v1499 = vmax.f32 %v1006, %v1131
    %v1500 = vmax.f32 %v1008, %v1133
    %v1501 = vmax.f32 %v1011, %v1136
    %v1502 = vmax.f32 %v1013, %v1138
    %v1503 = vmax.f32 %v1016, %v1141
    %v1504 = vmax.f32 %v1018, %v1143
    %v1505 = vmax.f32 %v1021, %v1146
    %v1506 = vmax.f32 %v1023, %v1148
    %v1507 = vmax.f32 %v1026, %v1151
    %v1508 = vmax.f32 %v1028, %v1153
    %v1509 = vmax.f32 %v1031, %v1156
    %v1510 = vmax.f32 %v1033, %v1158
    %v1511 = vmax.f32 %v1036, %v1161
    %v1512 = vmax.f32 %v1038, %v1163
    %v1513 = vmax.f32 %v1041, %v1166
    %v1514 = vmax.f32 %v1043, %v1168
    %v1515 = vmax.f32 %v1046, %v1171
    %v1516 = vmax.f32 %v1048, %v1173
    %v1517 = vmax.f32 %v1051, %v1176
    %v1518 = vmax.f32 %v1053, %v1178
    %v1519 = vmax.f32 %v1056, %v1181
    %v1520 = vmax.f32 %v1058, %v1183
    %v1521 = vmax.f32 %v1061, %v1186
    %v1522 = vmax.f32 %v1063, %v1188
    %v1523 = vmax.f32 %v1066, %v1191
    %v1524 = vmax.f32 %v1068, %v1193
    %v1525 = vmax.f32 %v1071, %v1196
    %v1526 = vmax.f32 %v1073, %v1198
    %v1527 = vmax.f32 %v1076, %v1201
    %v1528 = vmax.f32 %v1078, %v1203
    %v1529 = vmax.f32 %v1081, %v1206
    %v1530 = vmax.f32 %v1083, %v1208
    %v1531 = vmax.f32 %v1086, %v1211
    %v1532 = vmax.f32 %v1088, %v1213
    %v1533 = vmax.f32 %v1091, %v1216
    %v1534 = vmax.f32 %v1093, %v1218
    %v1535 = vmax.f32 %v1096, %v1221
    %v1536 = vmax.f32 %v1098, %v1223
    %v1537 = vmax.f32 %v1101, %v1226
    %v1538 = vmax.f32 %v1103, %v1228
    %v1539 = vmax.f32 %v1106, %v1231
    %v1540 = vmax.f32 %v1108, %v1233
    %v1541 = vmax.f32 %v1111, %v1236
    %v1542 = vmax.f32 %v1113, %v1238
    %v1543 = vmax.f32 %v1116, %v1241
    %v1544 = vmax.f32 %v1118, %v1243
    %v1545 = vmax.f32 %v1246, %v1371
    %v1546 = vmax.f32 %v1248, %v1373
    %v1547 = vmax.f32 %v1251, %v1376
    %v1548 = vmax.f32 %v1253, %v1378
    %v1549 = vmax.f32 %v1256, %v1381
    %v1550 = vmax.f32 %v1258, %v1383
    %v1551 = vmax.f32 %v1261, %v1386
    %v1552 = vmax.f32 %v1263, %v1388
    %v1553 = vmax.f32 %v1266, %v1391
    %v1554 = vmax.f32 %v1268, %v1393
    %v1555 = vmax.f32 %v1271, %v1396
    %v1556 = vmax.f32 %v1273, %v1398
    %v1557 = vmax.f32 %v1276, %v1401
    %v1558 = vmax.f32 %v1278, %v1403
    %v1559 = vmax.f32 %v1281, %v1406
    %v1560 = vmax.f32 %v1283, %v1408
    %v1561 = vmax.f32 %v1286, %v1411
    %v1562 = vmax.f32 %v1288, %v1413
    %v1563 = vmax.f32 %v1291, %v1416
    %v1564 = vmax.f32 %v1293, %v1418
    %v1565 = vmax.f32 %v1296, %v1421
    %v1566 = vmax.f32 %v1298, %v1423
    %v1567 = vmax.f32 %v1301, %v1426
    %v1568 = vmax.f32 %v1303, %v1428
    %v1569 = vmax.f32 %v1306, %v1431
    %v1570 = vmax.f32 %v1308, %v1433
    %v1571 = vmax.f32 %v1311, %v1436
    %v1572 = vmax.f32 %v1313, %v1438
    %v1573 = vmax.f32 %v1316, %v1441
    %v1574 = vmax.f32 %v1318, %v1443
    %v1575 = vmax.f32 %v1321, %v1446
    %v1576 = vmax.f32 %v1323, %v1448
    %v1577 = vmax.f32 %v1326, %v1451
    %v1578 = vmax.f32 %v1328, %v1453
    %v1579 = vmax.f32 %v1331, %v1456
    %v1580 = vmax.f32 %v1333, %v1458
    %v1581 = vmax.f32 %v1336, %v1461
    %v1582 = vmax.f32 %v1338, %v1463
    %v1583 = vmax.f32 %v1341, %v1466
    %v1584 = vmax.f32 %v1343, %v1468
    %v1585 = vmax.f32 %v1346, %v1471
    %v1586 = vmax.f32 %v1348, %v1473
    %v1587 = vmax.f32 %v1351, %v1476
    %v1588 = vmax.f32 %v1353, %v1478
    %v1589 = vmax.f32 %v1356, %v1481
    %v1590 = vmax.f32 %v1358, %v1483
    %v1591 = vmax.f32 %v1361, %v1486
    %v1592 = vmax.f32 %v1363, %v1488
    %v1593 = vmax.f32 %v1366, %v1491
    %v1594 = vmax.f32 %v1368, %v1493
    %v1595 = vmax.f32 %v1495, %v1545
    %v1596 = vmax.f32 %v1496, %v1546
    %v1597 = vmax.f32 %v1497, %v1547
    %v1598 = vmax.f32 %v1498, %v1548
    %v1599 = vmax.f32 %v1499, %v1549
    %v1600 = vmax.f32 %v1500, %v1550
    %v1601 = vmax.f32 %v1501, %v1551
    %v1602 = vmax.f32 %v1502, %v1552
    %v1603 = vmax.f32 %v1503, %v1553
    %v1604 = vmax.f32 %v1504, %v1554
    %v1605 = vmax.f32 %v1505, %v1555
    %v1606 = vmax.f32 %v1506, %v1556
    %v1607 = vmax.f32 %v1507, %v1557
    %v1608 = vmax.f32 %v1508, %v1558
    %v1609 = vmax.f32 %v1509, %v1559
    %v1610 = vmax.f32 %v1510, %v1560
    %v1611 = vmax.f32 %v1511, %v1561
    %v1612 = vmax.f32 %v1512, %v1562
    %v1613 = vmax.f32 %v1513, %v1563
    %v1614 = vmax.f32 %v1514, %v1564
    %v1615 = vmax.f32 %v1515, %v1565
    %v1616 = vmax.f32 %v1516, %v1566
    %v1617 = vmax.f32 %v1517, %v1567
    %v1618 = vmax.f32 %v1518, %v1568
    %v1619 = vmax.f32 %v1519, %v1569
    %v1620 = vmax.f32 %v1520, %v1570
    %v1621 = vmax.f32 %v1521, %v1571
    %v1622 = vmax.f32 %v1522, %v1572
    %v1623 = vmax.f32 %v1523, %v1573
    %v1624 = vmax.f32 %v1524, %v1574
    %v1625 = vmax.f32 %v1525, %v1575
    %v1626 = vmax.f32 %v1526, %v1576
    %v1627 = vmax.f32 %v1527, %v1577
    %v1628 = vmax.f32 %v1528, %v1578
    %v1629 = vmax.f32 %v1529, %v1579
    %v1630 = vmax.f32 %v1530, %v1580
    %v1631 = vmax.f32 %v1531, %v1581
    %v1632 = vmax.f32 %v1532, %v1582
    %v1633 = vmax.f32 %v1533, %v1583
    %v1634 = vmax.f32 %v1534, %v1584
    %v1635 = vmax.f32 %v1535, %v1585
    %v1636 = vmax.f32 %v1536, %v1586
    %v1637 = vmax.f32 %v1537, %v1587
    %v1638 = vmax.f32 %v1538, %v1588
    %v1639 = vmax.f32 %v1539, %v1589
    %v1640 = vmax.f32 %v1540, %v1590
    %v1641 = vmax.f32 %v1541, %v1591
    %v1642 = vmax.f32 %v1542, %v1592
    %v1643 = vmax.f32 %v1543, %v1593
    %v1644 = vmax.f32 %v1544, %v1594
    %v1645 = vld [vmem:[%s3] sm:$0xff]
    %v1646 = vld [vmem:[%s3 + $0x8] sm:$0xff]
    %v1647 = vld [vmem:[%s3 + $0x10] sm:$0xff]
    %v1648 = vld [vmem:[%s3 + $0x18] sm:$0xff]
    %v1649 = vld [vmem:[%s3 + $0x20] sm:$0xff]
    %v1650 = vld [vmem:[%s3 + $0x28] sm:$0xff]
    %v1651 = vld [vmem:[%s3 + $0x30] sm:$0xff]
    %v1652 = vld [vmem:[%s3 + $0x38] sm:$0xff]
    %v1653 = vld [vmem:[%s3 + $0x40] sm:$0xff]
    %v1654 = vld [vmem:[%s3 + $0x48] sm:$0xff]
    %v1655 = vld [vmem:[%s3 + $0x50] sm:$0xff]
    %v1656 = vld [vmem:[%s3 + $0x58] sm:$0xff]
    %v1657 = vld [vmem:[%s3 + $0x60] sm:$0xff]
    %v1658 = vld [vmem:[%s3 + $0x68] sm:$0xff]
    %v1659 = vld [vmem:[%s3 + $0x70] sm:$0xff]
    %v1660 = vld [vmem:[%s3 + $0x78] sm:$0xff]
    %v1661 = vld [vmem:[%s3 + $0x80] sm:$0xff]
    %v1662 = vld [vmem:[%s3 + $0x88] sm:$0xff]
    %v1663 = vld [vmem:[%s3 + $0x90] sm:$0xff]
    %v1664 = vld [vmem:[%s3 + $0x98] sm:$0xff]
    %v1665 = vld [vmem:[%s3 + $0xa0] sm:$0xff]
    %v1666 = vld [vmem:[%s3 + $0xa8] sm:$0xff]
    %v1667 = vld [vmem:[%s3 + $0xb0] sm:$0xff]
    %v1668 = vld [vmem:[%s3 + $0xb8] sm:$0xff]
    %v1669 = vld [vmem:[%s3 + $0xc0] sm:$0xff]
    %v1670 = vld [vmem:[%s3 + $0xc8] sm:$0xff]
    %v1671 = vld [vmem:[%s3 + $0xd0] sm:$0xff]
    %v1672 = vld [vmem:[%s3 + $0xd8] sm:$0xff]
    %v1673 = vld [vmem:[%s3 + $0xe0] sm:$0xff]
    %v1674 = vld [vmem:[%s3 + $0xe8] sm:$0xff]
    %v1675 = vld [vmem:[%s3 + $0xf0] sm:$0xff]
    %v1676 = vld [vmem:[%s3 + $0xf8] sm:$0xff]
    %v1677 = vld [vmem:[%s3 + $0x100] sm:$0xff]
    %v1678 = vld [vmem:[%s3 + $0x108] sm:$0xff]
    %v1679 = vld [vmem:[%s3 + $0x110] sm:$0xff]
    %v1680 = vld [vmem:[%s3 + $0x118] sm:$0xff]
    %v1681 = vld [vmem:[%s3 + $0x120] sm:$0xff]
    %v1682 = vld [vmem:[%s3 + $0x128] sm:$0xff]
    %v1683 = vld [vmem:[%s3 + $0x130] sm:$0xff]
    %v1684 = vld [vmem:[%s3 + $0x138] sm:$0xff]
    %v1685 = vld [vmem:[%s3 + $0x140] sm:$0xff]
    %v1686 = vld [vmem:[%s3 + $0x148] sm:$0xff]
    %v1687 = vld [vmem:[%s3 + $0x150] sm:$0xff]
    %v1688 = vld [vmem:[%s3 + $0x158] sm:$0xff]
    %v1689 = vld [vmem:[%s3 + $0x160] sm:$0xff]
    %v1690 = vld [vmem:[%s3 + $0x168] sm:$0xff]
    %v1691 = vld [vmem:[%s3 + $0x170] sm:$0xff]
    %v1692 = vld [vmem:[%s3 + $0x178] sm:$0xff]
    %v1693 = vld [vmem:[%s3 + $0x180] sm:$0xff]
    %v1694 = vld [vmem:[%s3 + $0x188] sm:$0xff]
    %1696 = vset.pattern.permute.xlu0 0
    %1697 = vperm.xlu0 %1696, %v1645
    %v1698 = vpop.permute.xlu0 %1697
    %1701 = vset.pattern.permute.xlu0 0
    %1702 = vperm.xlu0 %1701, %v1646
    %v1703 = vpop.permute.xlu0 %1702
    %1706 = vset.pattern.permute.xlu0 0
    %1707 = vperm.xlu0 %1706, %v1647
    %v1708 = vpop.permute.xlu0 %1707
    %1711 = vset.pattern.permute.xlu0 0
    %1712 = vperm.xlu0 %1711, %v1648
    %v1713 = vpop.permute.xlu0 %1712
    %1716 = vset.pattern.permute.xlu0 0
    %1717 = vperm.xlu0 %1716, %v1649
    %v1718 = vpop.permute.xlu0 %1717
    %1721 = vset.pattern.permute.xlu0 0
    %1722 = vperm.xlu0 %1721, %v1650
    %v1723 = vpop.permute.xlu0 %1722
    %1726 = vset.pattern.permute.xlu0 0
    %1727 = vperm.xlu0 %1726, %v1651
    %v1728 = vpop.permute.xlu0 %1727
    %1731 = vset.pattern.permute.xlu0 0
    %1732 = vperm.xlu0 %1731, %v1652
    %v1733 = vpop.permute.xlu0 %1732
    %1736 = vset.pattern.permute.xlu0 0
    %1737 = vperm.xlu0 %1736, %v1653
    %v1738 = vpop.permute.xlu0 %1737
    %1741 = vset.pattern.permute.xlu0 0
    %1742 = vperm.xlu0 %1741, %v1654
    %v1743 = vpop.permute.xlu0 %1742
    %1746 = vset.pattern.permute.xlu0 0
    %1747 = vperm.xlu0 %1746, %v1655
    %v1748 = vpop.permute.xlu0 %1747
    %1751 = vset.pattern.permute.xlu0 0
    %1752 = vperm.xlu0 %1751, %v1656
    %v1753 = vpop.permute.xlu0 %1752
    %1756 = vset.pattern.permute.xlu0 0
    %1757 = vperm.xlu0 %1756, %v1657
    %v1758 = vpop.permute.xlu0 %1757
    %1761 = vset.pattern.permute.xlu0 0
    %1762 = vperm.xlu0 %1761, %v1658
    %v1763 = vpop.permute.xlu0 %1762
    %1766 = vset.pattern.permute.xlu0 0
    %1767 = vperm.xlu0 %1766, %v1659
    %v1768 = vpop.permute.xlu0 %1767
    %1771 = vset.pattern.permute.xlu0 0
    %1772 = vperm.xlu0 %1771, %v1660
    %v1773 = vpop.permute.xlu0 %1772
    %1776 = vset.pattern.permute.xlu0 0
    %1777 = vperm.xlu0 %1776, %v1661
    %v1778 = vpop.permute.xlu0 %1777
    %1781 = vset.pattern.permute.xlu0 0
    %1782 = vperm.xlu0 %1781, %v1662
    %v1783 = vpop.permute.xlu0 %1782
    %1786 = vset.pattern.permute.xlu0 0
    %1787 = vperm.xlu0 %1786, %v1663
    %v1788 = vpop.permute.xlu0 %1787
    %1791 = vset.pattern.permute.xlu0 0
    %1792 = vperm.xlu0 %1791, %v1664
    %v1793 = vpop.permute.xlu0 %1792
    %1796 = vset.pattern.permute.xlu0 0
    %1797 = vperm.xlu0 %1796, %v1665
    %v1798 = vpop.permute.xlu0 %1797
    %1801 = vset.pattern.permute.xlu0 0
    %1802 = vperm.xlu0 %1801, %v1666
    %v1803 = vpop.permute.xlu0 %1802
    %1806 = vset.pattern.permute.xlu0 0
    %1807 = vperm.xlu0 %1806, %v1667
    %v1808 = vpop.permute.xlu0 %1807
    %1811 = vset.pattern.permute.xlu0 0
    %1812 = vperm.xlu0 %1811, %v1668
    %v1813 = vpop.permute.xlu0 %1812
    %1816 = vset.pattern.permute.xlu0 0
    %1817 = vperm.xlu0 %1816, %v1669
    %v1818 = vpop.permute.xlu0 %1817
    %1821 = vset.pattern.permute.xlu0 0
    %1822 = vperm.xlu0 %1821, %v1670
    %v1823 = vpop.permute.xlu0 %1822
    %1826 = vset.pattern.permute.xlu0 0
    %1827 = vperm.xlu0 %1826, %v1671
    %v1828 = vpop.permute.xlu0 %1827
    %1831 = vset.pattern.permute.xlu0 0
    %1832 = vperm.xlu0 %1831, %v1672
    %v1833 = vpop.permute.xlu0 %1832
    %1836 = vset.pattern.permute.xlu0 0
    %1837 = vperm.xlu0 %1836, %v1673
    %v1838 = vpop.permute.xlu0 %1837
    %1841 = vset.pattern.permute.xlu0 0
    %1842 = vperm.xlu0 %1841, %v1674
    %v1843 = vpop.permute.xlu0 %1842
    %1846 = vset.pattern.permute.xlu0 0
    %1847 = vperm.xlu0 %1846, %v1675
    %v1848 = vpop.permute.xlu0 %1847
    %1851 = vset.pattern.permute.xlu0 0
    %1852 = vperm.xlu0 %1851, %v1676
    %v1853 = vpop.permute.xlu0 %1852
    %1856 = vset.pattern.permute.xlu0 0
    %1857 = vperm.xlu0 %1856, %v1677
    %v1858 = vpop.permute.xlu0 %1857
    %1861 = vset.pattern.permute.xlu0 0
    %1862 = vperm.xlu0 %1861, %v1678
    %v1863 = vpop.permute.xlu0 %1862
    %1866 = vset.pattern.permute.xlu0 0
    %1867 = vperm.xlu0 %1866, %v1679
    %v1868 = vpop.permute.xlu0 %1867
    %1871 = vset.pattern.permute.xlu0 0
    %1872 = vperm.xlu0 %1871, %v1680
    %v1873 = vpop.permute.xlu0 %1872
    %1876 = vset.pattern.permute.xlu0 0
    %1877 = vperm.xlu0 %1876, %v1681
    %v1878 = vpop.permute.xlu0 %1877
    %1881 = vset.pattern.permute.xlu0 0
    %1882 = vperm.xlu0 %1881, %v1682
    %v1883 = vpop.permute.xlu0 %1882
    %1886 = vset.pattern.permute.xlu0 0
    %1887 = vperm.xlu0 %1886, %v1683
    %v1888 = vpop.permute.xlu0 %1887
    %1891 = vset.pattern.permute.xlu0 0
    %1892 = vperm.xlu0 %1891, %v1684
    %v1893 = vpop.permute.xlu0 %1892
    %1896 = vset.pattern.permute.xlu0 0
    %1897 = vperm.xlu0 %1896, %v1685
    %v1898 = vpop.permute.xlu0 %1897
    %1901 = vset.pattern.permute.xlu0 0
    %1902 = vperm.xlu0 %1901, %v1686
    %v1903 = vpop.permute.xlu0 %1902
    %1906 = vset.pattern.permute.xlu0 0
    %1907 = vperm.xlu0 %1906, %v1687
    %v1908 = vpop.permute.xlu0 %1907
    %1911 = vset.pattern.permute.xlu0 0
    %1912 = vperm.xlu0 %1911, %v1688
    %v1913 = vpop.permute.xlu0 %1912
    %1916 = vset.pattern.permute.xlu0 0
    %1917 = vperm.xlu0 %1916, %v1689
    %v1918 = vpop.permute.xlu0 %1917
    %1921 = vset.pattern.permute.xlu0 0
    %1922 = vperm.xlu0 %1921, %v1690
    %v1923 = vpop.permute.xlu0 %1922
    %1926 = vset.pattern.permute.xlu0 0
    %1927 = vperm.xlu0 %1926, %v1691
    %v1928 = vpop.permute.xlu0 %1927
    %1931 = vset.pattern.permute.xlu0 0
    %1932 = vperm.xlu0 %1931, %v1692
    %v1933 = vpop.permute.xlu0 %1932
    %1936 = vset.pattern.permute.xlu0 0
    %1937 = vperm.xlu0 %1936, %v1693
    %v1938 = vpop.permute.xlu0 %1937
    %1941 = vset.pattern.permute.xlu0 0
    %1942 = vperm.xlu0 %1941, %v1694
    %v1943 = vpop.permute.xlu0 %1942
    %v1945 = vadd.f32 %v1595, %v1698
    %v1946 = vadd.f32 %v1596, %v1703
    %v1947 = vadd.f32 %v1597, %v1708
    %v1948 = vadd.f32 %v1598, %v1713
    %v1949 = vadd.f32 %v1599, %v1718
    %v1950 = vadd.f32 %v1600, %v1723
    %v1951 = vadd.f32 %v1601, %v1728
    %v1952 = vadd.f32 %v1602, %v1733
    %v1953 = vadd.f32 %v1603, %v1738
    %v1954 = vadd.f32 %v1604, %v1743
    %v1955 = vadd.f32 %v1605, %v1748
    %v1956 = vadd.f32 %v1606, %v1753
    %v1957 = vadd.f32 %v1607, %v1758
    %v1958 = vadd.f32 %v1608, %v1763
    %v1959 = vadd.f32 %v1609, %v1768
    %v1960 = vadd.f32 %v1610, %v1773
    %v1961 = vadd.f32 %v1611, %v1778
    %v1962 = vadd.f32 %v1612, %v1783
    %v1963 = vadd.f32 %v1613, %v1788
    %v1964 = vadd.f32 %v1614, %v1793
    %v1965 = vadd.f32 %v1615, %v1798
    %v1966 = vadd.f32 %v1616, %v1803
    %v1967 = vadd.f32 %v1617, %v1808
    %v1968 = vadd.f32 %v1618, %v1813
    %v1969 = vadd.f32 %v1619, %v1818
    %v1970 = vadd.f32 %v1620, %v1823
    %v1971 = vadd.f32 %v1621, %v1828
    %v1972 = vadd.f32 %v1622, %v1833
    %v1973 = vadd.f32 %v1623, %v1838
    %v1974 = vadd.f32 %v1624, %v1843
    %v1975 = vadd.f32 %v1625, %v1848
    %v1976 = vadd.f32 %v1626, %v1853
    %v1977 = vadd.f32 %v1627, %v1858
    %v1978 = vadd.f32 %v1628, %v1863
    %v1979 = vadd.f32 %v1629, %v1868
    %v1980 = vadd.f32 %v1630, %v1873
    %v1981 = vadd.f32 %v1631, %v1878
    %v1982 = vadd.f32 %v1632, %v1883
    %v1983 = vadd.f32 %v1633, %v1888
    %v1984 = vadd.f32 %v1634, %v1893
    %v1985 = vadd.f32 %v1635, %v1898
    %v1986 = vadd.f32 %v1636, %v1903
    %v1987 = vadd.f32 %v1637, %v1908
    %v1988 = vadd.f32 %v1638, %v1913
    %v1989 = vadd.f32 %v1639, %v1918
    %v1990 = vadd.f32 %v1640, %v1923
    %v1991 = vadd.f32 %v1641, %v1928
    %v1992 = vadd.f32 %v1642, %v1933
    %v1993 = vadd.f32 %v1643, %v1938
    %v1994 = vadd.f32 %v1644, %v1943
    %v1995 = vmax.f32 %v1945, 0.0
    %v1996 = vmax.f32 %v1946, 0.0
    %v1997 = vmax.f32 %v1947, 0.0
    %v1998 = vmax.f32 %v1948, 0.0
    %v1999 = vmax.f32 %v1949, 0.0
    %v2000 = vmax.f32 %v1950, 0.0
    %v2001 = vmax.f32 %v1951, 0.0
    %v2002 = vmax.f32 %v1952, 0.0
    %v2003 = vmax.f32 %v1953, 0.0
    %v2004 = vmax.f32 %v1954, 0.0
    %v2005 = vmax.f32 %v1955, 0.0
    %v2006 = vmax.f32 %v1956, 0.0
    %v2007 = vmax.f32 %v1957, 0.0
    %v2008 = vmax.f32 %v1958, 0.0
    %v2009 = vmax.f32 %v1959, 0.0
    %v2010 = vmax.f32 %v1960, 0.0
    %v2011 = vmax.f32 %v1961, 0.0
    %v2012 = vmax.f32 %v1962, 0.0
    %v2013 = vmax.f32 %v1963, 0.0
    %v2014 = vmax.f32 %v1964, 0.0
    %v2015 = vmax.f32 %v1965, 0.0
    %v2016 = vmax.f32 %v1966, 0.0
    %v2017 = vmax.f32 %v1967, 0.0
    %v2018 = vmax.f32 %v1968, 0.0
    %v2019 = vmax.f32 %v1969, 0.0
    %v2020 = vmax.f32 %v1970, 0.0
    %v2021 = vmax.f32 %v1971, 0.0
    %v2022 = vmax.f32 %v1972, 0.0
    %v2023 = vmax.f32 %v1973, 0.0
    %v2024 = vmax.f32 %v1974, 0.0
    %v2025 = vmax.f32 %v1975, 0.0
    %v2026 = vmax.f32 %v1976, 0.0
    %v2027 = vmax.f32 %v1977, 0.0
    %v2028 = vmax.f32 %v1978, 0.0
    %v2029 = vmax.f32 %v1979, 0.0
    %v2030 = vmax.f32 %v1980, 0.0
    %v2031 = vmax.f32 %v1981, 0.0
    %v2032 = vmax.f32 %v1982, 0.0
    %v2033 = vmax.f32 %v1983, 0.0
    %v2034 = vmax.f32 %v1984, 0.0
    %v2035 = vmax.f32 %v1985, 0.0
    %v2036 = vmax.f32 %v1986, 0.0
    %v2037 = vmax.f32 %v1987, 0.0
    %v2038 = vmax.f32 %v1988, 0.0
    %v2039 = vmax.f32 %v1989, 0.0
    %v2040 = vmax.f32 %v1990, 0.0
    %v2041 = vmax.f32 %v1991, 0.0
    %v2042 = vmax.f32 %v1992, 0.0
    %v2043 = vmax.f32 %v1993, 0.0
    %v2044 = vmax.f32 %v1994, 0.0
    %v2045 = vld [vmem:[#allocation3] sm:$0xff]
    %v2046 = vld [vmem:[#allocation3 + $0x8] sm:$0xff]
    %v2047 = vld [vmem:[#allocation3 + $0x10] sm:$0xff]
    %v2048 = vld [vmem:[#allocation3 + $0x18] sm:$0xff]
    %v2049 = vld [vmem:[#allocation3 + $0x20] sm:$0xff]
    %v2050 = vld [vmem:[#allocation3 + $0x28] sm:$0xff]
    %v2051 = vld [vmem:[#allocation3 + $0x30] sm:$0xff]
    %v2052 = vld [vmem:[#allocation3 + $0x38] sm:$0xff]
    %v2053 = vld [vmem:[#allocation3 + $0x40] sm:$0xff]
    %v2054 = vld [vmem:[#allocation3 + $0x48] sm:$0xff]
    %v2055 = vld [vmem:[#allocation3 + $0x50] sm:$0xff]
    %v2056 = vld [vmem:[#allocation3 + $0x58] sm:$0xff]
    %v2057 = vld [vmem:[#allocation3 + $0x60] sm:$0xff]
    %v2058 = vld [vmem:[#allocation3 + $0x68] sm:$0xff]
    %v2059 = vld [vmem:[#allocation3 + $0x70] sm:$0xff]
    %v2060 = vld [vmem:[#allocation3 + $0x78] sm:$0xff]
    %v2061 = vld [vmem:[#allocation3 + $0x80] sm:$0xff]
    %v2062 = vld [vmem:[#allocation3 + $0x88] sm:$0xff]
    %v2063 = vld [vmem:[#allocation3 + $0x90] sm:$0xff]
    %v2064 = vld [vmem:[#allocation3 + $0x98] sm:$0xff]
    %v2065 = vld [vmem:[#allocation3 + $0xa0] sm:$0xff]
    %v2066 = vld [vmem:[#allocation3 + $0xa8] sm:$0xff]
    %v2067 = vld [vmem:[#allocation3 + $0xb0] sm:$0xff]
    %v2068 = vld [vmem:[#allocation3 + $0xb8] sm:$0xff]
    %v2069 = vld [vmem:[#allocation3 + $0xc0] sm:$0xff]
    %v2070 = vld [vmem:[#allocation3 + $0xc8] sm:$0xff]
    %v2071 = vld [vmem:[#allocation3 + $0xd0] sm:$0xff]
    %v2072 = vld [vmem:[#allocation3 + $0xd8] sm:$0xff]
    %v2073 = vld [vmem:[#allocation3 + $0xe0] sm:$0xff]
    %v2074 = vld [vmem:[#allocation3 + $0xe8] sm:$0xff]
    %v2075 = vld [vmem:[#allocation3 + $0xf0] sm:$0xff]
    %v2076 = vld [vmem:[#allocation3 + $0xf8] sm:$0xff]
    %v2077 = vld [vmem:[#allocation3 + $0x100] sm:$0xff]
    %v2078 = vld [vmem:[#allocation3 + $0x108] sm:$0xff]
    %v2079 = vld [vmem:[#allocation3 + $0x110] sm:$0xff]
    %v2080 = vld [vmem:[#allocation3 + $0x118] sm:$0xff]
    %v2081 = vld [vmem:[#allocation3 + $0x120] sm:$0xff]
    %v2082 = vld [vmem:[#allocation3 + $0x128] sm:$0xff]
    %v2083 = vld [vmem:[#allocation3 + $0x130] sm:$0xff]
    %v2084 = vld [vmem:[#allocation3 + $0x138] sm:$0xff]
    %v2085 = vld [vmem:[#allocation3 + $0x140] sm:$0xff]
    %v2086 = vld [vmem:[#allocation3 + $0x148] sm:$0xff]
    %v2087 = vld [vmem:[#allocation3 + $0x150] sm:$0xff]
    %v2088 = vld [vmem:[#allocation3 + $0x158] sm:$0xff]
    %v2089 = vld [vmem:[#allocation3 + $0x160] sm:$0xff]
    %v2090 = vld [vmem:[#allocation3 + $0x168] sm:$0xff]
    %v2091 = vld [vmem:[#allocation3 + $0x170] sm:$0xff]
    %v2092 = vld [vmem:[#allocation3 + $0x178] sm:$0xff]
    %v2093 = vld [vmem:[#allocation3 + $0x180] sm:$0xff]
    %v2094 = vld [vmem:[#allocation3 + $0x188] sm:$0xff]
    %v2095 = vld [vmem:[#allocation3 + $0x190] sm:$0xff]
    %v2096 = vld [vmem:[#allocation3 + $0x198] sm:$0xff]
    %v2097 = vld [vmem:[#allocation3 + $0x1a0] sm:$0xff]
    %v2098 = vld [vmem:[#allocation3 + $0x1a8] sm:$0xff]
    %v2099 = vld [vmem:[#allocation3 + $0x1b0] sm:$0xff]
    %v2100 = vld [vmem:[#allocation3 + $0x1b8] sm:$0xff]
    %v2101 = vld [vmem:[#allocation3 + $0x1c0] sm:$0xff]
    %v2102 = vld [vmem:[#allocation3 + $0x1c8] sm:$0xff]
    %v2103 = vld [vmem:[#allocation3 + $0x1d0] sm:$0xff]
    %v2104 = vld [vmem:[#allocation3 + $0x1d8] sm:$0xff]
    %v2105 = vld [vmem:[#allocation3 + $0x1e0] sm:$0xff]
    %v2106 = vld [vmem:[#allocation3 + $0x1e8] sm:$0xff]
    %v2107 = vld [vmem:[#allocation3 + $0x1f0] sm:$0xff]
    %v2108 = vld [vmem:[#allocation3 + $0x1f8] sm:$0xff]
    %v2109 = vld [vmem:[#allocation3 + $0x200] sm:$0xff]
    %v2110 = vld [vmem:[#allocation3 + $0x208] sm:$0xff]
    %v2111 = vld [vmem:[#allocation3 + $0x210] sm:$0xff]
    %v2112 = vld [vmem:[#allocation3 + $0x218] sm:$0xff]
    %v2113 = vld [vmem:[#allocation3 + $0x220] sm:$0xff]
    %v2114 = vld [vmem:[#allocation3 + $0x228] sm:$0xff]
    %v2115 = vld [vmem:[#allocation3 + $0x230] sm:$0xff]
    %v2116 = vld [vmem:[#allocation3 + $0x238] sm:$0xff]
    %v2117 = vld [vmem:[#allocation3 + $0x240] sm:$0xff]
    %v2118 = vld [vmem:[#allocation3 + $0x248] sm:$0xff]
    %v2119 = vld [vmem:[#allocation3 + $0x250] sm:$0xff]
    %v2120 = vld [vmem:[#allocation3 + $0x258] sm:$0xff]
    %v2121 = vld [vmem:[#allocation3 + $0x260] sm:$0xff]
    %v2122 = vld [vmem:[#allocation3 + $0x268] sm:$0xff]
    %v2123 = vld [vmem:[#allocation3 + $0x270] sm:$0xff]
    %v2124 = vld [vmem:[#allocation3 + $0x278] sm:$0xff]
    %v2125 = vld [vmem:[#allocation3 + $0x280] sm:$0xff]
    %v2126 = vld [vmem:[#allocation3 + $0x288] sm:$0xff]
    %v2127 = vld [vmem:[#allocation3 + $0x290] sm:$0xff]
    %v2128 = vld [vmem:[#allocation3 + $0x298] sm:$0xff]
    %v2129 = vld [vmem:[#allocation3 + $0x2a0] sm:$0xff]
    %v2130 = vld [vmem:[#allocation3 + $0x2a8] sm:$0xff]
    %v2131 = vld [vmem:[#allocation3 + $0x2b0] sm:$0xff]
    %v2132 = vld [vmem:[#allocation3 + $0x2b8] sm:$0xff]
    %v2133 = vld [vmem:[#allocation3 + $0x2c0] sm:$0xff]
    %v2134 = vld [vmem:[#allocation3 + $0x2c8] sm:$0xff]
    %v2135 = vld [vmem:[#allocation3 + $0x2d0] sm:$0xff]
    %v2136 = vld [vmem:[#allocation3 + $0x2d8] sm:$0xff]
    %v2137 = vld [vmem:[#allocation3 + $0x2e0] sm:$0xff]
    %v2138 = vld [vmem:[#allocation3 + $0x2e8] sm:$0xff]
    %v2139 = vld [vmem:[#allocation3 + $0x2f0] sm:$0xff]
    %v2140 = vld [vmem:[#allocation3 + $0x2f8] sm:$0xff]
    %v2141 = vld [vmem:[#allocation3 + $0x300] sm:$0xff]
    %v2142 = vld [vmem:[#allocation3 + $0x308] sm:$0xff]
    %v2143 = vld [vmem:[#allocation3 + $0x310] sm:$0xff]
    %v2144 = vld [vmem:[#allocation3 + $0x318] sm:$0xff]
    %v2145 = vld [vmem:[#allocation3 + $0x320] sm:$0xff]
    %v2146 = vld [vmem:[#allocation3 + $0x328] sm:$0xff]
    %v2147 = vld [vmem:[#allocation3 + $0x330] sm:$0xff]
    %v2148 = vld [vmem:[#allocation3 + $0x338] sm:$0xff]
    %v2149 = vld [vmem:[#allocation3 + $0x340] sm:$0xff]
    %v2150 = vld [vmem:[#allocation3 + $0x348] sm:$0xff]
    %v2151 = vld [vmem:[#allocation3 + $0x350] sm:$0xff]
    %v2152 = vld [vmem:[#allocation3 + $0x358] sm:$0xff]
    %v2153 = vld [vmem:[#allocation3 + $0x360] sm:$0xff]
    %v2154 = vld [vmem:[#allocation3 + $0x368] sm:$0xff]
    %v2155 = vld [vmem:[#allocation3 + $0x370] sm:$0xff]
    %v2156 = vld [vmem:[#allocation3 + $0x378] sm:$0xff]
    %v2157 = vld [vmem:[#allocation3 + $0x380] sm:$0xff]
    %v2158 = vld [vmem:[#allocation3 + $0x388] sm:$0xff]
    %v2159 = vld [vmem:[#allocation3 + $0x390] sm:$0xff]
    %v2160 = vld [vmem:[#allocation3 + $0x398] sm:$0xff]
    %v2161 = vld [vmem:[#allocation3 + $0x3a0] sm:$0xff]
    %v2162 = vld [vmem:[#allocation3 + $0x3a8] sm:$0xff]
    %v2163 = vld [vmem:[#allocation3 + $0x3b0] sm:$0xff]
    %v2164 = vld [vmem:[#allocation3 + $0x3b8] sm:$0xff]
    %v2165 = vld [vmem:[#allocation3 + $0x3c0] sm:$0xff]
    %v2166 = vld [vmem:[#allocation3 + $0x3c8] sm:$0xff]
    %v2167 = vld [vmem:[#allocation3 + $0x3d0] sm:$0xff]
    %v2168 = vld [vmem:[#allocation3 + $0x3d8] sm:$0xff]
    %v2169 = vld [vmem:[#allocation3 + $0x3e0] sm:$0xff]
    %v2170 = vld [vmem:[#allocation3 + $0x3e8] sm:$0xff]
    %v2171 = vld [vmem:[#allocation3 + $0x3f0] sm:$0xff]
    %v2172 = vld [vmem:[#allocation3 + $0x3f8] sm:$0xff]
    %v2173 = vpack.c.bf16 %v1996, %v1995
    %v2174 = vpack.c.bf16 %v1998, %v1997
    %v2175 = vpack.c.bf16 %v2000, %v1999
    %v2176 = vpack.c.bf16 %v2002, %v2001
    %v2177 = vpack.c.bf16 %v2004, %v2003
    %v2178 = vpack.c.bf16 %v2006, %v2005
    %v2179 = vpack.c.bf16 %v2008, %v2007
    %v2180 = vpack.c.bf16 %v2010, %v2009
    %v2181 = vpack.c.bf16 %v2012, %v2011
    %v2182 = vpack.c.bf16 %v2014, %v2013
    %v2183 = vpack.c.bf16 %v2016, %v2015
    %v2184 = vpack.c.bf16 %v2018, %v2017
    %v2185 = vpack.c.bf16 %v2020, %v2019
    %v2186 = vpack.c.bf16 %v2022, %v2021
    %v2187 = vpack.c.bf16 %v2024, %v2023
    %v2188 = vpack.c.bf16 %v2026, %v2025
    %v2189 = vpack.c.bf16 %v2028, %v2027
    %v2190 = vpack.c.bf16 %v2030, %v2029
    %v2191 = vpack.c.bf16 %v2032, %v2031
    %v2192 = vpack.c.bf16 %v2034, %v2033
    %v2193 = vpack.c.bf16 %v2036, %v2035
    %v2194 = vpack.c.bf16 %v2038, %v2037
    %v2195 = vpack.c.bf16 %v2040, %v2039
    %v2196 = vpack.c.bf16 %v2042, %v2041
    %v2197 = vpack.c.bf16 %v2044, %v2043
    %v2326 = vunpack.c.l.b16 %v2045
    %v2327 = vunpack.c.h.b16 %v2045
    %v2328 = vunpack.c.l.b16 %v2046
    %v2329 = vunpack.c.h.b16 %v2046
    %v2330 = vunpack.c.l.b16 %v2047
    %v2331 = vunpack.c.h.b16 %v2047
    %v2332 = vunpack.c.l.b16 %v2048
    %v2333 = vunpack.c.h.b16 %v2048
    %v2334 = vunpack.c.l.b16 %v2049
    %v2335 = vunpack.c.h.b16 %v2049
    %v2336 = vunpack.c.l.b16 %v2050
    %v2337 = vunpack.c.h.b16 %v2050
    %v2338 = vunpack.c.l.b16 %v2051
    %v2339 = vunpack.c.h.b16 %v2051
    %v2340 = vunpack.c.l.b16 %v2052
    %v2341 = vunpack.c.h.b16 %v2052
    %v2342 = vunpack.c.l.b16 %v2053
    %v2343 = vunpack.c.h.b16 %v2053
    %v2344 = vunpack.c.l.b16 %v2054
    %v2345 = vunpack.c.h.b16 %v2054
    %v2346 = vunpack.c.l.b16 %v2055
    %v2347 = vunpack.c.h.b16 %v2055
    %v2348 = vunpack.c.l.b16 %v2056
    %v2349 = vunpack.c.h.b16 %v2056
    %v2350 = vunpack.c.l.b16 %v2057
    %v2351 = vunpack.c.h.b16 %v2057
    %v2352 = vunpack.c.l.b16 %v2058
    %v2353 = vunpack.c.h.b16 %v2058
    %v2354 = vunpack.c.l.b16 %v2059
    %v2355 = vunpack.c.h.b16 %v2059
    %v2356 = vunpack.c.l.b16 %v2060
    %v2357 = vunpack.c.h.b16 %v2060
    %v2358 = vunpack.c.l.b16 %v2061
    %v2359 = vunpack.c.h.b16 %v2061
    %v2360 = vunpack.c.l.b16 %v2062
    %v2361 = vunpack.c.h.b16 %v2062
    %v2362 = vunpack.c.l.b16 %v2063
    %v2363 = vunpack.c.h.b16 %v2063
    %v2364 = vunpack.c.l.b16 %v2064
    %v2365 = vunpack.c.h.b16 %v2064
    %v2366 = vunpack.c.l.b16 %v2065
    %v2367 = vunpack.c.h.b16 %v2065
    %v2368 = vunpack.c.l.b16 %v2066
    %v2369 = vunpack.c.h.b16 %v2066
    %v2370 = vunpack.c.l.b16 %v2067
    %v2371 = vunpack.c.h.b16 %v2067
    %v2372 = vunpack.c.l.b16 %v2068
    %v2373 = vunpack.c.h.b16 %v2068
    %v2374 = vunpack.c.l.b16 %v2069
    %v2375 = vunpack.c.h.b16 %v2069
    %v2376 = vunpack.c.l.b16 %v2070
    %v2377 = vunpack.c.h.b16 %v2070
    %v2378 = vunpack.c.l.b16 %v2071
    %v2379 = vunpack.c.h.b16 %v2071
    %v2380 = vunpack.c.l.b16 %v2072
    %v2381 = vunpack.c.h.b16 %v2072
    %v2382 = vunpack.c.l.b16 %v2073
    %v2383 = vunpack.c.h.b16 %v2073
    %v2384 = vunpack.c.l.b16 %v2074
    %v2385 = vunpack.c.h.b16 %v2074
    %v2386 = vunpack.c.l.b16 %v2075
    %v2387 = vunpack.c.h.b16 %v2075
    %v2388 = vunpack.c.l.b16 %v2076
    %v2389 = vunpack.c.h.b16 %v2076
    %v2390 = vunpack.c.l.b16 %v2077
    %v2391 = vunpack.c.h.b16 %v2077
    %v2392 = vunpack.c.l.b16 %v2078
    %v2393 = vunpack.c.h.b16 %v2078
    %v2394 = vunpack.c.l.b16 %v2079
    %v2395 = vunpack.c.h.b16 %v2079
    %v2396 = vunpack.c.l.b16 %v2080
    %v2397 = vunpack.c.h.b16 %v2080
    %v2398 = vunpack.c.l.b16 %v2081
    %v2399 = vunpack.c.h.b16 %v2081
    %v2400 = vunpack.c.l.b16 %v2082
    %v2401 = vunpack.c.h.b16 %v2082
    %v2402 = vunpack.c.l.b16 %v2083
    %v2403 = vunpack.c.h.b16 %v2083
    %v2404 = vunpack.c.l.b16 %v2084
    %v2405 = vunpack.c.h.b16 %v2084
    %v2406 = vunpack.c.l.b16 %v2085
    %v2407 = vunpack.c.h.b16 %v2085
    %v2408 = vunpack.c.l.b16 %v2086
    %v2409 = vunpack.c.h.b16 %v2086
    %v2410 = vunpack.c.l.b16 %v2087
    %v2411 = vunpack.c.h.b16 %v2087
    %v2412 = vunpack.c.l.b16 %v2088
    %v2413 = vunpack.c.h.b16 %v2088
    %v2414 = vunpack.c.l.b16 %v2089
    %v2415 = vunpack.c.h.b16 %v2089
    %v2416 = vunpack.c.l.b16 %v2090
    %v2417 = vunpack.c.h.b16 %v2090
    %v2418 = vunpack.c.l.b16 %v2091
    %v2419 = vunpack.c.h.b16 %v2091
    %v2420 = vunpack.c.l.b16 %v2092
    %v2421 = vunpack.c.h.b16 %v2092
    %v2422 = vunpack.c.l.b16 %v2093
    %v2423 = vunpack.c.h.b16 %v2093
    %v2424 = vunpack.c.l.b16 %v2094
    %v2425 = vunpack.c.h.b16 %v2094
    %v2426 = vunpack.c.l.b16 %v2095
    %v2427 = vunpack.c.h.b16 %v2095
    %v2428 = vunpack.c.l.b16 %v2096
    %v2429 = vunpack.c.h.b16 %v2096
    %v2430 = vunpack.c.l.b16 %v2097
    %v2431 = vunpack.c.h.b16 %v2097
    %v2432 = vunpack.c.l.b16 %v2098
    %v2433 = vunpack.c.h.b16 %v2098
    %v2434 = vunpack.c.l.b16 %v2099
    %v2435 = vunpack.c.h.b16 %v2099
    %v2436 = vunpack.c.l.b16 %v2100
    %v2437 = vunpack.c.h.b16 %v2100
    %v2438 = vunpack.c.l.b16 %v2101
    %v2439 = vunpack.c.h.b16 %v2101
    %v2440 = vunpack.c.l.b16 %v2102
    %v2441 = vunpack.c.h.b16 %v2102
    %v2442 = vunpack.c.l.b16 %v2103
    %v2443 = vunpack.c.h.b16 %v2103
    %v2444 = vunpack.c.l.b16 %v2104
    %v2445 = vunpack.c.h.b16 %v2104
    %v2446 = vunpack.c.l.b16 %v2105
    %v2447 = vunpack.c.h.b16 %v2105
    %v2448 = vunpack.c.l.b16 %v2106
    %v2449 = vunpack.c.h.b16 %v2106
    %v2450 = vunpack.c.l.b16 %v2107
    %v2451 = vunpack.c.h.b16 %v2107
    %v2452 = vunpack.c.l.b16 %v2108
    %v2453 = vunpack.c.h.b16 %v2108
    %v2454 = vunpack.c.l.b16 %v2109
    %v2455 = vunpack.c.h.b16 %v2109
    %v2456 = vunpack.c.l.b16 %v2110
    %v2457 = vunpack.c.h.b16 %v2110
    %v2458 = vunpack.c.l.b16 %v2111
    %v2459 = vunpack.c.h.b16 %v2111
    %v2460 = vunpack.c.l.b16 %v2112
    %v2461 = vunpack.c.h.b16 %v2112
    %v2462 = vunpack.c.l.b16 %v2113
    %v2463 = vunpack.c.h.b16 %v2113
    %v2464 = vunpack.c.l.b16 %v2114
    %v2465 = vunpack.c.h.b16 %v2114
    %v2466 = vunpack.c.l.b16 %v2115
    %v2467 = vunpack.c.h.b16 %v2115
    %v2468 = vunpack.c.l.b16 %v2116
    %v2469 = vunpack.c.h.b16 %v2116
    %v2470 = vunpack.c.l.b16 %v2117
    %v2471 = vunpack.c.h.b16 %v2117
    %v2472 = vunpack.c.l.b16 %v2118
    %v2473 = vunpack.c.h.b16 %v2118
    %v2474 = vunpack.c.l.b16 %v2119
    %v2475 = vunpack.c.h.b16 %v2119
    %v2476 = vunpack.c.l.b16 %v2120
    %v2477 = vunpack.c.h.b16 %v2120
    %v2478 = vunpack.c.l.b16 %v2121
    %v2479 = vunpack.c.h.b16 %v2121
    %v2480 = vunpack.c.l.b16 %v2122
    %v2481 = vunpack.c.h.b16 %v2122
    %v2482 = vunpack.c.l.b16 %v2123
    %v2483 = vunpack.c.h.b16 %v2123
    %v2484 = vunpack.c.l.b16 %v2124
    %v2485 = vunpack.c.h.b16 %v2124
    %v2486 = vunpack.c.l.b16 %v2125
    %v2487 = vunpack.c.h.b16 %v2125
    %v2488 = vunpack.c.l.b16 %v2126
    %v2489 = vunpack.c.h.b16 %v2126
    %v2490 = vunpack.c.l.b16 %v2127
    %v2491 = vunpack.c.h.b16 %v2127
    %v2492 = vunpack.c.l.b16 %v2128
    %v2493 = vunpack.c.h.b16 %v2128
    %v2494 = vunpack.c.l.b16 %v2129
    %v2495 = vunpack.c.h.b16 %v2129
    %v2496 = vunpack.c.l.b16 %v2130
    %v2497 = vunpack.c.h.b16 %v2130
    %v2498 = vunpack.c.l.b16 %v2131
    %v2499 = vunpack.c.h.b16 %v2131
    %v2500 = vunpack.c.l.b16 %v2132
    %v2501 = vunpack.c.h.b16 %v2132
    %v2502 = vunpack.c.l.b16 %v2133
    %v2503 = vunpack.c.h.b16 %v2133
    %v2504 = vunpack.c.l.b16 %v2134
    %v2505 = vunpack.c.h.b16 %v2134
    %v2506 = vunpack.c.l.b16 %v2135
    %v2507 = vunpack.c.h.b16 %v2135
    %v2508 = vunpack.c.l.b16 %v2136
    %v2509 = vunpack.c.h.b16 %v2136
    %v2510 = vunpack.c.l.b16 %v2137
    %v2511 = vunpack.c.h.b16 %v2137
    %v2512 = vunpack.c.l.b16 %v2138
    %v2513 = vunpack.c.h.b16 %v2138
    %v2514 = vunpack.c.l.b16 %v2139
    %v2515 = vunpack.c.h.b16 %v2139
    %v2516 = vunpack.c.l.b16 %v2140
    %v2517 = vunpack.c.h.b16 %v2140
    %v2518 = vunpack.c.l.b16 %v2141
    %v2519 = vunpack.c.h.b16 %v2141
    %v2520 = vunpack.c.l.b16 %v2142
    %v2521 = vunpack.c.h.b16 %v2142
    %v2522 = vunpack.c.l.b16 %v2143
    %v2523 = vunpack.c.h.b16 %v2143
    %v2524 = vunpack.c.l.b16 %v2144
    %v2525 = vunpack.c.h.b16 %v2144
    %v2526 = vunpack.c.l.b16 %v2145
    %v2527 = vunpack.c.h.b16 %v2145
    %v2528 = vunpack.c.l.b16 %v2146
    %v2529 = vunpack.c.h.b16 %v2146
    %v2530 = vunpack.c.l.b16 %v2147
    %v2531 = vunpack.c.h.b16 %v2147
    %v2532 = vunpack.c.l.b16 %v2148
    %v2533 = vunpack.c.h.b16 %v2148
    %v2534 = vunpack.c.l.b16 %v2149
    %v2535 = vunpack.c.h.b16 %v2149
    %v2536 = vunpack.c.l.b16 %v2150
    %v2537 = vunpack.c.h.b16 %v2150
    %v2538 = vunpack.c.l.b16 %v2151
    %v2539 = vunpack.c.h.b16 %v2151
    %v2540 = vunpack.c.l.b16 %v2152
    %v2541 = vunpack.c.h.b16 %v2152
    %v2542 = vunpack.c.l.b16 %v2153
    %v2543 = vunpack.c.h.b16 %v2153
    %v2544 = vunpack.c.l.b16 %v2154
    %v2545 = vunpack.c.h.b16 %v2154
    %v2546 = vunpack.c.l.b16 %v2155
    %v2547 = vunpack.c.h.b16 %v2155
    %v2548 = vunpack.c.l.b16 %v2156
    %v2549 = vunpack.c.h.b16 %v2156
    %v2550 = vunpack.c.l.b16 %v2157
    %v2551 = vunpack.c.h.b16 %v2157
    %v2552 = vunpack.c.l.b16 %v2158
    %v2553 = vunpack.c.h.b16 %v2158
    %v2554 = vunpack.c.l.b16 %v2159
    %v2555 = vunpack.c.h.b16 %v2159
    %v2556 = vunpack.c.l.b16 %v2160
    %v2557 = vunpack.c.h.b16 %v2160
    %v2558 = vunpack.c.l.b16 %v2161
    %v2559 = vunpack.c.h.b16 %v2161
    %v2560 = vunpack.c.l.b16 %v2162
    %v2561 = vunpack.c.h.b16 %v2162
    %v2562 = vunpack.c.l.b16 %v2163
    %v2563 = vunpack.c.h.b16 %v2163
    %v2564 = vunpack.c.l.b16 %v2164
    %v2565 = vunpack.c.h.b16 %v2164
    %v2566 = vunpack.c.l.b16 %v2165
    %v2567 = vunpack.c.h.b16 %v2165
    %v2568 = vunpack.c.l.b16 %v2166
    %v2569 = vunpack.c.h.b16 %v2166
    %v2570 = vunpack.c.l.b16 %v2167
    %v2571 = vunpack.c.h.b16 %v2167
    %v2572 = vunpack.c.l.b16 %v2168
    %v2573 = vunpack.c.h.b16 %v2168
    %v2574 = vunpack.c.l.b16 %v2169
    %v2575 = vunpack.c.h.b16 %v2169
    %v2576 = vunpack.c.l.b16 %v2170
    %v2577 = vunpack.c.h.b16 %v2170
    %v2578 = vunpack.c.l.b16 %v2171
    %v2579 = vunpack.c.h.b16 %v2171
    %v2580 = vunpack.c.l.b16 %v2172
    %v2581 = vunpack.c.h.b16 %v2172
    %v2582 = vpack.c.b16 %v2330, %v2326
    %v2583 = vpack.c.b16 %v2331, %v2327
    %v2584 = vpack.c.b16 %v2332, %v2328
    %v2585 = vpack.c.b16 %v2333, %v2329
    %v2586 = vpack.c.b16 %v2338, %v2334
    %v2587 = vpack.c.b16 %v2339, %v2335
    %v2588 = vpack.c.b16 %v2340, %v2336
    %v2589 = vpack.c.b16 %v2341, %v2337
    %v2590 = vpack.c.b16 %v2346, %v2342
    %v2591 = vpack.c.b16 %v2347, %v2343
    %v2592 = vpack.c.b16 %v2348, %v2344
    %v2593 = vpack.c.b16 %v2349, %v2345
    %v2594 = vpack.c.b16 %v2354, %v2350
    %v2595 = vpack.c.b16 %v2355, %v2351
    %v2596 = vpack.c.b16 %v2356, %v2352
    %v2597 = vpack.c.b16 %v2357, %v2353
    %v2598 = vpack.c.b16 %v2362, %v2358
    %v2599 = vpack.c.b16 %v2363, %v2359
    %v2600 = vpack.c.b16 %v2364, %v2360
    %v2601 = vpack.c.b16 %v2365, %v2361
    %v2602 = vpack.c.b16 %v2370, %v2366
    %v2603 = vpack.c.b16 %v2371, %v2367
    %v2604 = vpack.c.b16 %v2372, %v2368
    %v2605 = vpack.c.b16 %v2373, %v2369
    %v2606 = vpack.c.b16 %v2378, %v2374
    %v2607 = vpack.c.b16 %v2379, %v2375
    %v2608 = vpack.c.b16 %v2380, %v2376
    %v2609 = vpack.c.b16 %v2381, %v2377
    %v2610 = vpack.c.b16 %v2386, %v2382
    %v2611 = vpack.c.b16 %v2387, %v2383
    %v2612 = vpack.c.b16 %v2388, %v2384
    %v2613 = vpack.c.b16 %v2389, %v2385
    %v2614 = vpack.c.b16 %v2394, %v2390
    %v2615 = vpack.c.b16 %v2395, %v2391
    %v2616 = vpack.c.b16 %v2396, %v2392
    %v2617 = vpack.c.b16 %v2397, %v2393
    %v2618 = vpack.c.b16 %v2402, %v2398
    %v2619 = vpack.c.b16 %v2403, %v2399
    %v2620 = vpack.c.b16 %v2404, %v2400
    %v2621 = vpack.c.b16 %v2405, %v2401
    %v2622 = vpack.c.b16 %v2410, %v2406
    %v2623 = vpack.c.b16 %v2411, %v2407
    %v2624 = vpack.c.b16 %v2412, %v2408
    %v2625 = vpack.c.b16 %v2413, %v2409
    %v2626 = vpack.c.b16 %v2418, %v2414
    %v2627 = vpack.c.b16 %v2419, %v2415
    %v2628 = vpack.c.b16 %v2420, %v2416
    %v2629 = vpack.c.b16 %v2421, %v2417
    %v2630 = vpack.c.b16 %v2426, %v2422
    %v2631 = vpack.c.b16 %v2427, %v2423
    %v2632 = vpack.c.b16 %v2428, %v2424
    %v2633 = vpack.c.b16 %v2429, %v2425
    %v2634 = vpack.c.b16 %v2434, %v2430
    %v2635 = vpack.c.b16 %v2435, %v2431
    %v2636 = vpack.c.b16 %v2436, %v2432
    %v2637 = vpack.c.b16 %v2437, %v2433
    %v2638 = vpack.c.b16 %v2442, %v2438
    %v2639 = vpack.c.b16 %v2443, %v2439
    %v2640 = vpack.c.b16 %v2444, %v2440
    %v2641 = vpack.c.b16 %v2445, %v2441
    %v2642 = vpack.c.b16 %v2450, %v2446
    %v2643 = vpack.c.b16 %v2451, %v2447
    %v2644 = vpack.c.b16 %v2452, %v2448
    %v2645 = vpack.c.b16 %v2453, %v2449
    %v2646 = vpack.c.b16 %v2458, %v2454
    %v2647 = vpack.c.b16 %v2459, %v2455
    %v2648 = vpack.c.b16 %v2460, %v2456
    %v2649 = vpack.c.b16 %v2461, %v2457
    %v2650 = vpack.c.b16 %v2466, %v2462
    %v2651 = vpack.c.b16 %v2467, %v2463
    %v2652 = vpack.c.b16 %v2468, %v2464
    %v2653 = vpack.c.b16 %v2469, %v2465
    %v2654 = vpack.c.b16 %v2474, %v2470
    %v2655 = vpack.c.b16 %v2475, %v2471
    %v2656 = vpack.c.b16 %v2476, %v2472
    %v2657 = vpack.c.b16 %v2477, %v2473
    %v2658 = vpack.c.b16 %v2482, %v2478
    %v2659 = vpack.c.b16 %v2483, %v2479
    %v2660 = vpack.c.b16 %v2484, %v2480
    %v2661 = vpack.c.b16 %v2485, %v2481
    %v2662 = vpack.c.b16 %v2490, %v2486
    %v2663 = vpack.c.b16 %v2491, %v2487
    %v2664 = vpack.c.b16 %v2492, %v2488
    %v2665 = vpack.c.b16 %v2493, %v2489
    %v2666 = vpack.c.b16 %v2498, %v2494
    %v2667 = vpack.c.b16 %v2499, %v2495
    %v2668 = vpack.c.b16 %v2500, %v2496
    %v2669 = vpack.c.b16 %v2501, %v2497
    %v2670 = vpack.c.b16 %v2506, %v2502
    %v2671 = vpack.c.b16 %v2507, %v2503
    %v2672 = vpack.c.b16 %v2508, %v2504
    %v2673 = vpack.c.b16 %v2509, %v2505
    %v2674 = vpack.c.b16 %v2514, %v2510
    %v2675 = vpack.c.b16 %v2515, %v2511
    %v2676 = vpack.c.b16 %v2516, %v2512
    %v2677 = vpack.c.b16 %v2517, %v2513
    %v2678 = vpack.c.b16 %v2522, %v2518
    %v2679 = vpack.c.b16 %v2523, %v2519
    %v2680 = vpack.c.b16 %v2524, %v2520
    %v2681 = vpack.c.b16 %v2525, %v2521
    %v2682 = vpack.c.b16 %v2530, %v2526
    %v2683 = vpack.c.b16 %v2531, %v2527
    %v2684 = vpack.c.b16 %v2532, %v2528
    %v2685 = vpack.c.b16 %v2533, %v2529
    %v2686 = vpack.c.b16 %v2538, %v2534
    %v2687 = vpack.c.b16 %v2539, %v2535
    %v2688 = vpack.c.b16 %v2540, %v2536
    %v2689 = vpack.c.b16 %v2541, %v2537
    %v2690 = vpack.c.b16 %v2546, %v2542
    %v2691 = vpack.c.b16 %v2547, %v2543
    %v2692 = vpack.c.b16 %v2548, %v2544
    %v2693 = vpack.c.b16 %v2549, %v2545
    %v2694 = vpack.c.b16 %v2554, %v2550
    %v2695 = vpack.c.b16 %v2555, %v2551
    %v2696 = vpack.c.b16 %v2556, %v2552
    %v2697 = vpack.c.b16 %v2557, %v2553
    %v2698 = vpack.c.b16 %v2562, %v2558
    %v2699 = vpack.c.b16 %v2563, %v2559
    %v2700 = vpack.c.b16 %v2564, %v2560
    %v2701 = vpack.c.b16 %v2565, %v2561
    %v2702 = vpack.c.b16 %v2570, %v2566
    %v2703 = vpack.c.b16 %v2571, %v2567
    %v2704 = vpack.c.b16 %v2572, %v2568
    %v2705 = vpack.c.b16 %v2573, %v2569
    %v2706 = vpack.c.b16 %v2578, %v2574
    %v2707 = vpack.c.b16 %v2579, %v2575
    %v2708 = vpack.c.b16 %v2580, %v2576
    %v2709 = vpack.c.b16 %v2581, %v2577
    %vm2806 = vcmask 130048
    %v2808 = vsel %vm2806, %v2585, 0
    %v2811 = vsel %vm2806, %v2589, 0
    %v2814 = vsel %vm2806, %v2593, 0
    %v2817 = vsel %vm2806, %v2597, 0
    %v2820 = vsel %vm2806, %v2601, 0
    %v2823 = vsel %vm2806, %v2605, 0
    %v2826 = vsel %vm2806, %v2609, 0
    %v2829 = vsel %vm2806, %v2613, 0
    %v2832 = vsel %vm2806, %v2617, 0
    %v2835 = vsel %vm2806, %v2621, 0
    %v2838 = vsel %vm2806, %v2625, 0
    %v2841 = vsel %vm2806, %v2629, 0
    %v2844 = vsel %vm2806, %v2633, 0
    %v2847 = vsel %vm2806, %v2637, 0
    %v2850 = vsel %vm2806, %v2641, 0
    %v2853 = vsel %vm2806, %v2645, 0
    %v2856 = vsel %vm2806, %v2649, 0
    %v2859 = vsel %vm2806, %v2653, 0
    %v2862 = vsel %vm2806, %v2657, 0
    %v2865 = vsel %vm2806, %v2661, 0
    %v2868 = vsel %vm2806, %v2665, 0
    %v2871 = vsel %vm2806, %v2669, 0
    %v2874 = vsel %vm2806, %v2673, 0
    %v2877 = vsel %vm2806, %v2677, 0
    %v2880 = vsel %vm2806, %v2681, 0
    %v2883 = vsel %vm2806, %v2685, 0
    %v2886 = vsel %vm2806, %v2689, 0
    %v2889 = vsel %vm2806, %v2693, 0
    %v2892 = vsel %vm2806, %v2697, 0
    %v2895 = vsel %vm2806, %v2701, 0
    %v2898 = vsel %vm2806, %v2705, 0
    %v2901 = vsel %vm2806, %v2709, 0
    %2903 = vmatpush.bf16.msra.mxu0 %v2180
    %2904 = vmatpush.bf16.msra.mxu0 %v2179
    %2905 = vmatpush.bf16.msra.mxu0 %v2178
    %2906 = vmatpush.bf16.msra.mxu0 %v2177
    %2907 = vmatpush.bf16.msra.mxu0 %v2176
    %2908 = vmatpush.bf16.msra.mxu0 %v2175
    %2909 = vmatpush.bf16.msra.mxu0 %v2174
    %2910 = vmatpush.bf16.msra.mxu0 %v2173
    %2911 = vmatmul.bf16.gmra.mxu0 %v2582
    %v2912 = vpop.f32.mrf.mxu0
    %v2913 = vadd.f32 0.0, %v2912
    %v2914 = vpop.f32.mrf.mxu0
    %v2915 = vadd.f32 0.0, %v2914
    %2916 = vmatmul.bf16.gmra.mxu0 %v2586
    %v2917 = vpop.f32.mrf.mxu0
    %v2918 = vadd.f32 0.0, %v2917
    %v2919 = vpop.f32.mrf.mxu0
    %v2920 = vadd.f32 0.0, %v2919
    %2921 = vmatmul.bf16.gmra.mxu0 %v2590
    %v2922 = vpop.f32.mrf.mxu0
    %v2923 = vadd.f32 0.0, %v2922
    %v2924 = vpop.f32.mrf.mxu0
    %v2925 = vadd.f32 0.0, %v2924
    %2926 = vmatmul.bf16.gmra.mxu0 %v2594
    %v2927 = vpop.f32.mrf.mxu0
    %v2928 = vadd.f32 0.0, %v2927
    %v2929 = vpop.f32.mrf.mxu0
    %v2930 = vadd.f32 0.0, %v2929
    %2931 = vmatmul.bf16.gmra.mxu0 %v2598
    %v2932 = vpop.f32.mrf.mxu0
    %v2933 = vadd.f32 0.0, %v2932
    %v2934 = vpop.f32.mrf.mxu0
    %v2935 = vadd.f32 0.0, %v2934
    %2936 = vmatmul.bf16.gmra.mxu0 %v2602
    %v2937 = vpop.f32.mrf.mxu0
    %v2938 = vadd.f32 0.0, %v2937
    %v2939 = vpop.f32.mrf.mxu0
    %v2940 = vadd.f32 0.0, %v2939
    %2941 = vmatmul.bf16.gmra.mxu0 %v2606
    %v2942 = vpop.f32.mrf.mxu0
    %v2943 = vadd.f32 0.0, %v2942
    %v2944 = vpop.f32.mrf.mxu0
    %v2945 = vadd.f32 0.0, %v2944
    %2946 = vmatmul.bf16.gmra.mxu0 %v2610
    %v2947 = vpop.f32.mrf.mxu0
    %v2948 = vadd.f32 0.0, %v2947
    %v2949 = vpop.f32.mrf.mxu0
    %v2950 = vadd.f32 0.0, %v2949
    %2951 = vmatmul.bf16.gmra.mxu0 %v2614
    %v2952 = vpop.f32.mrf.mxu0
    %v2953 = vadd.f32 0.0, %v2952
    %v2954 = vpop.f32.mrf.mxu0
    %v2955 = vadd.f32 0.0, %v2954
    %2956 = vmatmul.bf16.gmra.mxu0 %v2618
    %v2957 = vpop.f32.mrf.mxu0
    %v2958 = vadd.f32 0.0, %v2957
    %v2959 = vpop.f32.mrf.mxu0
    %v2960 = vadd.f32 0.0, %v2959
    %2961 = vmatmul.bf16.gmra.mxu0 %v2622
    %v2962 = vpop.f32.mrf.mxu0
    %v2963 = vadd.f32 0.0, %v2962
    %v2964 = vpop.f32.mrf.mxu0
    %v2965 = vadd.f32 0.0, %v2964
    %2966 = vmatmul.bf16.gmra.mxu0 %v2626
    %v2967 = vpop.f32.mrf.mxu0
    %v2968 = vadd.f32 0.0, %v2967
    %v2969 = vpop.f32.mrf.mxu0
    %v2970 = vadd.f32 0.0, %v2969
    %2971 = vmatmul.bf16.gmra.mxu0 %v2630
    %v2972 = vpop.f32.mrf.mxu0
    %v2973 = vadd.f32 0.0, %v2972
    %v2974 = vpop.f32.mrf.mxu0
    %v2975 = vadd.f32 0.0, %v2974
    %2976 = vmatmul.bf16.gmra.mxu0 %v2634
    %v2977 = vpop.f32.mrf.mxu0
    %v2978 = vadd.f32 0.0, %v2977
    %v2979 = vpop.f32.mrf.mxu0
    %v2980 = vadd.f32 0.0, %v2979
    %2981 = vmatmul.bf16.gmra.mxu0 %v2638
    %v2982 = vpop.f32.mrf.mxu0
    %v2983 = vadd.f32 0.0, %v2982
    %v2984 = vpop.f32.mrf.mxu0
    %v2985 = vadd.f32 0.0, %v2984
    %2986 = vmatmul.bf16.gmra.mxu0 %v2642
    %v2987 = vpop.f32.mrf.mxu0
    %v2988 = vadd.f32 0.0, %v2987
    %v2989 = vpop.f32.mrf.mxu0
    %v2990 = vadd.f32 0.0, %v2989
    %2991 = vmatmul.bf16.gmra.mxu0 %v2646
    %v2992 = vpop.f32.mrf.mxu0
    %v2993 = vadd.f32 0.0, %v2992
    %v2994 = vpop.f32.mrf.mxu0
    %v2995 = vadd.f32 0.0, %v2994
    %2996 = vmatmul.bf16.gmra.mxu0 %v2650
    %v2997 = vpop.f32.mrf.mxu0
    %v2998 = vadd.f32 0.0, %v2997
    %v2999 = vpop.f32.mrf.mxu0
    %v3000 = vadd.f32 0.0, %v2999
    %3001 = vmatmul.bf16.gmra.mxu0 %v2654
    %v3002 = vpop.f32.mrf.mxu0
    %v3003 = vadd.f32 0.0, %v3002
    %v3004 = vpop.f32.mrf.mxu0
    %v3005 = vadd.f32 0.0, %v3004
    %3006 = vmatmul.bf16.gmra.mxu0 %v2658
    %v3007 = vpop.f32.mrf.mxu0
    %v3008 = vadd.f32 0.0, %v3007
    %v3009 = vpop.f32.mrf.mxu0
    %v3010 = vadd.f32 0.0, %v3009
    %3011 = vmatmul.bf16.gmra.mxu0 %v2662
    %v3012 = vpop.f32.mrf.mxu0
    %v3013 = vadd.f32 0.0, %v3012
    %v3014 = vpop.f32.mrf.mxu0
    %v3015 = vadd.f32 0.0, %v3014
    %3016 = vmatmul.bf16.gmra.mxu0 %v2666
    %v3017 = vpop.f32.mrf.mxu0
    %v3018 = vadd.f32 0.0, %v3017
    %v3019 = vpop.f32.mrf.mxu0
    %v3020 = vadd.f32 0.0, %v3019
    %3021 = vmatmul.bf16.gmra.mxu0 %v2670
    %v3022 = vpop.f32.mrf.mxu0
    %v3023 = vadd.f32 0.0, %v3022
    %v3024 = vpop.f32.mrf.mxu0
    %v3025 = vadd.f32 0.0, %v3024
    %3026 = vmatmul.bf16.gmra.mxu0 %v2674
    %v3027 = vpop.f32.mrf.mxu0
    %v3028 = vadd.f32 0.0, %v3027
    %v3029 = vpop.f32.mrf.mxu0
    %v3030 = vadd.f32 0.0, %v3029
    %3031 = vmatmul.bf16.gmra.mxu0 %v2678
    %v3032 = vpop.f32.mrf.mxu0
    %v3033 = vadd.f32 0.0, %v3032
    %v3034 = vpop.f32.mrf.mxu0
    %v3035 = vadd.f32 0.0, %v3034
    %3036 = vmatmul.bf16.gmra.mxu0 %v2682
    %v3037 = vpop.f32.mrf.mxu0
    %v3038 = vadd.f32 0.0, %v3037
    %v3039 = vpop.f32.mrf.mxu0
    %v3040 = vadd.f32 0.0, %v3039
    %3041 = vmatmul.bf16.gmra.mxu0 %v2686
    %v3042 = vpop.f32.mrf.mxu0
    %v3043 = vadd.f32 0.0, %v3042
    %v3044 = vpop.f32.mrf.mxu0
    %v3045 = vadd.f32 0.0, %v3044
    %3046 = vmatmul.bf16.gmra.mxu0 %v2690
    %v3047 = vpop.f32.mrf.mxu0
    %v3048 = vadd.f32 0.0, %v3047
    %v3049 = vpop.f32.mrf.mxu0
    %v3050 = vadd.f32 0.0, %v3049
    %3051 = vmatmul.bf16.gmra.mxu0 %v2694
    %v3052 = vpop.f32.mrf.mxu0
    %v3053 = vadd.f32 0.0, %v3052
    %v3054 = vpop.f32.mrf.mxu0
    %v3055 = vadd.f32 0.0, %v3054
    %3056 = vmatmul.bf16.gmra.mxu0 %v2698
    %v3057 = vpop.f32.mrf.mxu0
    %v3058 = vadd.f32 0.0, %v3057
    %v3059 = vpop.f32.mrf.mxu0
    %v3060 = vadd.f32 0.0, %v3059
    %3061 = vmatmul.bf16.gmra.mxu0 %v2702
    %v3062 = vpop.f32.mrf.mxu0
    %v3063 = vadd.f32 0.0, %v3062
    %v3064 = vpop.f32.mrf.mxu0
    %v3065 = vadd.f32 0.0, %v3064
    %3066 = vmatmul.bf16.gmra.mxu0 %v2706
    %v3067 = vpop.f32.mrf.mxu0
    %v3068 = vadd.f32 0.0, %v3067
    %v3069 = vpop.f32.mrf.mxu0
    %v3070 = vadd.f32 0.0, %v3069
    %3071 = vdwg.mxu0
    %3072 = vmatpush.bf16.msra.mxu0 %v2188
    %3073 = vmatpush.bf16.msra.mxu0 %v2187
    %3074 = vmatpush.bf16.msra.mxu0 %v2186
    %3075 = vmatpush.bf16.msra.mxu0 %v2185
    %3076 = vmatpush.bf16.msra.mxu0 %v2184
    %3077 = vmatpush.bf16.msra.mxu0 %v2183
    %3078 = vmatpush.bf16.msra.mxu0 %v2182
    %3079 = vmatpush.bf16.msra.mxu0 %v2181
    %3080 = vmatmul.bf16.gmra.mxu0 %v2583
    %v3081 = vpop.f32.mrf.mxu0
    %v3082 = vadd.f32 %v2913, %v3081
    %v3083 = vpop.f32.mrf.mxu0
    %v3084 = vadd.f32 %v2915, %v3083
    %3085 = vmatmul.bf16.gmra.mxu0 %v2587
    %v3086 = vpop.f32.mrf.mxu0
    %v3087 = vadd.f32 %v2918, %v3086
    %v3088 = vpop.f32.mrf.mxu0
    %v3089 = vadd.f32 %v2920, %v3088
    %3090 = vmatmul.bf16.gmra.mxu0 %v2591
    %v3091 = vpop.f32.mrf.mxu0
    %v3092 = vadd.f32 %v2923, %v3091
    %v3093 = vpop.f32.mrf.mxu0
    %v3094 = vadd.f32 %v2925, %v3093
    %3095 = vmatmul.bf16.gmra.mxu0 %v2595
    %v3096 = vpop.f32.mrf.mxu0
    %v3097 = vadd.f32 %v2928, %v3096
    %v3098 = vpop.f32.mrf.mxu0
    %v3099 = vadd.f32 %v2930, %v3098
    %3100 = vmatmul.bf16.gmra.mxu0 %v2599
    %v3101 = vpop.f32.mrf.mxu0
    %v3102 = vadd.f32 %v2933, %v3101
    %v3103 = vpop.f32.mrf.mxu0
    %v3104 = vadd.f32 %v2935, %v3103
    %3105 = vmatmul.bf16.gmra.mxu0 %v2603
    %v3106 = vpop.f32.mrf.mxu0
    %v3107 = vadd.f32 %v2938, %v3106
    %v3108 = vpop.f32.mrf.mxu0
    %v3109 = vadd.f32 %v2940, %v3108
    %3110 = vmatmul.bf16.gmra.mxu0 %v2607
    %v3111 = vpop.f32.mrf.mxu0
    %v3112 = vadd.f32 %v2943, %v3111
    %v3113 = vpop.f32.mrf.mxu0
    %v3114 = vadd.f32 %v2945, %v3113
    %3115 = vmatmul.bf16.gmra.mxu0 %v2611
    %v3116 = vpop.f32.mrf.mxu0
    %v3117 = vadd.f32 %v2948, %v3116
    %v3118 = vpop.f32.mrf.mxu0
    %v3119 = vadd.f32 %v2950, %v3118
    %3120 = vmatmul.bf16.gmra.mxu0 %v2615
    %v3121 = vpop.f32.mrf.mxu0
    %v3122 = vadd.f32 %v2953, %v3121
    %v3123 = vpop.f32.mrf.mxu0
    %v3124 = vadd.f32 %v2955, %v3123
    %3125 = vmatmul.bf16.gmra.mxu0 %v2619
    %v3126 = vpop.f32.mrf.mxu0
    %v3127 = vadd.f32 %v2958, %v3126
    %v3128 = vpop.f32.mrf.mxu0
    %v3129 = vadd.f32 %v2960, %v3128
    %3130 = vmatmul.bf16.gmra.mxu0 %v2623
    %v3131 = vpop.f32.mrf.mxu0
    %v3132 = vadd.f32 %v2963, %v3131
    %v3133 = vpop.f32.mrf.mxu0
    %v3134 = vadd.f32 %v2965, %v3133
    %3135 = vmatmul.bf16.gmra.mxu0 %v2627
    %v3136 = vpop.f32.mrf.mxu0
    %v3137 = vadd.f32 %v2968, %v3136
    %v3138 = vpop.f32.mrf.mxu0
    %v3139 = vadd.f32 %v2970, %v3138
    %3140 = vmatmul.bf16.gmra.mxu0 %v2631
    %v3141 = vpop.f32.mrf.mxu0
    %v3142 = vadd.f32 %v2973, %v3141
    %v3143 = vpop.f32.mrf.mxu0
    %v3144 = vadd.f32 %v2975, %v3143
    %3145 = vmatmul.bf16.gmra.mxu0 %v2635
    %v3146 = vpop.f32.mrf.mxu0
    %v3147 = vadd.f32 %v2978, %v3146
    %v3148 = vpop.f32.mrf.mxu0
    %v3149 = vadd.f32 %v2980, %v3148
    %3150 = vmatmul.bf16.gmra.mxu0 %v2639
    %v3151 = vpop.f32.mrf.mxu0
    %v3152 = vadd.f32 %v2983, %v3151
    %v3153 = vpop.f32.mrf.mxu0
    %v3154 = vadd.f32 %v2985, %v3153
    %3155 = vmatmul.bf16.gmra.mxu0 %v2643
    %v3156 = vpop.f32.mrf.mxu0
    %v3157 = vadd.f32 %v2988, %v3156
    %v3158 = vpop.f32.mrf.mxu0
    %v3159 = vadd.f32 %v2990, %v3158
    %3160 = vmatmul.bf16.gmra.mxu0 %v2647
    %v3161 = vpop.f32.mrf.mxu0
    %v3162 = vadd.f32 %v2993, %v3161
    %v3163 = vpop.f32.mrf.mxu0
    %v3164 = vadd.f32 %v2995, %v3163
    %3165 = vmatmul.bf16.gmra.mxu0 %v2651
    %v3166 = vpop.f32.mrf.mxu0
    %v3167 = vadd.f32 %v2998, %v3166
    %v3168 = vpop.f32.mrf.mxu0
    %v3169 = vadd.f32 %v3000, %v3168
    %3170 = vmatmul.bf16.gmra.mxu0 %v2655
    %v3171 = vpop.f32.mrf.mxu0
    %v3172 = vadd.f32 %v3003, %v3171
    %v3173 = vpop.f32.mrf.mxu0
    %v3174 = vadd.f32 %v3005, %v3173
    %3175 = vmatmul.bf16.gmra.mxu0 %v2659
    %v3176 = vpop.f32.mrf.mxu0
    %v3177 = vadd.f32 %v3008, %v3176
    %v3178 = vpop.f32.mrf.mxu0
    %v3179 = vadd.f32 %v3010, %v3178
    %3180 = vmatmul.bf16.gmra.mxu0 %v2663
    %v3181 = vpop.f32.mrf.mxu0
    %v3182 = vadd.f32 %v3013, %v3181
    %v3183 = vpop.f32.mrf.mxu0
    %v3184 = vadd.f32 %v3015, %v3183
    %3185 = vmatmul.bf16.gmra.mxu0 %v2667
    %v3186 = vpop.f32.mrf.mxu0
    %v3187 = vadd.f32 %v3018, %v3186
    %v3188 = vpop.f32.mrf.mxu0
    %v3189 = vadd.f32 %v3020, %v3188
    %3190 = vmatmul.bf16.gmra.mxu0 %v2671
    %v3191 = vpop.f32.mrf.mxu0
    %v3192 = vadd.f32 %v3023, %v3191
    %v3193 = vpop.f32.mrf.mxu0
    %v3194 = vadd.f32 %v3025, %v3193
    %3195 = vmatmul.bf16.gmra.mxu0 %v2675
    %v3196 = vpop.f32.mrf.mxu0
    %v3197 = vadd.f32 %v3028, %v3196
    %v3198 = vpop.f32.mrf.mxu0
    %v3199 = vadd.f32 %v3030, %v3198
    %3200 = vmatmul.bf16.gmra.mxu0 %v2679
    %v3201 = vpop.f32.mrf.mxu0
    %v3202 = vadd.f32 %v3033, %v3201
    %v3203 = vpop.f32.mrf.mxu0
    %v3204 = vadd.f32 %v3035, %v3203
    %3205 = vmatmul.bf16.gmra.mxu0 %v2683
    %v3206 = vpop.f32.mrf.mxu0
    %v3207 = vadd.f32 %v3038, %v3206
    %v3208 = vpop.f32.mrf.mxu0
    %v3209 = vadd.f32 %v3040, %v3208
    %3210 = vmatmul.bf16.gmra.mxu0 %v2687
    %v3211 = vpop.f32.mrf.mxu0
    %v3212 = vadd.f32 %v3043, %v3211
    %v3213 = vpop.f32.mrf.mxu0
    %v3214 = vadd.f32 %v3045, %v3213
    %3215 = vmatmul.bf16.gmra.mxu0 %v2691
    %v3216 = vpop.f32.mrf.mxu0
    %v3217 = vadd.f32 %v3048, %v3216
    %v3218 = vpop.f32.mrf.mxu0
    %v3219 = vadd.f32 %v3050, %v3218
    %3220 = vmatmul.bf16.gmra.mxu0 %v2695
    %v3221 = vpop.f32.mrf.mxu0
    %v3222 = vadd.f32 %v3053, %v3221
    %v3223 = vpop.f32.mrf.mxu0
    %v3224 = vadd.f32 %v3055, %v3223
    %3225 = vmatmul.bf16.gmra.mxu0 %v2699
    %v3226 = vpop.f32.mrf.mxu0
    %v3227 = vadd.f32 %v3058, %v3226
    %v3228 = vpop.f32.mrf.mxu0
    %v3229 = vadd.f32 %v3060, %v3228
    %3230 = vmatmul.bf16.gmra.mxu0 %v2703
    %v3231 = vpop.f32.mrf.mxu0
    %v3232 = vadd.f32 %v3063, %v3231
    %v3233 = vpop.f32.mrf.mxu0
    %v3234 = vadd.f32 %v3065, %v3233
    %3235 = vmatmul.bf16.gmra.mxu0 %v2707
    %v3236 = vpop.f32.mrf.mxu0
    %v3237 = vadd.f32 %v3068, %v3236
    %v3238 = vpop.f32.mrf.mxu0
    %v3239 = vadd.f32 %v3070, %v3238
    %3240 = vdwg.mxu0
    %3241 = vmatpush.bf16.msra.mxu0 %v2196
    %3242 = vmatpush.bf16.msra.mxu0 %v2195
    %3243 = vmatpush.bf16.msra.mxu0 %v2194
    %3244 = vmatpush.bf16.msra.mxu0 %v2193
    %3245 = vmatpush.bf16.msra.mxu0 %v2192
    %3246 = vmatpush.bf16.msra.mxu0 %v2191
    %3247 = vmatpush.bf16.msra.mxu0 %v2190
    %3248 = vmatpush.bf16.msra.mxu0 %v2189
    %3249 = vmatmul.bf16.gmra.mxu0 %v2584
    %v3250 = vpop.f32.mrf.mxu0
    %v3251 = vadd.f32 %v3082, %v3250
    %v3252 = vpop.f32.mrf.mxu0
    %v3253 = vadd.f32 %v3084, %v3252
    %3254 = vmatmul.bf16.gmra.mxu0 %v2588
    %v3255 = vpop.f32.mrf.mxu0
    %v3256 = vadd.f32 %v3087, %v3255
    %v3257 = vpop.f32.mrf.mxu0
    %v3258 = vadd.f32 %v3089, %v3257
    %3259 = vmatmul.bf16.gmra.mxu0 %v2592
    %v3260 = vpop.f32.mrf.mxu0
    %v3261 = vadd.f32 %v3092, %v3260
    %v3262 = vpop.f32.mrf.mxu0
    %v3263 = vadd.f32 %v3094, %v3262
    %3264 = vmatmul.bf16.gmra.mxu0 %v2596
    %v3265 = vpop.f32.mrf.mxu0
    %v3266 = vadd.f32 %v3097, %v3265
    %v3267 = vpop.f32.mrf.mxu0
    %v3268 = vadd.f32 %v3099, %v3267
    %3269 = vmatmul.bf16.gmra.mxu0 %v2600
    %v3270 = vpop.f32.mrf.mxu0
    %v3271 = vadd.f32 %v3102, %v3270
    %v3272 = vpop.f32.mrf.mxu0
    %v3273 = vadd.f32 %v3104, %v3272
    %3274 = vmatmul.bf16.gmra.mxu0 %v2604
    %v3275 = vpop.f32.mrf.mxu0
    %v3276 = vadd.f32 %v3107, %v3275
    %v3277 = vpop.f32.mrf.mxu0
    %v3278 = vadd.f32 %v3109, %v3277
    %3279 = vmatmul.bf16.gmra.mxu0 %v2608
    %v3280 = vpop.f32.mrf.mxu0
    %v3281 = vadd.f32 %v3112, %v3280
    %v3282 = vpop.f32.mrf.mxu0
    %v3283 = vadd.f32 %v3114, %v3282
    %3284 = vmatmul.bf16.gmra.mxu0 %v2612
    %v3285 = vpop.f32.mrf.mxu0
    %v3286 = vadd.f32 %v3117, %v3285
    %v3287 = vpop.f32.mrf.mxu0
    %v3288 = vadd.f32 %v3119, %v3287
    %3289 = vmatmul.bf16.gmra.mxu0 %v2616
    %v3290 = vpop.f32.mrf.mxu0
    %v3291 = vadd.f32 %v3122, %v3290
    %v3292 = vpop.f32.mrf.mxu0
    %v3293 = vadd.f32 %v3124, %v3292
    %3294 = vmatmul.bf16.gmra.mxu0 %v2620
    %v3295 = vpop.f32.mrf.mxu0
    %v3296 = vadd.f32 %v3127, %v3295
    %v3297 = vpop.f32.mrf.mxu0
    %v3298 = vadd.f32 %v3129, %v3297
    %3299 = vmatmul.bf16.gmra.mxu0 %v2624
    %v3300 = vpop.f32.mrf.mxu0
    %v3301 = vadd.f32 %v3132, %v3300
    %v3302 = vpop.f32.mrf.mxu0
    %v3303 = vadd.f32 %v3134, %v3302
    %3304 = vmatmul.bf16.gmra.mxu0 %v2628
    %v3305 = vpop.f32.mrf.mxu0
    %v3306 = vadd.f32 %v3137, %v3305
    %v3307 = vpop.f32.mrf.mxu0
    %v3308 = vadd.f32 %v3139, %v3307
    %3309 = vmatmul.bf16.gmra.mxu0 %v2632
    %v3310 = vpop.f32.mrf.mxu0
    %v3311 = vadd.f32 %v3142, %v3310
    %v3312 = vpop.f32.mrf.mxu0
    %v3313 = vadd.f32 %v3144, %v3312
    %3314 = vmatmul.bf16.gmra.mxu0 %v2636
    %v3315 = vpop.f32.mrf.mxu0
    %v3316 = vadd.f32 %v3147, %v3315
    %v3317 = vpop.f32.mrf.mxu0
    %v3318 = vadd.f32 %v3149, %v3317
    %3319 = vmatmul.bf16.gmra.mxu0 %v2640
    %v3320 = vpop.f32.mrf.mxu0
    %v3321 = vadd.f32 %v3152, %v3320
    %v3322 = vpop.f32.mrf.mxu0
    %v3323 = vadd.f32 %v3154, %v3322
    %3324 = vmatmul.bf16.gmra.mxu0 %v2644
    %v3325 = vpop.f32.mrf.mxu0
    %v3326 = vadd.f32 %v3157, %v3325
    %v3327 = vpop.f32.mrf.mxu0
    %v3328 = vadd.f32 %v3159, %v3327
    %3329 = vmatmul.bf16.gmra.mxu0 %v2648
    %v3330 = vpop.f32.mrf.mxu0
    %v3331 = vadd.f32 %v3162, %v3330
    %v3332 = vpop.f32.mrf.mxu0
    %v3333 = vadd.f32 %v3164, %v3332
    %3334 = vmatmul.bf16.gmra.mxu0 %v2652
    %v3335 = vpop.f32.mrf.mxu0
    %v3336 = vadd.f32 %v3167, %v3335
    %v3337 = vpop.f32.mrf.mxu0
    %v3338 = vadd.f32 %v3169, %v3337
    %3339 = vmatmul.bf16.gmra.mxu0 %v2656
    %v3340 = vpop.f32.mrf.mxu0
    %v3341 = vadd.f32 %v3172, %v3340
    %v3342 = vpop.f32.mrf.mxu0
    %v3343 = vadd.f32 %v3174, %v3342
    %3344 = vmatmul.bf16.gmra.mxu0 %v2660
    %v3345 = vpop.f32.mrf.mxu0
    %v3346 = vadd.f32 %v3177, %v3345
    %v3347 = vpop.f32.mrf.mxu0
    %v3348 = vadd.f32 %v3179, %v3347
    %3349 = vmatmul.bf16.gmra.mxu0 %v2664
    %v3350 = vpop.f32.mrf.mxu0
    %v3351 = vadd.f32 %v3182, %v3350
    %v3352 = vpop.f32.mrf.mxu0
    %v3353 = vadd.f32 %v3184, %v3352
    %3354 = vmatmul.bf16.gmra.mxu0 %v2668
    %v3355 = vpop.f32.mrf.mxu0
    %v3356 = vadd.f32 %v3187, %v3355
    %v3357 = vpop.f32.mrf.mxu0
    %v3358 = vadd.f32 %v3189, %v3357
    %3359 = vmatmul.bf16.gmra.mxu0 %v2672
    %v3360 = vpop.f32.mrf.mxu0
    %v3361 = vadd.f32 %v3192, %v3360
    %v3362 = vpop.f32.mrf.mxu0
    %v3363 = vadd.f32 %v3194, %v3362
    %3364 = vmatmul.bf16.gmra.mxu0 %v2676
    %v3365 = vpop.f32.mrf.mxu0
    %v3366 = vadd.f32 %v3197, %v3365
    %v3367 = vpop.f32.mrf.mxu0
    %v3368 = vadd.f32 %v3199, %v3367
    %3369 = vmatmul.bf16.gmra.mxu0 %v2680
    %v3370 = vpop.f32.mrf.mxu0
    %v3371 = vadd.f32 %v3202, %v3370
    %v3372 = vpop.f32.mrf.mxu0
    %v3373 = vadd.f32 %v3204, %v3372
    %3374 = vmatmul.bf16.gmra.mxu0 %v2684
    %v3375 = vpop.f32.mrf.mxu0
    %v3376 = vadd.f32 %v3207, %v3375
    %v3377 = vpop.f32.mrf.mxu0
    %v3378 = vadd.f32 %v3209, %v3377
    %3379 = vmatmul.bf16.gmra.mxu0 %v2688
    %v3380 = vpop.f32.mrf.mxu0
    %v3381 = vadd.f32 %v3212, %v3380
    %v3382 = vpop.f32.mrf.mxu0
    %v3383 = vadd.f32 %v3214, %v3382
    %3384 = vmatmul.bf16.gmra.mxu0 %v2692
    %v3385 = vpop.f32.mrf.mxu0
    %v3386 = vadd.f32 %v3217, %v3385
    %v3387 = vpop.f32.mrf.mxu0
    %v3388 = vadd.f32 %v3219, %v3387
    %3389 = vmatmul.bf16.gmra.mxu0 %v2696
    %v3390 = vpop.f32.mrf.mxu0
    %v3391 = vadd.f32 %v3222, %v3390
    %v3392 = vpop.f32.mrf.mxu0
    %v3393 = vadd.f32 %v3224, %v3392
    %3394 = vmatmul.bf16.gmra.mxu0 %v2700
    %v3395 = vpop.f32.mrf.mxu0
    %v3396 = vadd.f32 %v3227, %v3395
    %v3397 = vpop.f32.mrf.mxu0
    %v3398 = vadd.f32 %v3229, %v3397
    %3399 = vmatmul.bf16.gmra.mxu0 %v2704
    %v3400 = vpop.f32.mrf.mxu0
    %v3401 = vadd.f32 %v3232, %v3400
    %v3402 = vpop.f32.mrf.mxu0
    %v3403 = vadd.f32 %v3234, %v3402
    %3404 = vmatmul.bf16.gmra.mxu0 %v2708
    %v3405 = vpop.f32.mrf.mxu0
    %v3406 = vadd.f32 %v3237, %v3405
    %v3407 = vpop.f32.mrf.mxu0
    %v3408 = vadd.f32 %v3239, %v3407
    %3409 = vdwg.mxu0
    %3410 = vmatpush.bf16.msra.mxu0 0
    %3411 = vmatpush.bf16.msra.mxu0 0
    %3412 = vmatpush.bf16.msra.mxu0 0
    %3413 = vmatpush.bf16.msra.mxu0 0
    %3414 = vmatpush.bf16.msra.mxu0 0
    %3415 = vmatpush.bf16.msra.mxu0 0
    %3416 = vmatpush.bf16.msra.mxu0 0
    %3417 = vmatpush.bf16.msra.mxu0 %v2197
    %3418 = vmatmul.bf16.gmra.mxu0 %v2808
    %v3419 = vpop.f32.mrf.mxu0
    %v3420 = vadd.f32 %v3251, %v3419
    %v3421 = vpop.f32.mrf.mxu0
    %v3422 = vadd.f32 %v3253, %v3421
    %3423 = vmatmul.bf16.gmra.mxu0 %v2811
    %v3424 = vpop.f32.mrf.mxu0
    %v3425 = vadd.f32 %v3256, %v3424
    %v3426 = vpop.f32.mrf.mxu0
    %v3427 = vadd.f32 %v3258, %v3426
    %3428 = vmatmul.bf16.gmra.mxu0 %v2814
    %v3429 = vpop.f32.mrf.mxu0
    %v3430 = vadd.f32 %v3261, %v3429
    %v3431 = vpop.f32.mrf.mxu0
    %v3432 = vadd.f32 %v3263, %v3431
    %3433 = vmatmul.bf16.gmra.mxu0 %v2817
    %v3434 = vpop.f32.mrf.mxu0
    %v3435 = vadd.f32 %v3266, %v3434
    %v3436 = vpop.f32.mrf.mxu0
    %v3437 = vadd.f32 %v3268, %v3436
    %3438 = vmatmul.bf16.gmra.mxu0 %v2820
    %v3439 = vpop.f32.mrf.mxu0
    %v3440 = vadd.f32 %v3271, %v3439
    %v3441 = vpop.f32.mrf.mxu0
    %v3442 = vadd.f32 %v3273, %v3441
    %3443 = vmatmul.bf16.gmra.mxu0 %v2823
    %v3444 = vpop.f32.mrf.mxu0
    %v3445 = vadd.f32 %v3276, %v3444
    %v3446 = vpop.f32.mrf.mxu0
    %v3447 = vadd.f32 %v3278, %v3446
    %3448 = vmatmul.bf16.gmra.mxu0 %v2826
    %v3449 = vpop.f32.mrf.mxu0
    %v3450 = vadd.f32 %v3281, %v3449
    %v3451 = vpop.f32.mrf.mxu0
    %v3452 = vadd.f32 %v3283, %v3451
    %3453 = vmatmul.bf16.gmra.mxu0 %v2829
    %v3454 = vpop.f32.mrf.mxu0
    %v3455 = vadd.f32 %v3286, %v3454
    %v3456 = vpop.f32.mrf.mxu0
    %v3457 = vadd.f32 %v3288, %v3456
    %3458 = vmatmul.bf16.gmra.mxu0 %v2832
    %v3459 = vpop.f32.mrf.mxu0
    %v3460 = vadd.f32 %v3291, %v3459
    %v3461 = vpop.f32.mrf.mxu0
    %v3462 = vadd.f32 %v3293, %v3461
    %3463 = vmatmul.bf16.gmra.mxu0 %v2835
    %v3464 = vpop.f32.mrf.mxu0
    %v3465 = vadd.f32 %v3296, %v3464
    %v3466 = vpop.f32.mrf.mxu0
    %v3467 = vadd.f32 %v3298, %v3466
    %3468 = vmatmul.bf16.gmra.mxu0 %v2838
    %v3469 = vpop.f32.mrf.mxu0
    %v3470 = vadd.f32 %v3301, %v3469
    %v3471 = vpop.f32.mrf.mxu0
    %v3472 = vadd.f32 %v3303, %v3471
    %3473 = vmatmul.bf16.gmra.mxu0 %v2841
    %v3474 = vpop.f32.mrf.mxu0
    %v3475 = vadd.f32 %v3306, %v3474
    %v3476 = vpop.f32.mrf.mxu0
    %v3477 = vadd.f32 %v3308, %v3476
    %3478 = vmatmul.bf16.gmra.mxu0 %v2844
    %v3479 = vpop.f32.mrf.mxu0
    %v3480 = vadd.f32 %v3311, %v3479
    %v3481 = vpop.f32.mrf.mxu0
    %v3482 = vadd.f32 %v3313, %v3481
    %3483 = vmatmul.bf16.gmra.mxu0 %v2847
    %v3484 = vpop.f32.mrf.mxu0
    %v3485 = vadd.f32 %v3316, %v3484
    %v3486 = vpop.f32.mrf.mxu0
    %v3487 = vadd.f32 %v3318, %v3486
    %3488 = vmatmul.bf16.gmra.mxu0 %v2850
    %v3489 = vpop.f32.mrf.mxu0
    %v3490 = vadd.f32 %v3321, %v3489
    %v3491 = vpop.f32.mrf.mxu0
    %v3492 = vadd.f32 %v3323, %v3491
    %3493 = vmatmul.bf16.gmra.mxu0 %v2853
    %v3494 = vpop.f32.mrf.mxu0
    %v3495 = vadd.f32 %v3326, %v3494
    %v3496 = vpop.f32.mrf.mxu0
    %v3497 = vadd.f32 %v3328, %v3496
    %3498 = vmatmul.bf16.gmra.mxu0 %v2856
    %v3499 = vpop.f32.mrf.mxu0
    %v3500 = vadd.f32 %v3331, %v3499
    %v3501 = vpop.f32.mrf.mxu0
    %v3502 = vadd.f32 %v3333, %v3501
    %3503 = vmatmul.bf16.gmra.mxu0 %v2859
    %v3504 = vpop.f32.mrf.mxu0
    %v3505 = vadd.f32 %v3336, %v3504
    %v3506 = vpop.f32.mrf.mxu0
    %v3507 = vadd.f32 %v3338, %v3506
    %3508 = vmatmul.bf16.gmra.mxu0 %v2862
    %v3509 = vpop.f32.mrf.mxu0
    %v3510 = vadd.f32 %v3341, %v3509
    %v3511 = vpop.f32.mrf.mxu0
    %v3512 = vadd.f32 %v3343, %v3511
    %3513 = vmatmul.bf16.gmra.mxu0 %v2865
    %v3514 = vpop.f32.mrf.mxu0
    %v3515 = vadd.f32 %v3346, %v3514
    %v3516 = vpop.f32.mrf.mxu0
    %v3517 = vadd.f32 %v3348, %v3516
    %3518 = vmatmul.bf16.gmra.mxu0 %v2868
    %v3519 = vpop.f32.mrf.mxu0
    %v3520 = vadd.f32 %v3351, %v3519
    %v3521 = vpop.f32.mrf.mxu0
    %v3522 = vadd.f32 %v3353, %v3521
    %3523 = vmatmul.bf16.gmra.mxu0 %v2871
    %v3524 = vpop.f32.mrf.mxu0
    %v3525 = vadd.f32 %v3356, %v3524
    %v3526 = vpop.f32.mrf.mxu0
    %v3527 = vadd.f32 %v3358, %v3526
    %3528 = vmatmul.bf16.gmra.mxu0 %v2874
    %v3529 = vpop.f32.mrf.mxu0
    %v3530 = vadd.f32 %v3361, %v3529
    %v3531 = vpop.f32.mrf.mxu0
    %v3532 = vadd.f32 %v3363, %v3531
    %3533 = vmatmul.bf16.gmra.mxu0 %v2877
    %v3534 = vpop.f32.mrf.mxu0
    %v3535 = vadd.f32 %v3366, %v3534
    %v3536 = vpop.f32.mrf.mxu0
    %v3537 = vadd.f32 %v3368, %v3536
    %3538 = vmatmul.bf16.gmra.mxu0 %v2880
    %v3539 = vpop.f32.mrf.mxu0
    %v3540 = vadd.f32 %v3371, %v3539
    %v3541 = vpop.f32.mrf.mxu0
    %v3542 = vadd.f32 %v3373, %v3541
    %3543 = vmatmul.bf16.gmra.mxu0 %v2883
    %v3544 = vpop.f32.mrf.mxu0
    %v3545 = vadd.f32 %v3376, %v3544
    %v3546 = vpop.f32.mrf.mxu0
    %v3547 = vadd.f32 %v3378, %v3546
    %3548 = vmatmul.bf16.gmra.mxu0 %v2886
    %v3549 = vpop.f32.mrf.mxu0
    %v3550 = vadd.f32 %v3381, %v3549
    %v3551 = vpop.f32.mrf.mxu0
    %v3552 = vadd.f32 %v3383, %v3551
    %3553 = vmatmul.bf16.gmra.mxu0 %v2889
    %v3554 = vpop.f32.mrf.mxu0
    %v3555 = vadd.f32 %v3386, %v3554
    %v3556 = vpop.f32.mrf.mxu0
    %v3557 = vadd.f32 %v3388, %v3556
    %3558 = vmatmul.bf16.gmra.mxu0 %v2892
    %v3559 = vpop.f32.mrf.mxu0
    %v3560 = vadd.f32 %v3391, %v3559
    %v3561 = vpop.f32.mrf.mxu0
    %v3562 = vadd.f32 %v3393, %v3561
    %3563 = vmatmul.bf16.gmra.mxu0 %v2895
    %v3564 = vpop.f32.mrf.mxu0
    %v3565 = vadd.f32 %v3396, %v3564
    %v3566 = vpop.f32.mrf.mxu0
    %v3567 = vadd.f32 %v3398, %v3566
    %3568 = vmatmul.bf16.gmra.mxu0 %v2898
    %v3569 = vpop.f32.mrf.mxu0
    %v3570 = vadd.f32 %v3401, %v3569
    %v3571 = vpop.f32.mrf.mxu0
    %v3572 = vadd.f32 %v3403, %v3571
    %3573 = vmatmul.bf16.gmra.mxu0 %v2901
    %v3574 = vpop.f32.mrf.mxu0
    %v3575 = vadd.f32 %v3406, %v3574
    %v3576 = vpop.f32.mrf.mxu0
    %v3577 = vadd.f32 %v3408, %v3576
    %3578 = vdwg.mxu0
    %v3579 = vmax.f32 %v3420, %v3460
    %v3580 = vmax.f32 %v3422, %v3462
    %v3581 = vmax.f32 %v3425, %v3465
    %v3582 = vmax.f32 %v3427, %v3467
    %v3583 = vmax.f32 %v3430, %v3470
    %v3584 = vmax.f32 %v3432, %v3472
    %v3585 = vmax.f32 %v3435, %v3475
    %v3586 = vmax.f32 %v3437, %v3477
    %v3587 = vmax.f32 %v3440, %v3480
    %v3588 = vmax.f32 %v3442, %v3482
    %v3589 = vmax.f32 %v3445, %v3485
    %v3590 = vmax.f32 %v3447, %v3487
    %v3591 = vmax.f32 %v3450, %v3490
    %v3592 = vmax.f32 %v3452, %v3492
    %v3593 = vmax.f32 %v3455, %v3495
    %v3594 = vmax.f32 %v3457, %v3497
    %v3595 = vmax.f32 %v3500, %v3540
    %v3596 = vmax.f32 %v3502, %v3542
    %v3597 = vmax.f32 %v3505, %v3545
    %v3598 = vmax.f32 %v3507, %v3547
    %v3599 = vmax.f32 %v3510, %v3550
    %v3600 = vmax.f32 %v3512, %v3552
    %v3601 = vmax.f32 %v3515, %v3555
    %v3602 = vmax.f32 %v3517, %v3557
    %v3603 = vmax.f32 %v3520, %v3560
    %v3604 = vmax.f32 %v3522, %v3562
    %v3605 = vmax.f32 %v3525, %v3565
    %v3606 = vmax.f32 %v3527, %v3567
    %v3607 = vmax.f32 %v3530, %v3570
    %v3608 = vmax.f32 %v3532, %v3572
    %v3609 = vmax.f32 %v3535, %v3575
    %v3610 = vmax.f32 %v3537, %v3577
    %v3611 = vmax.f32 %v3579, %v3595
    %v3612 = vmax.f32 %v3580, %v3596
    %v3613 = vmax.f32 %v3581, %v3597
    %v3614 = vmax.f32 %v3582, %v3598
    %v3615 = vmax.f32 %v3583, %v3599
    %v3616 = vmax.f32 %v3584, %v3600
    %v3617 = vmax.f32 %v3585, %v3601
    %v3618 = vmax.f32 %v3586, %v3602
    %v3619 = vmax.f32 %v3587, %v3603
    %v3620 = vmax.f32 %v3588, %v3604
    %v3621 = vmax.f32 %v3589, %v3605
    %v3622 = vmax.f32 %v3590, %v3606
    %v3623 = vmax.f32 %v3591, %v3607
    %v3624 = vmax.f32 %v3592, %v3608
    %v3625 = vmax.f32 %v3593, %v3609
    %v3626 = vmax.f32 %v3594, %v3610
    %v3627 = vld [vmem:[%s5] sm:$0xff]
    %v3628 = vld [vmem:[%s5 + $0x8] sm:$0xff]
    %v3629 = vld [vmem:[%s5 + $0x10] sm:$0xff]
    %v3630 = vld [vmem:[%s5 + $0x18] sm:$0xff]
    %v3631 = vld [vmem:[%s5 + $0x20] sm:$0xff]
    %v3632 = vld [vmem:[%s5 + $0x28] sm:$0xff]
    %v3633 = vld [vmem:[%s5 + $0x30] sm:$0xff]
    %v3634 = vld [vmem:[%s5 + $0x38] sm:$0xff]
    %v3635 = vld [vmem:[%s5 + $0x40] sm:$0xff]
    %v3636 = vld [vmem:[%s5 + $0x48] sm:$0xff]
    %v3637 = vld [vmem:[%s5 + $0x50] sm:$0xff]
    %v3638 = vld [vmem:[%s5 + $0x58] sm:$0xff]
    %v3639 = vld [vmem:[%s5 + $0x60] sm:$0xff]
    %v3640 = vld [vmem:[%s5 + $0x68] sm:$0xff]
    %v3641 = vld [vmem:[%s5 + $0x70] sm:$0xff]
    %v3642 = vld [vmem:[%s5 + $0x78] sm:$0xff]
    %3644 = vset.pattern.permute.xlu0 0
    %3645 = vperm.xlu0 %3644, %v3627
    %v3646 = vpop.permute.xlu0 %3645
    %3649 = vset.pattern.permute.xlu0 0
    %3650 = vperm.xlu0 %3649, %v3628
    %v3651 = vpop.permute.xlu0 %3650
    %3654 = vset.pattern.permute.xlu0 0
    %3655 = vperm.xlu0 %3654, %v3629
    %v3656 = vpop.permute.xlu0 %3655
    %3659 = vset.pattern.permute.xlu0 0
    %3660 = vperm.xlu0 %3659, %v3630
    %v3661 = vpop.permute.xlu0 %3660
    %3664 = vset.pattern.permute.xlu0 0
    %3665 = vperm.xlu0 %3664, %v3631
    %v3666 = vpop.permute.xlu0 %3665
    %3669 = vset.pattern.permute.xlu0 0
    %3670 = vperm.xlu0 %3669, %v3632
    %v3671 = vpop.permute.xlu0 %3670
    %3674 = vset.pattern.permute.xlu0 0
    %3675 = vperm.xlu0 %3674, %v3633
    %v3676 = vpop.permute.xlu0 %3675
    %3679 = vset.pattern.permute.xlu0 0
    %3680 = vperm.xlu0 %3679, %v3634
    %v3681 = vpop.permute.xlu0 %3680
    %3684 = vset.pattern.permute.xlu0 0
    %3685 = vperm.xlu0 %3684, %v3635
    %v3686 = vpop.permute.xlu0 %3685
    %3689 = vset.pattern.permute.xlu0 0
    %3690 = vperm.xlu0 %3689, %v3636
    %v3691 = vpop.permute.xlu0 %3690
    %3694 = vset.pattern.permute.xlu0 0
    %3695 = vperm.xlu0 %3694, %v3637
    %v3696 = vpop.permute.xlu0 %3695
    %3699 = vset.pattern.permute.xlu0 0
    %3700 = vperm.xlu0 %3699, %v3638
    %v3701 = vpop.permute.xlu0 %3700
    %3704 = vset.pattern.permute.xlu0 0
    %3705 = vperm.xlu0 %3704, %v3639
    %v3706 = vpop.permute.xlu0 %3705
    %3709 = vset.pattern.permute.xlu0 0
    %3710 = vperm.xlu0 %3709, %v3640
    %v3711 = vpop.permute.xlu0 %3710
    %3714 = vset.pattern.permute.xlu0 0
    %3715 = vperm.xlu0 %3714, %v3641
    %v3716 = vpop.permute.xlu0 %3715
    %3719 = vset.pattern.permute.xlu0 0
    %3720 = vperm.xlu0 %3719, %v3642
    %v3721 = vpop.permute.xlu0 %3720
    %v3723 = vadd.f32 %v3611, %v3646
    %v3724 = vadd.f32 %v3612, %v3651
    %v3725 = vadd.f32 %v3613, %v3656
    %v3726 = vadd.f32 %v3614, %v3661
    %v3727 = vadd.f32 %v3615, %v3666
    %v3728 = vadd.f32 %v3616, %v3671
    %v3729 = vadd.f32 %v3617, %v3676
    %v3730 = vadd.f32 %v3618, %v3681
    %v3731 = vadd.f32 %v3619, %v3686
    %v3732 = vadd.f32 %v3620, %v3691
    %v3733 = vadd.f32 %v3621, %v3696
    %v3734 = vadd.f32 %v3622, %v3701
    %v3735 = vadd.f32 %v3623, %v3706
    %v3736 = vadd.f32 %v3624, %v3711
    %v3737 = vadd.f32 %v3625, %v3716
    %v3738 = vadd.f32 %v3626, %v3721
    %v3739 = vmax.f32 %v3723, 0.0
    %v3740 = vmax.f32 %v3724, 0.0
    %v3741 = vmax.f32 %v3725, 0.0
    %v3742 = vmax.f32 %v3726, 0.0
    %v3743 = vmax.f32 %v3727, 0.0
    %v3744 = vmax.f32 %v3728, 0.0
    %v3745 = vmax.f32 %v3729, 0.0
    %v3746 = vmax.f32 %v3730, 0.0
    %v3747 = vmax.f32 %v3731, 0.0
    %v3748 = vmax.f32 %v3732, 0.0
    %v3749 = vmax.f32 %v3733, 0.0
    %v3750 = vmax.f32 %v3734, 0.0
    %v3751 = vmax.f32 %v3735, 0.0
    %v3752 = vmax.f32 %v3736, 0.0
    %v3753 = vmax.f32 %v3737, 0.0
    %v3754 = vmax.f32 %v3738, 0.0
    %v3755 = vld [vmem:[#allocation5] sm:$0xf]
    %v3756 = vld [vmem:[#allocation5 + $0x4] sm:$0xf]
    %v3757 = vld [vmem:[#allocation5 + $0x8] sm:$0xf]
    %v3758 = vld [vmem:[#allocation5 + $0xc] sm:$0xf]
    %v3759 = vld [vmem:[#allocation5 + $0x10] sm:$0xf]
    %v3760 = vld [vmem:[#allocation5 + $0x14] sm:$0xf]
    %v3761 = vld [vmem:[#allocation5 + $0x18] sm:$0xf]
    %v3762 = vld [vmem:[#allocation5 + $0x1c] sm:$0xf]
    %v3763 = vpack.c.bf16 %v3740, %v3739
    %v3764 = vpack.c.bf16 %v3742, %v3741
    %v3765 = vpack.c.bf16 %v3744, %v3743
    %v3766 = vpack.c.bf16 %v3746, %v3745
    %v3767 = vpack.c.bf16 %v3748, %v3747
    %v3768 = vpack.c.bf16 %v3750, %v3749
    %v3769 = vpack.c.bf16 %v3752, %v3751
    %v3770 = vpack.c.bf16 %v3754, %v3753
    %v3771 = vld [vmem:[%s7] sm:$0xff]
    %v3772 = vld [vmem:[%s7 + $0x8] sm:$0xff]
    %v3773 = vld [vmem:[%s7 + $0x10] sm:$0xff]
    %v3774 = vld [vmem:[%s7 + $0x18] sm:$0xff]
    %v3775 = vld [vmem:[%s7 + $0x20] sm:$0xff]
    %v3776 = vld [vmem:[%s7 + $0x28] sm:$0xff]
    %v3777 = vld [vmem:[%s7 + $0x30] sm:$0xff]
    %v3778 = vld [vmem:[%s7 + $0x38] sm:$0xff]
    %v3779 = vld [vmem:[%s1] sm:$0xff]
    %vm3780 = vcmask 64512
    %v3782 = vsel %vm3780, %v3771, 0
    %v3785 = vsel %vm3780, %v3772, 0
    %v3788 = vsel %vm3780, %v3773, 0
    %v3791 = vsel %vm3780, %v3774, 0
    %v3794 = vsel %vm3780, %v3775, 0
    %v3797 = vsel %vm3780, %v3776, 0
    %v3800 = vsel %vm3780, %v3777, 0
    %v3803 = vsel %vm3780, %v3778, 0
    %3805 = vmatpush.msra.mxu0 0.0
    %3806 = vmatpush.msra.mxu0 0.0
    %3807 = vmatpush.msra.mxu0 0.0
    %3808 = vmatpush.msra.mxu0 0.0
    %3809 = vmatpush.msra.mxu0 0.0
    %3810 = vmatpush.msra.mxu0 0.0
    %3811 = vmatpush.msra.mxu0 0.0
    %3812 = vmatpush.msra.mxu0 0.0
    %3813 = vmatpush.msra.mxu0 0.0
    %3814 = vmatpush.msra.mxu0 0.0
    %3815 = vmatpush.msra.mxu0 0.0
    %3816 = vmatpush.msra.mxu0 0.0
    %3817 = vmatpush.msra.mxu0 0.0
    %3818 = vmatpush.msra.mxu0 0.0
    %3819 = vmatpush.msra.mxu0 0.0
    %3820 = vmatpush.msra.mxu0 %v3779
    %3821 = vmatmul.f32.gmra.mxu0 %v3782
    %v3822 = vpop.f32.mrf.mxu0
    %v3823 = vadd.f32 0.0, %v3822
    %3824 = vmatmul.f32.gmra.mxu0 %v3785
    %v3825 = vpop.f32.mrf.mxu0
    %v3826 = vadd.f32 0.0, %v3825
    %3827 = vmatmul.f32.gmra.mxu0 %v3788
    %v3828 = vpop.f32.mrf.mxu0
    %v3829 = vadd.f32 0.0, %v3828
    %3830 = vmatmul.f32.gmra.mxu0 %v3791
    %v3831 = vpop.f32.mrf.mxu0
    %v3832 = vadd.f32 0.0, %v3831
    %3833 = vmatmul.f32.gmra.mxu0 %v3794
    %v3834 = vpop.f32.mrf.mxu0
    %v3835 = vadd.f32 0.0, %v3834
    %3836 = vmatmul.f32.gmra.mxu0 %v3797
    %v3837 = vpop.f32.mrf.mxu0
    %v3838 = vadd.f32 0.0, %v3837
    %3839 = vmatmul.f32.gmra.mxu0 %v3800
    %v3840 = vpop.f32.mrf.mxu0
    %v3841 = vadd.f32 0.0, %v3840
    %3842 = vmatmul.f32.gmra.mxu0 %v3803
    %v3843 = vpop.f32.mrf.mxu0
    %v3844 = vadd.f32 0.0, %v3843
    %3845 = vdwg.mxu0
    %v3854 = vunpack.c.l.b16 %v3755
    %v3855 = vunpack.c.l.b16 %v3756
    %v3856 = vunpack.c.l.b16 %v3757
    %v3857 = vunpack.c.l.b16 %v3758
    %v3858 = vunpack.c.l.b16 %v3759
    %v3859 = vunpack.c.l.b16 %v3760
    %v3860 = vunpack.c.l.b16 %v3761
    %v3861 = vunpack.c.l.b16 %v3762
    %v3862 = vpack.c.b16 %v3855, %v3854
    %v3863 = vpack.c.b16 %v3857, %v3856
    %v3864 = vpack.c.b16 %v3859, %v3858
    %v3865 = vpack.c.b16 %v3861, %v3860
    %3870 = vmatpush.bf16.msra.mxu0 %v3770
    %3871 = vmatpush.bf16.msra.mxu0 %v3769
    %3872 = vmatpush.bf16.msra.mxu0 %v3768
    %3873 = vmatpush.bf16.msra.mxu0 %v3767
    %3874 = vmatpush.bf16.msra.mxu0 %v3766
    %3875 = vmatpush.bf16.msra.mxu0 %v3765
    %3876 = vmatpush.bf16.msra.mxu0 %v3764
    %3877 = vmatpush.bf16.msra.mxu0 %v3763
    %3878 = vmatmul.bf16.gmra.mxu0 %v3862
    %v3879 = vpop.f32.mrf.mxu0
    %v3880 = vadd.f32 %v3823, %v3879
    %v3881 = vpop.f32.mrf.mxu0
    %v3882 = vadd.f32 %v3826, %v3881
    %3883 = vmatmul.bf16.gmra.mxu0 %v3863
    %v3884 = vpop.f32.mrf.mxu0
    %v3885 = vadd.f32 %v3829, %v3884
    %v3886 = vpop.f32.mrf.mxu0
    %v3887 = vadd.f32 %v3832, %v3886
    %3888 = vmatmul.bf16.gmra.mxu0 %v3864
    %v3889 = vpop.f32.mrf.mxu0
    %v3890 = vadd.f32 %v3835, %v3889
    %v3891 = vpop.f32.mrf.mxu0
    %v3892 = vadd.f32 %v3838, %v3891
    %3893 = vmatmul.bf16.gmra.mxu0 %v3865
    %v3894 = vpop.f32.mrf.mxu0
    %v3895 = vadd.f32 %v3841, %v3894
    %v3896 = vpop.f32.mrf.mxu0
    %v3897 = vadd.f32 %v3844, %v3896
    %3898 = vdwg.mxu0
    %v3899 = vld [vmem:[%s8] sm:$0xff]
    %v3900 = vld [vmem:[%s8 + $0x8] sm:$0xff]
    %v3901 = vld [vmem:[%s8 + $0x10] sm:$0xff]
    %v3902 = vld [vmem:[%s8 + $0x18] sm:$0xff]
    %v3903 = vld [vmem:[%s8 + $0x20] sm:$0xff]
    %v3904 = vld [vmem:[%s8 + $0x28] sm:$0xff]
    %v3905 = vld [vmem:[%s8 + $0x30] sm:$0xff]
    %v3906 = vld [vmem:[%s8 + $0x38] sm:$0xff]
    %3908 = vset.pattern.permute.xlu0 0
    %3909 = vperm.xlu0 %3908, %v3899
    %v3910 = vpop.permute.xlu0 %3909
    %3913 = vset.pattern.permute.xlu0 0
    %3914 = vperm.xlu0 %3913, %v3900
    %v3915 = vpop.permute.xlu0 %3914
    %3918 = vset.pattern.permute.xlu0 0
    %3919 = vperm.xlu0 %3918, %v3901
    %v3920 = vpop.permute.xlu0 %3919
    %3923 = vset.pattern.permute.xlu0 0
    %3924 = vperm.xlu0 %3923, %v3902
    %v3925 = vpop.permute.xlu0 %3924
    %3928 = vset.pattern.permute.xlu0 0
    %3929 = vperm.xlu0 %3928, %v3903
    %v3930 = vpop.permute.xlu0 %3929
    %3933 = vset.pattern.permute.xlu0 0
    %3934 = vperm.xlu0 %3933, %v3904
    %v3935 = vpop.permute.xlu0 %3934
    %3938 = vset.pattern.permute.xlu0 0
    %3939 = vperm.xlu0 %3938, %v3905
    %v3940 = vpop.permute.xlu0 %3939
    %3943 = vset.pattern.permute.xlu0 0
    %3944 = vperm.xlu0 %3943, %v3906
    %v3945 = vpop.permute.xlu0 %3944
    %v3947 = vadd.f32 %v3880, %v3910
    %v3948 = vadd.f32 %v3882, %v3915
    %v3949 = vadd.f32 %v3885, %v3920
    %v3950 = vadd.f32 %v3887, %v3925
    %v3951 = vadd.f32 %v3890, %v3930
    %v3952 = vadd.f32 %v3892, %v3935
    %v3953 = vadd.f32 %v3895, %v3940
    %v3954 = vadd.f32 %v3897, %v3945
    %v3955 = vmax.f32 %v3947, 0.0
    %v3956 = vmax.f32 %v3948, 0.0
    %v3957 = vmax.f32 %v3949, 0.0
    %v3958 = vmax.f32 %v3950, 0.0
    %v3959 = vmax.f32 %v3951, 0.0
    %v3960 = vmax.f32 %v3952, 0.0
    %v3961 = vmax.f32 %v3953, 0.0
    %v3962 = vmax.f32 %v3954, 0.0
    %v3963 = vld [vmem:[%s9] sm:$0xff]
    %v3964 = vld [vmem:[%s9 + $0x8] sm:$0xff]
    %v3965 = vld [vmem:[%s9 + $0x10] sm:$0xff]
    %v3966 = vld [vmem:[%s9 + $0x18] sm:$0xff]
    %v3967 = vld [vmem:[%s9 + $0x20] sm:$0xff]
    %v3968 = vld [vmem:[%s9 + $0x28] sm:$0xff]
    %v3969 = vld [vmem:[%s9 + $0x30] sm:$0xff]
    %v3970 = vld [vmem:[%s9 + $0x38] sm:$0xff]
    %3972 = vset.pattern.permute.xlu0 0
    %3973 = vperm.xlu0 %3972, %v3963
    %v3974 = vpop.permute.xlu0 %3973
    %3977 = vset.pattern.permute.xlu0 0
    %3978 = vperm.xlu0 %3977, %v3964
    %v3979 = vpop.permute.xlu0 %3978
    %3982 = vset.pattern.permute.xlu0 0
    %3983 = vperm.xlu0 %3982, %v3965
    %v3984 = vpop.permute.xlu0 %3983
    %3987 = vset.pattern.permute.xlu0 0
    %3988 = vperm.xlu0 %3987, %v3966
    %v3989 = vpop.permute.xlu0 %3988
    %3992 = vset.pattern.permute.xlu0 0
    %3993 = vperm.xlu0 %3992, %v3967
    %v3994 = vpop.permute.xlu0 %3993
    %3997 = vset.pattern.permute.xlu0 0
    %3998 = vperm.xlu0 %3997, %v3968
    %v3999 = vpop.permute.xlu0 %3998
    %4002 = vset.pattern.permute.xlu0 0
    %4003 = vperm.xlu0 %4002, %v3969
    %v4004 = vpop.permute.xlu0 %4003
    %4007 = vset.pattern.permute.xlu0 0
    %4008 = vperm.xlu0 %4007, %v3970
    %v4009 = vpop.permute.xlu0 %4008
    %v4011 = vmul.f32 %v3955, %v3974
    %v4012 = vmul.f32 %v3956, %v3979
    %v4013 = vmul.f32 %v3957, %v3984
    %v4014 = vmul.f32 %v3958, %v3989
    %v4015 = vmul.f32 %v3959, %v3994
    %v4016 = vmul.f32 %v3960, %v3999
    %v4017 = vmul.f32 %v3961, %v4004
    %v4018 = vmul.f32 %v3962, %v4009
    %v4019 = vld [vmem:[%s10] sm:$0xff]
    %v4020 = vld [vmem:[%s10 + $0x8] sm:$0xff]
    %v4021 = vld [vmem:[%s10 + $0x10] sm:$0xff]
    %v4022 = vld [vmem:[%s10 + $0x18] sm:$0xff]
    %v4023 = vld [vmem:[%s10 + $0x20] sm:$0xff]
    %v4024 = vld [vmem:[%s10 + $0x28] sm:$0xff]
    %v4025 = vld [vmem:[%s10 + $0x30] sm:$0xff]
    %v4026 = vld [vmem:[%s10 + $0x38] sm:$0xff]
    %4028 = vset.pattern.permute.xlu0 0
    %4029 = vperm.xlu0 %4028, %v4019
    %v4030 = vpop.permute.xlu0 %4029
    %4033 = vset.pattern.permute.xlu0 0
    %4034 = vperm.xlu0 %4033, %v4020
    %v4035 = vpop.permute.xlu0 %4034
    %4038 = vset.pattern.permute.xlu0 0
    %4039 = vperm.xlu0 %4038, %v4021
    %v4040 = vpop.permute.xlu0 %4039
    %4043 = vset.pattern.permute.xlu0 0
    %4044 = vperm.xlu0 %4043, %v4022
    %v4045 = vpop.permute.xlu0 %4044
    %4048 = vset.pattern.permute.xlu0 0
    %4049 = vperm.xlu0 %4048, %v4023
    %v4050 = vpop.permute.xlu0 %4049
    %4053 = vset.pattern.permute.xlu0 0
    %4054 = vperm.xlu0 %4053, %v4024
    %v4055 = vpop.permute.xlu0 %4054
    %4058 = vset.pattern.permute.xlu0 0
    %4059 = vperm.xlu0 %4058, %v4025
    %v4060 = vpop.permute.xlu0 %4059
    %4063 = vset.pattern.permute.xlu0 0
    %4064 = vperm.xlu0 %4063, %v4026
    %v4065 = vpop.permute.xlu0 %4064
    %v4067 = vadd.f32 %v4011, %v4030
    %v4068 = vadd.f32 %v4012, %v4035
    %v4069 = vadd.f32 %v4013, %v4040
    %v4070 = vadd.f32 %v4014, %v4045
    %v4071 = vadd.f32 %v4015, %v4050
    %v4072 = vadd.f32 %v4016, %v4055
    %v4073 = vadd.f32 %v4017, %v4060
    %v4074 = vadd.f32 %v4018, %v4065
    %v4075 = vld [vmem:[%s11] sm:$0xf]
    %v4076 = vld [vmem:[%s11 + $0x4] sm:$0xf]
    %v4077 = vld [vmem:[%s11 + $0x8] sm:$0xf]
    %v4078 = vld [vmem:[%s11 + $0xc] sm:$0xf]
    %v4079 = vpack.c.bf16 %v4068, %v4067
    %v4080 = vpack.c.bf16 %v4070, %v4069
    %v4081 = vpack.c.bf16 %v4072, %v4071
    %v4082 = vpack.c.bf16 %v4074, %v4073
    %v4083 = vld [vmem:[#allocation7] sm:$0xff]
    %v4084 = vld [vmem:[#allocation7 + $0x8] sm:$0xff]
    %v4085 = vld [vmem:[#allocation7 + $0x10] sm:$0xff]
    %v4086 = vld [vmem:[#allocation7 + $0x18] sm:$0xff]
    %4088 = vset.pattern.permute.xlu0 0
    %4089 = vperm.xlu0 %4088, %v4083
    %v4090 = vpop.permute.xlu0 %4089
    %4093 = vset.pattern.permute.xlu0 0
    %4094 = vperm.xlu0 %4093, %v4084
    %v4095 = vpop.permute.xlu0 %4094
    %4098 = vset.pattern.permute.xlu0 0
    %4099 = vperm.xlu0 %4098, %v4085
    %v4100 = vpop.permute.xlu0 %4099
    %4103 = vset.pattern.permute.xlu0 0
    %4104 = vperm.xlu0 %4103, %v4086
    %v4105 = vpop.permute.xlu0 %4104
    %v4111 = vunpack.c.l.b16 %v4075
    %v4112 = vunpack.c.l.b16 %v4076
    %v4113 = vunpack.c.l.b16 %v4077
    %v4114 = vunpack.c.l.b16 %v4078
    %v4115 = vpack.c.b16 %v4112, %v4111
    %v4116 = vpack.c.b16 %v4114, %v4113
    %vm4117 = vcmask 523264
    %v4119 = vsel %vm4117, %v4115, 0
    %v4122 = vsel %vm4117, %v4116, 0
    %4124 = vmatpush.bf16.msra.mxu0 0
    %4125 = vmatpush.bf16.msra.mxu0 0
    %4126 = vmatpush.bf16.msra.mxu0 0
    %4127 = vmatpush.bf16.msra.mxu0 0
    %4128 = vmatpush.bf16.msra.mxu0 %v4082
    %4129 = vmatpush.bf16.msra.mxu0 %v4081
    %4130 = vmatpush.bf16.msra.mxu0 %v4080
    %4131 = vmatpush.bf16.msra.mxu0 %v4079
    %4132 = vmatmul.bf16.gmra.mxu0 %v4119
    %v4133 = vpop.f32.mrf.mxu0
    %v4134 = vadd.f32 %v4090, %v4133
    %v4135 = vpop.f32.mrf.mxu0
    %v4136 = vadd.f32 %v4095, %v4135
    %4137 = vmatmul.bf16.gmra.mxu0 %v4122
    %v4138 = vpop.f32.mrf.mxu0
    %v4139 = vadd.f32 %v4100, %v4138
    %v4140 = vpop.f32.mrf.mxu0
    %v4141 = vadd.f32 %v4105, %v4140
    %4142 = vdwg.mxu0
    %v4143 = vmax.f32 %v4134, 0.0
    %v4144 = vmax.f32 %v4136, 0.0
    %v4145 = vmax.f32 %v4139, 0.0
    %v4146 = vmax.f32 %v4141, 0.0
    %v4147 = vld [vmem:[%s13] sm:$0xff]
    %v4148 = vld [vmem:[%s13 + $0x8] sm:$0xff]
    %v4149 = vld [vmem:[%s13 + $0x10] sm:$0xff]
    %v4150 = vld [vmem:[%s13 + $0x18] sm:$0xff]
    %4152 = vset.pattern.permute.xlu0 0
    %4153 = vperm.xlu0 %4152, %v4147
    %v4154 = vpop.permute.xlu0 %4153
    %4157 = vset.pattern.permute.xlu0 0
    %4158 = vperm.xlu0 %4157, %v4148
    %v4159 = vpop.permute.xlu0 %4158
    %4162 = vset.pattern.permute.xlu0 0
    %4163 = vperm.xlu0 %4162, %v4149
    %v4164 = vpop.permute.xlu0 %4163
    %4167 = vset.pattern.permute.xlu0 0
    %4168 = vperm.xlu0 %4167, %v4150
    %v4169 = vpop.permute.xlu0 %4168
    %v4171 = vmul.f32 %v4143, %v4154
    %v4172 = vmul.f32 %v4144, %v4159
    %v4173 = vmul.f32 %v4145, %v4164
    %v4174 = vmul.f32 %v4146, %v4169
    %v4175 = vld [vmem:[%s14] sm:$0xff]
    %v4176 = vld [vmem:[%s14 + $0x8] sm:$0xff]
    %v4177 = vld [vmem:[%s14 + $0x10] sm:$0xff]
    %v4178 = vld [vmem:[%s14 + $0x18] sm:$0xff]
    %4180 = vset.pattern.permute.xlu0 0
    %4181 = vperm.xlu0 %4180, %v4175
    %v4182 = vpop.permute.xlu0 %4181
    %4185 = vset.pattern.permute.xlu0 0
    %4186 = vperm.xlu0 %4185, %v4176
    %v4187 = vpop.permute.xlu0 %4186
    %4190 = vset.pattern.permute.xlu0 0
    %4191 = vperm.xlu0 %4190, %v4177
    %v4192 = vpop.permute.xlu0 %4191
    %4195 = vset.pattern.permute.xlu0 0
    %4196 = vperm.xlu0 %4195, %v4178
    %v4197 = vpop.permute.xlu0 %4196
    %v4199 = vadd.f32 %v4171, %v4182
    %v4200 = vadd.f32 %v4172, %v4187
    %v4201 = vadd.f32 %v4173, %v4192
    %v4202 = vadd.f32 %v4174, %v4197
    %v4203 = vld [vmem:[#allocation8] sm:$0xff]
    %v4204 = vld [vmem:[#allocation8 + $0x8] sm:$0xff]
    %v4205 = vld [vmem:[#allocation8 + $0x10] sm:$0xff]
    %v4206 = vld [vmem:[#allocation8 + $0x18] sm:$0xff]
    %4208 = vset.pattern.permute.xlu0 0
    %4209 = vperm.xlu0 %4208, %v4203
    %v4210 = vpop.permute.xlu0 %4209
    %4213 = vset.pattern.permute.xlu0 0
    %4214 = vperm.xlu0 %4213, %v4204
    %v4215 = vpop.permute.xlu0 %4214
    %4218 = vset.pattern.permute.xlu0 0
    %4219 = vperm.xlu0 %4218, %v4205
    %v4220 = vpop.permute.xlu0 %4219
    %4223 = vset.pattern.permute.xlu0 0
    %4224 = vperm.xlu0 %4223, %v4206
    %v4225 = vpop.permute.xlu0 %4224
    %v4227 = vmul.f32 %v4210, %v4199
    %v4228 = vmul.f32 %v4215, %v4200
    %v4229 = vmul.f32 %v4220, %v4201
    %v4230 = vmul.f32 %v4225, %v4202
    %v4231 = vadd.f32 %v4227, %v4228
    %v4232 = vadd.f32 %v4231, %v4229
    %v4233 = vadd.f32 %v4232, %v4230
    %v4234 = vrot.slane %v4233, 4
    %v4235 = vadd.f32 %v4233, %v4234
    %v4236 = vrot.slane %v4235, 2
    %v4237 = vadd.f32 %v4235, %v4236
    %v4238 = vrot.slane %v4237, 1
    %v4239 = vadd.f32 %v4237, %v4238
    %v4240 = vld [vmem:[#allocation2] sm:$0x1]
    %4242 = vset.pattern.permute.xlu0 0
    %4243 = vperm.xlu0 %4242, %v4240
    %v4244 = vpop.permute.xlu0 %4243
    %v4246 = vperm.slane %v4244, 0
    %v4247 = vadd.f32 %v4239, %v4246
    %v4248 = vsub.f32 0.0, %v4247
    %v4249 = vmul.f32 %v4248, 1.442695
    %v4250 = vpow.pop %v4249
    %v4251 = vadd.f32 %v4250, 1.0
    %v4252 = vrcp.pop %v4251
    %v4253 = vmul.f32 %v4251, %v4252
    %v4254 = vsub.f32 1.0, %v4253
    %v4255 = vmul.f32 %v4252, %v4254
    %v4256 = vadd.f32 %v4252, %v4255
    %vm4257 = vweird.f32 %v4251
    %vm4258 = vweird.f32 %v4252
    %vm4259 = vmor %vm4257, %vm4258
    %v4260 = vsel %vm4259, %v4252, %v4256
    %v4261 = vand.u32 2147483647, %v4251
    %vm4262 = vcmp.eq.f32.partialorder %v4261, 8.507059e+37
    %v4263 = vand.u32 %v4251, 2147483648
    %v4264 = vor.u32 1.1754944e-38, %v4263
    %v4265 = vsel %vm4262, %v4264, %v4260
    %v4266 = vmul.f32 1.0, %v4265
    %vm4267 = vcmask 1040384
    %v4268 = vsel %vm4267, %v4247, %v4266
    %4269 = vst [vmem:[%s17] sm:$0x3] %v4268
    // Predicated region
    $region86: #{ratio_10x10_forward.1} parent=1 // pred_check
      _
    $region87: #{ratio_10x10_forward.1} parent=1 // pred_check_branch
      %4271 = sbr.rel (0) target = $region89
    $region88: #{ratio_10x10_forward.1} parent=1 // pred_region
      _
    $region89: #{ratio_10x10_forward.1} parent=1 // pred_fallthru
      _
    // Predicated region
    $region90: #{ratio_10x10_forward.1} parent=1 // pred_check
      _
    $region91: #{ratio_10x10_forward.1} parent=1 // pred_check_branch
      %4273 = sbr.rel (0) target = $region93
    $region92: #{ratio_10x10_forward.1} parent=1 // pred_region
      _
    $region93: #{ratio_10x10_forward.1} parent=1 // pred_fallthru
      _
    %4274 = vsyncpa [#allocation4], 1
    %4275 = vsyncpa [#allocation6], 1
    %4276 = vsyncpa [#allocation9], 1

</llo_original>
